<compile_context>
chip_gen: v7x
topology: tpu7x:2x2x1
jax: 0.10.0
libtpu: 0.0.40
codegen_flags: <defaults>
</compile_context>

<pallas_src>
import functools

import jax
import jax.numpy as jnp
from jax import lax
from jax.experimental import pallas as pl
from jax.experimental.pallas import tpu as pltpu

# ---- small synthetic DINO ViT config (structure of dino.vit_small, shrunk) ----
PATCH = 14                     # h_down_rate / w_down_rate
FIXSIZE = 56                   # analogue of fixsize=490 (divisible by the patch)
EMBED_DIM = 128                # lane-dense stand-in for 384
NUM_HEADS = 2
HEAD_DIM = EMBED_DIM // NUM_HEADS
DEPTH = 3
MLP_HIDDEN = 4 * EMBED_DIM     # 512 (multiple of 128)
LN_EPS = 1e-6
K_RAW = 3 * PATCH * PATCH      # 588 = conv14s14 contracting dim
K_PAD = 640                    # padded to 5*128 so the MXU feed is lane-aligned

IMAGENET_MEAN = jnp.array([0.485, 0.456, 0.406], jnp.float32)
IMAGENET_STD = jnp.array([0.229, 0.224, 0.225], jnp.float32)


# ----------------------------- in-kernel helpers -------------------------------
def _ln_f32(x, g, b):
    """LayerNorm, f32 stats, one pass (E[x], E[x^2]). x: (T, C), g/b: (1, C)."""
    mu = jnp.mean(x, axis=-1, keepdims=True)
    ms = jnp.mean(x * x, axis=-1, keepdims=True)
    var = ms - mu * mu
    return (x - mu) * lax.rsqrt(var + LN_EPS) * g + b


# ----------------------------- fused ViT kernel ---------------------------------
def _dino_fused_kernel(patches_ref, wpe_ref, clspos_ref,
                       ln_ref, wqkv_ref, bqkv_ref, wproj_ref, bproj_ref,
                       wfc1_ref, bfc1_ref, wfc2_ref, bfc2_ref, normgb_ref,
                       out_ref, x_scr,
                       *, num_heads, head_dim, num_tokens, depth):
    """grid=(B, DEPTH). Depth step d applies block d; x stays in VMEM scratch."""
    d = pl.program_id(1)
    dmodel = num_heads * head_dim

    # ---- first depth step: patch-embed matmul + cls token + pos embed ----
    @pl.when(d == 0)
    def _():
        # patches row 0 is all zeros (CLS slot); clspos already contains
        # cls_token + pos[0] in row 0 and pos[1:] + conv bias in rows 1..
        tok = jnp.dot(patches_ref[0].astype(jnp.bfloat16), wpe_ref[...],
                      preferred_element_type=jnp.float32)          # (T, D)
        x_scr[...] = tok + clspos_ref[...]

    x = x_scr[...]                                                  # (T, D) f32
    ln = ln_ref[0]                                                  # (4, D) f32

    # ---- attention branch ----
    h = _ln_f32(x, ln[0:1, :], ln[1:2, :])
    qkv = jnp.dot(h.astype(jnp.bfloat16), wqkv_ref[0],
                  preferred_element_type=jnp.float32) + bqkv_ref[0]  # (T, 3D)
    q = qkv[:, :dmodel]                 # 128-lane-aligned static splits
    k = qkv[:, dmodel:2 * dmodel]
    v = qkv[:, 2 * dmodel:]

    scale = 1.0 / (head_dim ** 0.5)
    head_outs = []
    for hh in range(num_heads):         # static unroll (2 heads); flash/batched at real size
        sl = slice(hh * head_dim, (hh + 1) * head_dim)
        qh = q[:, sl].astype(jnp.bfloat16)
        kh = k[:, sl].astype(jnp.bfloat16)
        vh = v[:, sl].astype(jnp.bfloat16)
        s = lax.dot_general(qh, kh, (((1,), (1,)), ((), ())),
                            preferred_element_type=jnp.float32) * scale
        s = s - jnp.max(s, axis=-1, keepdims=True)
        p = jnp.exp(s)
        p = p * pl.reciprocal(jnp.sum(p, axis=-1, keepdims=True), approx=True)
        head_outs.append(jnp.dot(p.astype(jnp.bfloat16), vh,
                                 preferred_element_type=jnp.float32))  # (T, Dh)
    o_cat = jnp.concatenate(head_outs, axis=-1).astype(jnp.bfloat16)   # (T, D) lane-dense
    attn = jnp.dot(o_cat, wproj_ref[0],
                   preferred_element_type=jnp.float32) + bproj_ref[0]  # single (T,D)@(D,D)
    x = x + attn

    # ---- MLP branch ----
    h2 = _ln_f32(x, ln[2:3, :], ln[3:4, :])
    h2 = jnp.dot(h2.astype(jnp.bfloat16), wfc1_ref[0],
                 preferred_element_type=jnp.float32) + bfc1_ref[0]
    # TODO(synk): torch nn.GELU() is exact erf GELU; tanh approximation used in-kernel.
    h2 = jax.nn.gelu(h2, approximate=True)
    h2 = jnp.dot(h2.astype(jnp.bfloat16), wfc2_ref[0],
                 preferred_element_type=jnp.float32) + bfc2_ref[0]
    x = x + h2
    x_scr[...] = x

    # ---- last depth step: final LN, drop CLS, mean over tokens ----
    @pl.when(d == depth - 1)
    def _():
        ngb = normgb_ref[...]                                       # (2, D)
        y = _ln_f32(x, ngb[0:1, :], ngb[1:2, :])
        rows = lax.broadcasted_iota(jnp.int32, y.shape, 0)
        y = jnp.where(rows > 0, y, 0.0)                             # mask CLS row
        out_ref[0] = (jnp.sum(y, axis=0, keepdims=True)
                      * (1.0 / (num_tokens - 1))).astype(out_ref.dtype)


# ------------------------------- model glue ------------------------------------
def init_params(key):
    ks = iter(jax.random.split(key, 8))
    D, Hm = EMBED_DIM, MLP_HIDDEN

    def normal(k_, shape, scale=0.02, dtype=jnp.float32):
        return (scale * jax.random.normal(k_, shape, jnp.float32)).astype(dtype)

    num_patches = (FIXSIZE // PATCH) ** 2
    ln_unit = jnp.stack([jnp.ones((D,), jnp.float32), jnp.zeros((D,), jnp.float32),
                         jnp.ones((D,), jnp.float32), jnp.zeros((D,), jnp.float32)])
    return {
        # Conv2d(3, D, 14, stride=14) weight flattened (c,kh,kw)->rows, kept f32 so
        # the ImageNet mean/std fold stays exact before the bf16 cast.
        "patch_w": normal(next(ks), (K_RAW, D)),
        "patch_b": jnp.zeros((D,), jnp.float32),
        "cls_token": normal(next(ks), (1, 1, D)),
        "pos_embed": normal(next(ks), (1, 1 + num_patches, D)),
        "norm": jnp.stack([jnp.ones((D,), jnp.float32), jnp.zeros((D,), jnp.float32)]),
        # per-block params stacked along a leading depth axis (streamed per depth step)
        "ln": jnp.tile(ln_unit[None], (DEPTH, 1, 1)),                         # (DEPTH,4,D)
        "w_qkv": normal(next(ks), (DEPTH, D, 3 * D), dtype=jnp.bfloat16),
        "b_qkv": jnp.zeros((DEPTH, 1, 3 * D), jnp.float32),
        "w_proj": normal(next(ks), (DEPTH, D, D), dtype=jnp.bfloat16),
        "b_proj": jnp.zeros((DEPTH, 1, D), jnp.float32),
        "w_fc1": normal(next(ks), (DEPTH, D, Hm), dtype=jnp.bfloat16),
        "b_fc1": jnp.zeros((DEPTH, 1, Hm), jnp.float32),
        "w_fc2": normal(next(ks), (DEPTH, Hm, D), dtype=jnp.bfloat16),
        "b_fc2": jnp.zeros((DEPTH, 1, D), jnp.float32),
    }


def _fold_norm_into_patch(patch_w, patch_b):
    """Fold per-channel (x - mean) / std into patch-embed weights/bias and pad K->K_PAD."""
    per_c = PATCH * PATCH
    inv_std = jnp.repeat(1.0 / IMAGENET_STD, per_c)[:, None]        # (K, 1)
    mean_k = jnp.repeat(IMAGENET_MEAN, per_c)[:, None]              # (K, 1)
    w_folded = patch_w * inv_std
    b_folded = patch_b - jnp.sum(patch_w * mean_k * inv_std, axis=0)
    w_folded = jnp.pad(w_folded, ((0, K_PAD - K_RAW), (0, 0))).astype(jnp.bfloat16)
    return w_folded, b_folded


def dino_extract_forward(image, params):
    """image: (B, 3, H, W) float32 -> (B, EMBED_DIM) mean features."""
    B = image.shape[0]
    D, Hm = EMBED_DIM, MLP_HIDDEN
    # _resize_input_image: Resize((fixsize, fixsize))
    # TODO(synk): torchvision Resize is antialiased bilinear; plain bilinear used here.
    img = jax.image.resize(image, (B, 3, FIXSIZE, FIXSIZE), method="bilinear")

    # patchify (Conv2d 14s14 -> patch rows). Stays as tiny XLA glue on the resized image.
    # TODO(synk): at real scale this gather can be expressed via BlockSpec index maps.
    Hp = Wp = FIXSIZE // PATCH
    Np = Hp * Wp
    T = Np + 1
    patches = img.reshape(B, 3, Hp, PATCH, Wp, PATCH)
    patches = patches.transpose(0, 2, 4, 1, 3, 5).reshape(B, Np, K_RAW)
    # pad contracting dim 588->640 and prepend an all-zero CLS row so the patch-embed
    # matmul covers all T rows with no in-kernel row slicing.
    patches = jnp.pad(patches, ((0, 0), (1, 0), (0, K_PAD - K_RAW)))          # (B, T, K_PAD)

    w_pe, b_pe = _fold_norm_into_patch(params["patch_w"], params["patch_b"])
    # cls/pos/bias table: row0 = cls + pos[0] (zero patch row adds nothing),
    # rows 1.. = pos[1..] + conv bias.
    clspos = jnp.concatenate(
        [params["cls_token"].reshape(1, D) + params["pos_embed"][0, :1],
         params["pos_embed"][0, 1:] + b_pe[None, :]], axis=0)                  # (T, D) f32

    kern = functools.partial(_dino_fused_kernel, num_heads=NUM_HEADS,
                             head_dim=HEAD_DIM, num_tokens=T, depth=DEPTH)

    flops = (2 * B * T * K_PAD * D
             + B * DEPTH * (2 * T * D * 3 * D                 # qkv
                            + NUM_HEADS * 4 * T * T * HEAD_DIM  # qk^T + p@v
                            + 2 * T * D * D                   # out-proj
                            + 4 * T * D * Hm))                # fc1 + fc2
    transcendentals = B * DEPTH * (NUM_HEADS * T * T + T * Hm)
    bytes_accessed = (B * (T * K_PAD * 4 + D * 4)                              # patches in, feat out
                      + B * (K_PAD * D * 2 + T * D * 4 + 2 * D * 4)            # resident tables
                      + B * DEPTH * ((3 * D * D + D * D + 2 * D * Hm) * 2      # streamed bf16 weights
                                     + (4 * D + 3 * D + D + Hm + D) * 4))      # streamed f32 LN/bias
    cost = pl.CostEstimate(flops=flops, transcendentals=transcendentals,
                           bytes_accessed=bytes_accessed)

    out = pl.pallas_call(
        kern,
        out_shape=jax.ShapeDtypeStruct((B, 1, D), jnp.float32),
        grid=(B, DEPTH),
        in_specs=[
            pl.BlockSpec((1, T, K_PAD), lambda b, d: (b, 0, 0)),   # patches (resident per b)
            pl.BlockSpec((K_PAD, D), lambda b, d: (0, 0)),         # folded patch-embed weight
            pl.BlockSpec((T, D), lambda b, d: (0, 0)),             # cls/pos/bias table
            pl.BlockSpec((1, 4, D), lambda b, d: (d, 0, 0)),       # ln1_g, ln1_b, ln2_g, ln2_b
            pl.BlockSpec((1, D, 3 * D), lambda b, d: (d, 0, 0)),   # w_qkv (streamed per depth)
            pl.BlockSpec((1, 1, 3 * D), lambda b, d: (d, 0, 0)),   # b_qkv
            pl.BlockSpec((1, D, D), lambda b, d: (d, 0, 0)),       # w_proj
            pl.BlockSpec((1, 1, D), lambda b, d: (d, 0, 0)),       # b_proj
            pl.BlockSpec((1, D, Hm), lambda b, d: (d, 0, 0)),      # w_fc1
            pl.BlockSpec((1, 1, Hm), lambda b, d: (d, 0, 0)),      # b_fc1
            pl.BlockSpec((1, Hm, D), lambda b, d: (d, 0, 0)),      # w_fc2
            pl.BlockSpec((1, 1, D), lambda b, d: (d, 0, 0)),       # b_fc2
            pl.BlockSpec((2, D), lambda b, d: (0, 0)),             # final norm gamma/beta
        ],
        out_specs=pl.BlockSpec((1, 1, D), lambda b, d: (b, 0, 0)),
        scratch_shapes=[pltpu.VMEM((T, D), jnp.float32)],          # VMEM-resident activation
        compiler_params=pltpu.CompilerParams(
            dimension_semantics=("parallel", "arbitrary")),
        cost_estimate=cost,
    )(patches, w_pe, clspos,
      params["ln"], params["w_qkv"], params["b_qkv"],
      params["w_proj"], params["b_proj"],
      params["w_fc1"], params["b_fc1"], params["w_fc2"], params["b_fc2"],
      params["norm"])

    return out.reshape(B, D)


if __name__ == "__main__":
    key = jax.random.PRNGKey(0)
    k_img, k_par = jax.random.split(key)
    image = jax.random.uniform(k_img, (2, 3, 40, 48), dtype=jnp.float32)   # NCHW, [0,1]
    params = init_params(k_par)

    out = jax.jit(dino_extract_forward)(image, params)
    out = jax.block_until_ready(out)

    assert out.shape == (2, EMBED_DIM), out.shape
    assert bool(jnp.all(jnp.isfinite(out)))
    print("KERNEL_OK")
</pallas_src>

<mosaic_0001>
module attributes {stable_mosaic.version = 11 : i64} {
  func.func @_dino_fused_kernel(%arg0: i32, %arg1: i32, %arg2: memref<1x17x640xf32, #tpu.memory_space<vmem>>, %arg3: memref<640x128xbf16, #tpu.memory_space<vmem>>, %arg4: memref<17x128xf32, #tpu.memory_space<vmem>>, %arg5: memref<1x4x128xf32, #tpu.memory_space<vmem>>, %arg6: memref<1x128x384xbf16, #tpu.memory_space<vmem>>, %arg7: memref<1x1x384xf32, #tpu.memory_space<vmem>>, %arg8: memref<1x128x128xbf16, #tpu.memory_space<vmem>>, %arg9: memref<1x1x128xf32, #tpu.memory_space<vmem>>, %arg10: memref<1x128x512xbf16, #tpu.memory_space<vmem>>, %arg11: memref<1x1x512xf32, #tpu.memory_space<vmem>>, %arg12: memref<1x512x128xbf16, #tpu.memory_space<vmem>>, %arg13: memref<1x1x128xf32, #tpu.memory_space<vmem>>, %arg14: memref<2x128xf32, #tpu.memory_space<vmem>>, %arg15: memref<1x1x128xf32, #tpu.memory_space<vmem>>, %arg16: memref<17x128xf32, #tpu.memory_space<vmem>>) attributes {dimension_semantics = [#tpu.dimension_semantics<parallel>, #tpu.dimension_semantics<arbitrary>], iteration_bounds = array<i64: 2, 3>, scalar_prefetch = 0 : i64, scratch_operands = 1 : i64, tpu.core_type = #tpu.core_type<tc>, window_params = [{transform_indices = @transform_0, window_bounds = array<i64: 1, 17, 640>}, {pipeline_mode = #tpu.pipeline_mode<synchronous>, transform_indices = @transform_1, window_bounds = array<i64: 640, 128>}, {pipeline_mode = #tpu.pipeline_mode<synchronous>, transform_indices = @transform_2, window_bounds = array<i64: 17, 128>}, {transform_indices = @transform_3, window_bounds = array<i64: 1, 4, 128>}, {transform_indices = @transform_4, window_bounds = array<i64: 1, 128, 384>}, {transform_indices = @transform_5, window_bounds = array<i64: 1, 1, 384>}, {transform_indices = @transform_6, window_bounds = array<i64: 1, 128, 128>}, {transform_indices = @transform_7, window_bounds = array<i64: 1, 1, 128>}, {transform_indices = @transform_8, window_bounds = array<i64: 1, 128, 512>}, {transform_indices = @transform_9, window_bounds = array<i64: 1, 1, 512>}, {transform_indices = @transform_10, window_bounds = array<i64: 1, 512, 128>}, {transform_indices = @transform_11, window_bounds = array<i64: 1, 1, 128>}, {pipeline_mode = #tpu.pipeline_mode<synchronous>, transform_indices = @transform_12, window_bounds = array<i64: 2, 128>}, {transform_indices = @transform_13, window_bounds = array<i64: 1, 1, 128>}]} {
    %c0_i32 = arith.constant 0 : i32
    %0 = arith.cmpi eq, %arg1, %c0_i32 : i32
    %1 = arith.extui %0 : i1 to i32
    %c0_i32_0 = arith.constant 0 : i32
    %2 = arith.cmpi ne, %1, %c0_i32_0 : i32
    scf.if %2 {
      %c0_59 = arith.constant 0 : index
      %c0_60 = arith.constant 0 : index
      %c0_61 = arith.constant 0 : index
      %151 = vector.load %arg2[%c0_59, %c0_60, %c0_61] : memref<1x17x640xf32, #tpu.memory_space<vmem>>, vector<1x17x640xf32>
      %152 = vector.shape_cast %151 : vector<1x17x640xf32> to vector<17x640xf32>
      %153 = arith.truncf %152 : vector<17x640xf32> to vector<17x640xbf16>
      %c0_62 = arith.constant 0 : index
      %c0_63 = arith.constant 0 : index
      %154 = vector.load %arg3[%c0_62, %c0_63] : memref<640x128xbf16, #tpu.memory_space<vmem>>, vector<640x128xbf16>
      %cst_64 = arith.constant dense<0.000000e+00> : vector<17x128xf32>
      %155 = tpu.matmul %153, %154, %cst_64 {dimension_numbers = #tpu.dot_dimension_numbers<[1], [0], [0], [1], [0, 0, 1, 1], [], []>} : vector<17x640xbf16>, vector<640x128xbf16>, vector<17x128xf32> -> vector<17x128xf32>
      %c0_65 = arith.constant 0 : index
      %c0_66 = arith.constant 0 : index
      %156 = vector.load %arg4[%c0_65, %c0_66] : memref<17x128xf32, #tpu.memory_space<vmem>>, vector<17x128xf32>
      %157 = arith.addf %155, %156 : vector<17x128xf32>
      %c0_67 = arith.constant 0 : index
      %c0_68 = arith.constant 0 : index
      %158 = vector.load %arg16[%c0_67, %c0_68] : memref<17x128xf32, #tpu.memory_space<vmem>>, vector<17x128xf32>
      tpu.vector_store %arg16[%c0_67, %c0_68], %157 {strides = array<i32>} : memref<17x128xf32, #tpu.memory_space<vmem>>, vector<17x128xf32>,
    } else {
    }
    %c0 = arith.constant 0 : index
    %c0_1 = arith.constant 0 : index
    %3 = vector.load %arg16[%c0, %c0_1] : memref<17x128xf32, #tpu.memory_space<vmem>>, vector<17x128xf32>
    %c0_2 = arith.constant 0 : index
    %c0_3 = arith.constant 0 : index
    %c0_4 = arith.constant 0 : index
    %4 = vector.load %arg5[%c0_2, %c0_3, %c0_4] : memref<1x4x128xf32, #tpu.memory_space<vmem>>, vector<1x4x128xf32>
    %5 = vector.shape_cast %4 : vector<1x4x128xf32> to vector<4x128xf32>
    %6 = vector.extract_strided_slice %5 {offsets = [0, 0], sizes = [1, 128], strides = [1, 1]} : vector<4x128xf32> to vector<1x128xf32>
    %7 = vector.extract_strided_slice %5 {offsets = [1, 0], sizes = [1, 128], strides = [1, 1]} : vector<4x128xf32> to vector<1x128xf32>
    %cst = arith.constant dense<0.000000e+00> : vector<17xf32>
    %8 = vector.multi_reduction <add>, %3, %cst [1] : vector<17x128xf32> to vector<17xf32>
    %9 = vector.shape_cast %8 : vector<17xf32> to vector<17x1xf32>
    %cst_5 = arith.constant 1.280000e+02 : f32
    %10 = vector.broadcast %cst_5 : f32 to vector<17x1xf32>
    %11 = arith.divf %9, %10 : vector<17x1xf32>
    %12 = arith.mulf %3, %3 : vector<17x128xf32>
    %cst_6 = arith.constant dense<0.000000e+00> : vector<17xf32>
    %13 = vector.multi_reduction <add>, %12, %cst_6 [1] : vector<17x128xf32> to vector<17xf32>
    %14 = vector.shape_cast %13 : vector<17xf32> to vector<17x1xf32>
    %cst_7 = arith.constant 1.280000e+02 : f32
    %15 = vector.broadcast %cst_7 : f32 to vector<17x1xf32>
    %16 = arith.divf %14, %15 : vector<17x1xf32>
    %17 = arith.mulf %11, %11 : vector<17x1xf32>
    %18 = arith.subf %16, %17 : vector<17x1xf32>
    %19 = vector.broadcast %11 : vector<17x1xf32> to vector<17x128xf32>
    %20 = arith.subf %3, %19 : vector<17x128xf32>
    %cst_8 = arith.constant 9.99999997E-7 : f32
    %21 = vector.broadcast %cst_8 : f32 to vector<17x1xf32>
    %22 = arith.addf %18, %21 : vector<17x1xf32>
    %23 = math.rsqrt %22 : vector<17x1xf32>
    %24 = vector.broadcast %23 : vector<17x1xf32> to vector<17x128xf32>
    %25 = arith.mulf %20, %24 : vector<17x128xf32>
    %26 = vector.broadcast %6 : vector<1x128xf32> to vector<17x128xf32>
    %27 = arith.mulf %25, %26 : vector<17x128xf32>
    %28 = vector.broadcast %7 : vector<1x128xf32> to vector<17x128xf32>
    %29 = arith.addf %27, %28 : vector<17x128xf32>
    %30 = arith.truncf %29 : vector<17x128xf32> to vector<17x128xbf16>
    %c0_9 = arith.constant 0 : index
    %c0_10 = arith.constant 0 : index
    %c0_11 = arith.constant 0 : index
    %31 = vector.load %arg6[%c0_9, %c0_10, %c0_11] : memref<1x128x384xbf16, #tpu.memory_space<vmem>>, vector<1x128x384xbf16>
    %32 = vector.shape_cast %31 : vector<1x128x384xbf16> to vector<128x384xbf16>
    %cst_12 = arith.constant dense<0.000000e+00> : vector<17x384xf32>
    %33 = tpu.matmul %30, %32, %cst_12 {dimension_numbers = #tpu.dot_dimension_numbers<[1], [0], [0], [1], [0, 0, 1, 1], [], []>} : vector<17x128xbf16>, vector<128x384xbf16>, vector<17x384xf32> -> vector<17x384xf32>
    %c0_13 = arith.constant 0 : index
    %c0_14 = arith.constant 0 : index
    %c0_15 = arith.constant 0 : index
    %34 = vector.load %arg7[%c0_13, %c0_14, %c0_15] : memref<1x1x384xf32, #tpu.memory_space<vmem>>, vector<1x1x384xf32>
    %35 = vector.shape_cast %34 : vector<1x1x384xf32> to vector<1x384xf32>
    %36 = vector.broadcast %35 : vector<1x384xf32> to vector<17x384xf32>
    %37 = arith.addf %33, %36 : vector<17x384xf32>
    %38 = vector.extract_strided_slice %37 {offsets = [0, 0], sizes = [17, 128], strides = [1, 1]} : vector<17x384xf32> to vector<17x128xf32>
    %39 = vector.extract_strided_slice %37 {offsets = [0, 128], sizes = [17, 128], strides = [1, 1]} : vector<17x384xf32> to vector<17x128xf32>
    %40 = vector.extract_strided_slice %37 {offsets = [0, 256], sizes = [17, 128], strides = [1, 1]} : vector<17x384xf32> to vector<17x128xf32>
    %41 = vector.extract_strided_slice %38 {offsets = [0, 0], sizes = [17, 64], strides = [1, 1]} : vector<17x128xf32> to vector<17x64xf32>
    %42 = arith.truncf %41 : vector<17x64xf32> to vector<17x64xbf16>
    %43 = vector.extract_strided_slice %39 {offsets = [0, 0], sizes = [17, 64], strides = [1, 1]} : vector<17x128xf32> to vector<17x64xf32>
    %44 = arith.truncf %43 : vector<17x64xf32> to vector<17x64xbf16>
    %45 = vector.extract_strided_slice %40 {offsets = [0, 0], sizes = [17, 64], strides = [1, 1]} : vector<17x128xf32> to vector<17x64xf32>
    %46 = arith.truncf %45 : vector<17x64xf32> to vector<17x64xbf16>
    %cst_16 = arith.constant dense<0.000000e+00> : vector<17x17xf32>
    %47 = tpu.matmul %42, %44, %cst_16 {dimension_numbers = #tpu.dot_dimension_numbers<[1], [1], [0], [0], [0, 0, 1, 0], [], []>} : vector<17x64xbf16>, vector<17x64xbf16>, vector<17x17xf32> -> vector<17x17xf32>
    %cst_17 = arith.constant 1.250000e-01 : f32
    %48 = vector.broadcast %cst_17 : f32 to vector<17x17xf32>
    %49 = arith.mulf %47, %48 : vector<17x17xf32>
    %cst_18 = arith.constant dense<0xFF800000> : vector<17xf32>
    %50 = vector.multi_reduction <maximumf>, %49, %cst_18 [1] : vector<17x17xf32> to vector<17xf32>
    %51 = vector.shape_cast %50 : vector<17xf32> to vector<17x1xf32>
    %52 = vector.broadcast %51 : vector<17x1xf32> to vector<17x17xf32>
    %53 = arith.subf %49, %52 : vector<17x17xf32>
    %54 = math.exp %53 : vector<17x17xf32>
    %cst_19 = arith.constant dense<0.000000e+00> : vector<17xf32>
    %55 = vector.multi_reduction <add>, %54, %cst_19 [1] : vector<17x17xf32> to vector<17xf32>
    %56 = vector.shape_cast %55 : vector<17xf32> to vector<17x1xf32>
    %57 = tpu.reciprocal %56 {approx = true} : vector<17x1xf32> -> vector<17x1xf32>
    %58 = vector.broadcast %57 : vector<17x1xf32> to vector<17x17xf32>
    %59 = arith.mulf %54, %58 : vector<17x17xf32>
    %60 = arith.truncf %59 : vector<17x17xf32> to vector<17x17xbf16>
    %cst_20 = arith.constant dense<0.000000e+00> : vector<17x64xf32>
    %61 = tpu.matmul %60, %46, %cst_20 {dimension_numbers = #tpu.dot_dimension_numbers<[1], [0], [0], [1], [0, 0, 1, 1], [], []>} : vector<17x17xbf16>, vector<17x64xbf16>, vector<17x64xf32> -> vector<17x64xf32>
    %62 = vector.extract_strided_slice %38 {offsets = [0, 64], sizes = [17, 64], strides = [1, 1]} : vector<17x128xf32> to vector<17x64xf32>
    %63 = arith.truncf %62 : vector<17x64xf32> to vector<17x64xbf16>
    %64 = vector.extract_strided_slice %39 {offsets = [0, 64], sizes = [17, 64], strides = [1, 1]} : vector<17x128xf32> to vector<17x64xf32>
    %65 = arith.truncf %64 : vector<17x64xf32> to vector<17x64xbf16>
    %66 = vector.extract_strided_slice %40 {offsets = [0, 64], sizes = [17, 64], strides = [1, 1]} : vector<17x128xf32> to vector<17x64xf32>
    %67 = arith.truncf %66 : vector<17x64xf32> to vector<17x64xbf16>
    %cst_21 = arith.constant dense<0.000000e+00> : vector<17x17xf32>
    %68 = tpu.matmul %63, %65, %cst_21 {dimension_numbers = #tpu.dot_dimension_numbers<[1], [1], [0], [0], [0, 0, 1, 0], [], []>} : vector<17x64xbf16>, vector<17x64xbf16>, vector<17x17xf32> -> vector<17x17xf32>
    %cst_22 = arith.constant 1.250000e-01 : f32
    %69 = vector.broadcast %cst_22 : f32 to vector<17x17xf32>
    %70 = arith.mulf %68, %69 : vector<17x17xf32>
    %cst_23 = arith.constant dense<0xFF800000> : vector<17xf32>
    %71 = vector.multi_reduction <maximumf>, %70, %cst_23 [1] : vector<17x17xf32> to vector<17xf32>
    %72 = vector.shape_cast %71 : vector<17xf32> to vector<17x1xf32>
    %73 = vector.broadcast %72 : vector<17x1xf32> to vector<17x17xf32>
    %74 = arith.subf %70, %73 : vector<17x17xf32>
    %75 = math.exp %74 : vector<17x17xf32>
    %cst_24 = arith.constant dense<0.000000e+00> : vector<17xf32>
    %76 = vector.multi_reduction <add>, %75, %cst_24 [1] : vector<17x17xf32> to vector<17xf32>
    %77 = vector.shape_cast %76 : vector<17xf32> to vector<17x1xf32>
    %78 = tpu.reciprocal %77 {approx = true} : vector<17x1xf32> -> vector<17x1xf32>
    %79 = vector.broadcast %78 : vector<17x1xf32> to vector<17x17xf32>
    %80 = arith.mulf %75, %79 : vector<17x17xf32>
    %81 = arith.truncf %80 : vector<17x17xf32> to vector<17x17xbf16>
    %cst_25 = arith.constant dense<0.000000e+00> : vector<17x64xf32>
    %82 = tpu.matmul %81, %67, %cst_25 {dimension_numbers = #tpu.dot_dimension_numbers<[1], [0], [0], [1], [0, 0, 1, 1], [], []>} : vector<17x17xbf16>, vector<17x64xbf16>, vector<17x64xf32> -> vector<17x64xf32>
    %83 = tpu.concatenate %61, %82 in 1 : vector<17x64xf32>, vector<17x64xf32> -> vector<17x128xf32>
    %84 = arith.truncf %83 : vector<17x128xf32> to vector<17x128xbf16>
    %c0_26 = arith.constant 0 : index
    %c0_27 = arith.constant 0 : index
    %c0_28 = arith.constant 0 : index
    %85 = vector.load %arg8[%c0_26, %c0_27, %c0_28] : memref<1x128x128xbf16, #tpu.memory_space<vmem>>, vector<1x128x128xbf16>
    %86 = vector.shape_cast %85 : vector<1x128x128xbf16> to vector<128x128xbf16>
    %cst_29 = arith.constant dense<0.000000e+00> : vector<17x128xf32>
    %87 = tpu.matmul %84, %86, %cst_29 {dimension_numbers = #tpu.dot_dimension_numbers<[1], [0], [0], [1], [0, 0, 1, 1], [], []>} : vector<17x128xbf16>, vector<128x128xbf16>, vector<17x128xf32> -> vector<17x128xf32>
    %c0_30 = arith.constant 0 : index
    %c0_31 = arith.constant 0 : index
    %c0_32 = arith.constant 0 : index
    %88 = vector.load %arg9[%c0_30, %c0_31, %c0_32] : memref<1x1x128xf32, #tpu.memory_space<vmem>>, vector<1x1x128xf32>
    %89 = vector.shape_cast %88 : vector<1x1x128xf32> to vector<1x128xf32>
    %90 = vector.broadcast %89 : vector<1x128xf32> to vector<17x128xf32>
    %91 = arith.addf %87, %90 : vector<17x128xf32>
    %92 = arith.addf %3, %91 : vector<17x128xf32>
    %93 = vector.extract_strided_slice %5 {offsets = [2, 0], sizes = [1, 128], strides = [1, 1]} : vector<4x128xf32> to vector<1x128xf32>
    %94 = vector.extract_strided_slice %5 {offsets = [3, 0], sizes = [1, 128], strides = [1, 1]} : vector<4x128xf32> to vector<1x128xf32>
    %cst_33 = arith.constant dense<0.000000e+00> : vector<17xf32>
    %95 = vector.multi_reduction <add>, %92, %cst_33 [1] : vector<17x128xf32> to vector<17xf32>
    %96 = vector.shape_cast %95 : vector<17xf32> to vector<17x1xf32>
    %cst_34 = arith.constant 1.280000e+02 : f32
    %97 = vector.broadcast %cst_34 : f32 to vector<17x1xf32>
    %98 = arith.divf %96, %97 : vector<17x1xf32>
    %99 = arith.mulf %92, %92 : vector<17x128xf32>
    %cst_35 = arith.constant dense<0.000000e+00> : vector<17xf32>
    %100 = vector.multi_reduction <add>, %99, %cst_35 [1] : vector<17x128xf32> to vector<17xf32>
    %101 = vector.shape_cast %100 : vector<17xf32> to vector<17x1xf32>
    %cst_36 = arith.constant 1.280000e+02 : f32
    %102 = vector.broadcast %cst_36 : f32 to vector<17x1xf32>
    %103 = arith.divf %101, %102 : vector<17x1xf32>
    %104 = arith.mulf %98, %98 : vector<17x1xf32>
    %105 = arith.subf %103, %104 : vector<17x1xf32>
    %106 = vector.broadcast %98 : vector<17x1xf32> to vector<17x128xf32>
    %107 = arith.subf %92, %106 : vector<17x128xf32>
    %cst_37 = arith.constant 9.99999997E-7 : f32
    %108 = vector.broadcast %cst_37 : f32 to vector<17x1xf32>
    %109 = arith.addf %105, %108 : vector<17x1xf32>
    %110 = math.rsqrt %109 : vector<17x1xf32>
    %111 = vector.broadcast %110 : vector<17x1xf32> to vector<17x128xf32>
    %112 = arith.mulf %107, %111 : vector<17x128xf32>
    %113 = vector.broadcast %93 : vector<1x128xf32> to vector<17x128xf32>
    %114 = arith.mulf %112, %113 : vector<17x128xf32>
    %115 = vector.broadcast %94 : vector<1x128xf32> to vector<17x128xf32>
    %116 = arith.addf %114, %115 : vector<17x128xf32>
    %117 = arith.truncf %116 : vector<17x128xf32> to vector<17x128xbf16>
    %c0_38 = arith.constant 0 : index
    %c0_39 = arith.constant 0 : index
    %c0_40 = arith.constant 0 : index
    %118 = vector.load %arg10[%c0_38, %c0_39, %c0_40] : memref<1x128x512xbf16, #tpu.memory_space<vmem>>, vector<1x128x512xbf16>
    %119 = vector.shape_cast %118 : vector<1x128x512xbf16> to vector<128x512xbf16>
    %cst_41 = arith.constant dense<0.000000e+00> : vector<17x512xf32>
    %120 = tpu.matmul %117, %119, %cst_41 {dimension_numbers = #tpu.dot_dimension_numbers<[1], [0], [0], [1], [0, 0, 1, 1], [], []>} : vector<17x128xbf16>, vector<128x512xbf16>, vector<17x512xf32> -> vector<17x512xf32>
    %c0_42 = arith.constant 0 : index
    %c0_43 = arith.constant 0 : index
    %c0_44 = arith.constant 0 : index
    %121 = vector.load %arg11[%c0_42, %c0_43, %c0_44] : memref<1x1x512xf32, #tpu.memory_space<vmem>>, vector<1x1x512xf32>
    %122 = vector.shape_cast %121 : vector<1x1x512xf32> to vector<1x512xf32>
    %123 = vector.broadcast %122 : vector<1x512xf32> to vector<17x512xf32>
    %124 = arith.addf %120, %123 : vector<17x512xf32>
    %125 = arith.mulf %124, %124 : vector<17x512xf32>
    %126 = arith.mulf %124, %125 : vector<17x512xf32>
    %cst_45 = arith.constant 4.471500e-02 : f32
    %127 = vector.broadcast %cst_45 : f32 to vector<17x512xf32>
    %128 = arith.mulf %127, %126 : vector<17x512xf32>
    %129 = arith.addf %124, %128 : vector<17x512xf32>
    %cst_46 = arith.constant 0.797884583 : f32
    %130 = vector.broadcast %cst_46 : f32 to vector<17x512xf32>
    %131 = arith.mulf %130, %129 : vector<17x512xf32>
    %132 = math.tanh %131 : vector<17x512xf32>
    %cst_47 = arith.constant 1.000000e+00 : f32
    %133 = vector.broadcast %cst_47 : f32 to vector<17x512xf32>
    %134 = arith.addf %133, %132 : vector<17x512xf32>
    %cst_48 = arith.constant 5.000000e-01 : f32
    %135 = vector.broadcast %cst_48 : f32 to vector<17x512xf32>
    %136 = arith.mulf %135, %134 : vector<17x512xf32>
    %137 = arith.mulf %124, %136 : vector<17x512xf32>
    %138 = arith.truncf %137 : vector<17x512xf32> to vector<17x512xbf16>
    %c0_49 = arith.constant 0 : index
    %c0_50 = arith.constant 0 : index
    %c0_51 = arith.constant 0 : index
    %139 = vector.load %arg12[%c0_49, %c0_50, %c0_51] : memref<1x512x128xbf16, #tpu.memory_space<vmem>>, vector<1x512x128xbf16>
    %140 = vector.shape_cast %139 : vector<1x512x128xbf16> to vector<512x128xbf16>
    %cst_52 = arith.constant dense<0.000000e+00> : vector<17x128xf32>
    %141 = tpu.matmul %138, %140, %cst_52 {dimension_numbers = #tpu.dot_dimension_numbers<[1], [0], [0], [1], [0, 0, 1, 1], [], []>} : vector<17x512xbf16>, vector<512x128xbf16>, vector<17x128xf32> -> vector<17x128xf32>
    %c0_53 = arith.constant 0 : index
    %c0_54 = arith.constant 0 : index
    %c0_55 = arith.constant 0 : index
    %142 = vector.load %arg13[%c0_53, %c0_54, %c0_55] : memref<1x1x128xf32, #tpu.memory_space<vmem>>, vector<1x1x128xf32>
    %143 = vector.shape_cast %142 : vector<1x1x128xf32> to vector<1x128xf32>
    %144 = vector.broadcast %143 : vector<1x128xf32> to vector<17x128xf32>
    %145 = arith.addf %141, %144 : vector<17x128xf32>
    %146 = arith.addf %92, %145 : vector<17x128xf32>
    %c0_56 = arith.constant 0 : index
    %c0_57 = arith.constant 0 : index
    %147 = vector.load %arg16[%c0_56, %c0_57] : memref<17x128xf32, #tpu.memory_space<vmem>>, vector<17x128xf32>
    tpu.vector_store %arg16[%c0_56, %c0_57], %146 {strides = array<i32>} : memref<17x128xf32, #tpu.memory_space<vmem>>, vector<17x128xf32>,
    %c2_i32 = arith.constant 2 : i32
    %148 = arith.cmpi eq, %arg1, %c2_i32 : i32
    %149 = arith.extui %148 : i1 to i32
    %c0_i32_58 = arith.constant 0 : i32
    %150 = arith.cmpi ne, %149, %c0_i32_58 : i32
    scf.if %150 {
      %c0_59 = arith.constant 0 : index
      %c0_60 = arith.constant 0 : index
      %151 = vector.load %arg14[%c0_59, %c0_60] : memref<2x128xf32, #tpu.memory_space<vmem>>, vector<2x128xf32>
      %152 = vector.extract_strided_slice %151 {offsets = [0, 0], sizes = [1, 128], strides = [1, 1]} : vector<2x128xf32> to vector<1x128xf32>
      %153 = vector.extract_strided_slice %151 {offsets = [1, 0], sizes = [1, 128], strides = [1, 1]} : vector<2x128xf32> to vector<1x128xf32>
      %cst_61 = arith.constant dense<0.000000e+00> : vector<17xf32>
      %154 = vector.multi_reduction <add>, %146, %cst_61 [1] : vector<17x128xf32> to vector<17xf32>
      %155 = vector.shape_cast %154 : vector<17xf32> to vector<17x1xf32>
      %cst_62 = arith.constant 1.280000e+02 : f32
      %156 = vector.broadcast %cst_62 : f32 to vector<17x1xf32>
      %157 = arith.divf %155, %156 : vector<17x1xf32>
      %158 = arith.mulf %146, %146 : vector<17x128xf32>
      %cst_63 = arith.constant dense<0.000000e+00> : vector<17xf32>
      %159 = vector.multi_reduction <add>, %158, %cst_63 [1] : vector<17x128xf32> to vector<17xf32>
      %160 = vector.shape_cast %159 : vector<17xf32> to vector<17x1xf32>
      %cst_64 = arith.constant 1.280000e+02 : f32
      %161 = vector.broadcast %cst_64 : f32 to vector<17x1xf32>
      %162 = arith.divf %160, %161 : vector<17x1xf32>
      %163 = arith.mulf %157, %157 : vector<17x1xf32>
      %164 = arith.subf %162, %163 : vector<17x1xf32>
      %165 = vector.broadcast %157 : vector<17x1xf32> to vector<17x128xf32>
      %166 = arith.subf %146, %165 : vector<17x128xf32>
      %cst_65 = arith.constant 9.99999997E-7 : f32
      %167 = vector.broadcast %cst_65 : f32 to vector<17x1xf32>
      %168 = arith.addf %164, %167 : vector<17x1xf32>
      %169 = math.rsqrt %168 : vector<17x1xf32>
      %170 = vector.broadcast %169 : vector<17x1xf32> to vector<17x128xf32>
      %171 = arith.mulf %166, %170 : vector<17x128xf32>
      %172 = vector.broadcast %152 : vector<1x128xf32> to vector<17x128xf32>
      %173 = arith.mulf %171, %172 : vector<17x128xf32>
      %174 = vector.broadcast %153 : vector<1x128xf32> to vector<17x128xf32>
      %175 = arith.addf %173, %174 : vector<17x128xf32>
      %176 = tpu.iota {dimensions = array<i32: 0>} : vector<17x128xi32>
      %c0_i32_66 = arith.constant 0 : i32
      %177 = vector.broadcast %c0_i32_66 : i32 to vector<17x128xi32>
      %178 = arith.cmpi sgt, %176, %177 : vector<17x128xi32>
      %cst_67 = arith.constant 0.000000e+00 : f32
      %179 = vector.broadcast %cst_67 : f32 to vector<17x128xf32>
      %180 = arith.select %178, %175, %179 : vector<17x128xi1>, vector<17x128xf32>
      %cst_68 = arith.constant dense<0.000000e+00> : vector<128xf32>
      %181 = vector.multi_reduction <add>, %180, %cst_68 [0] : vector<17x128xf32> to vector<128xf32>
      %182 = vector.shape_cast %181 : vector<128xf32> to vector<1x128xf32>
      %cst_69 = arith.constant 6.250000e-02 : f32
      %183 = vector.broadcast %cst_69 : f32 to vector<1x128xf32>
      %184 = arith.mulf %182, %183 : vector<1x128xf32>
      %c0_70 = arith.constant 0 : index
      %c0_71 = arith.constant 0 : index
      %c0_72 = arith.constant 0 : index
      %185 = vector.load %arg15[%c0_70, %c0_71, %c0_72] : memref<1x1x128xf32, #tpu.memory_space<vmem>>, vector<1x1x128xf32>
      %186 = vector.shape_cast %185 : vector<1x1x128xf32> to vector<1x128xf32>
      %187 = vector.shape_cast %184 : vector<1x128xf32> to vector<1x1x128xf32>
      tpu.vector_store %arg15[%c0_70, %c0_71, %c0_72], %187 {strides = array<i32>} : memref<1x1x128xf32, #tpu.memory_space<vmem>>, vector<1x1x128xf32>,
    } else {
    }
    return
  }
  func.func @transform_0(%arg0: i32, %arg1: i32) -> (i32, i32, i32) {
    %c0_i32 = arith.constant 0 : i32
    %c0_i32_0 = arith.constant 0 : i32
    %c0_i32_1 = arith.constant 0 : i32
    return %arg0, %c0_i32, %c0_i32_0 : i32, i32, i32
  }
  func.func @transform_1(%arg0: i32, %arg1: i32) -> (i32, i32) {
    %c0_i32 = arith.constant 0 : i32
    %c0_i32_0 = arith.constant 0 : i32
    %c0_i32_1 = arith.constant 0 : i32
    return %c0_i32, %c0_i32_0 : i32, i32
  }
  func.func @transform_2(%arg0: i32, %arg1: i32) -> (i32, i32) {
    %c0_i32 = arith.constant 0 : i32
    %c0_i32_0 = arith.constant 0 : i32
    %c0_i32_1 = arith.constant 0 : i32
    return %c0_i32, %c0_i32_0 : i32, i32
  }
  func.func @transform_3(%arg0: i32, %arg1: i32) -> (i32, i32, i32) {
    %c0_i32 = arith.constant 0 : i32
    %c0_i32_0 = arith.constant 0 : i32
    %c0_i32_1 = arith.constant 0 : i32
    return %arg1, %c0_i32, %c0_i32_0 : i32, i32, i32
  }
  func.func @transform_4(%arg0: i32, %arg1: i32) -> (i32, i32, i32) {
    %c0_i32 = arith.constant 0 : i32
    %c0_i32_0 = arith.constant 0 : i32
    %c0_i32_1 = arith.constant 0 : i32
    return %arg1, %c0_i32, %c0_i32_0 : i32, i32, i32
  }
  func.func @transform_5(%arg0: i32, %arg1: i32) -> (i32, i32, i32) {
    %c0_i32 = arith.constant 0 : i32
    %c0_i32_0 = arith.constant 0 : i32
    %c0_i32_1 = arith.constant 0 : i32
    return %arg1, %c0_i32, %c0_i32_0 : i32, i32, i32
  }
  func.func @transform_6(%arg0: i32, %arg1: i32) -> (i32, i32, i32) {
    %c0_i32 = arith.constant 0 : i32
    %c0_i32_0 = arith.constant 0 : i32
    %c0_i32_1 = arith.constant 0 : i32
    return %arg1, %c0_i32, %c0_i32_0 : i32, i32, i32
  }
  func.func @transform_7(%arg0: i32, %arg1: i32) -> (i32, i32, i32) {
    %c0_i32 = arith.constant 0 : i32
    %c0_i32_0 = arith.constant 0 : i32
    %c0_i32_1 = arith.constant 0 : i32
    return %arg1, %c0_i32, %c0_i32_0 : i32, i32, i32
  }
  func.func @transform_8(%arg0: i32, %arg1: i32) -> (i32, i32, i32) {
    %c0_i32 = arith.constant 0 : i32
    %c0_i32_0 = arith.constant 0 : i32
    %c0_i32_1 = arith.constant 0 : i32
    return %arg1, %c0_i32, %c0_i32_0 : i32, i32, i32
  }
  func.func @transform_9(%arg0: i32, %arg1: i32) -> (i32, i32, i32) {
    %c0_i32 = arith.constant 0 : i32
    %c0_i32_0 = arith.constant 0 : i32
    %c0_i32_1 = arith.constant 0 : i32
    return %arg1, %c0_i32, %c0_i32_0 : i32, i32, i32
  }
  func.func @transform_10(%arg0: i32, %arg1: i32) -> (i32, i32, i32) {
    %c0_i32 = arith.constant 0 : i32
    %c0_i32_0 = arith.constant 0 : i32
    %c0_i32_1 = arith.constant 0 : i32
    return %arg1, %c0_i32, %c0_i32_0 : i32, i32, i32
  }
  func.func @transform_11(%arg0: i32, %arg1: i32) -> (i32, i32, i32) {
    %c0_i32 = arith.constant 0 : i32
    %c0_i32_0 = arith.constant 0 : i32
    %c0_i32_1 = arith.constant 0 : i32
    return %arg1, %c0_i32, %c0_i32_0 : i32, i32, i32
  }
  func.func @transform_12(%arg0: i32, %arg1: i32) -> (i32, i32) {
    %c0_i32 = arith.constant 0 : i32
    %c0_i32_0 = arith.constant 0 : i32
    %c0_i32_1 = arith.constant 0 : i32
    return %c0_i32, %c0_i32_0 : i32, i32
  }
  func.func @transform_13(%arg0: i32, %arg1: i32) -> (i32, i32, i32) {
    %c0_i32 = arith.constant 0 : i32
    %c0_i32_0 = arith.constant 0 : i32
    %c0_i32_1 = arith.constant 0 : i32
    return %arg0, %c0_i32, %c0_i32_0 : i32, i32, i32
  }
}

</mosaic_0001>

<llo_original>
// kernel: mul.21
$region0: #{mul.21}
  %s0 = inlined_call_operand.vmem [shape: f32[3,196], index: 0, kind: input, shape index: {}]
  %s1 = inlined_call_operand.vmem [shape: f32[588], index: 1, kind: output, shape index: {}]
  $region1: #{mul.21} parent=0
    #allocation0 [shape = 'u8[8192]{0}', space=vmem, size = 0x2000, scoped, tag = 'scoped mem for input reshape']
    %s3 = sshllo.u32 0, 4
    %s4 = scalar_lea.vmem %s0, 4
    %v5 = vld [vmem:[%s4] sm:%s3]
    %s6 = scalar_lea.vmem [#allocation0], 8
    %7 = vst [vmem:[%s6] sm:%s3] %v5
    %v8 = vld [vmem:[%s0] sm:%s3]
    %9 = vst [vmem:[#allocation0] sm:%s3] %v8
    %s10 = scalar_lea.vmem [#allocation0], 8
    %v11 = vld [vmem:[%s10] sm:$0x1]
    %vm12 = vcmask 556032
    %s13 = scalar_lea.vmem %s1, 1
    %14 = vst.msk [vmem:[%s13] sm:$0x1] %vm12, %v11
    %v15 = vld [vmem:[#allocation0] sm:$0x1]
    %16 = vst [vmem:[%s1] sm:$0x1] %v15
    %s17 = scalar_lea.vmem [#allocation0], 9
    %v18 = vld [vmem:[%s17] sm:$0x1]
    %s19 = scalar_lea.vmem [#allocation0], 1
    %s20 = smov 3
    %v21 = vld [vmem:[%s19] ss:$8 sm:%s20]
    %vm22 = vcmask 490496
    %v23 = vsel %vm22, %v21, %v18
    %24 = vrot.lane.b32.xlu0 %v23, 68
    %v25 = vpop.permute.xlu0 %24
    %vm26 = vcmask 64512
    %s27 = scalar_lea.vmem %s1, 3
    %28 = vst.msk [vmem:[%s27] sm:$0x1] %vm26, %v25
    %vm29 = vcmask 1048096
    %s30 = scalar_lea.vmem %s1, 1
    %31 = vst.msk [vmem:[%s30] sm:$0x3] %vm29, %v25
    %s32 = scalar_lea.vmem [#allocation0], 1
    %v33 = vld [vmem:[%s32] sm:$0x1]
    %34 = vrot.lane.b32.xlu0 %v33, 68
    %v35 = vpop.permute.xlu0 %34
    %vm36 = vcmask 556032
    %s37 = scalar_lea.vmem %s1, 2
    %38 = vst.msk [vmem:[%s37] sm:$0x1] %vm36, %v35
    %s39 = scalar_lea.vmem [#allocation0], 2
    %v40 = vld [vmem:[%s39] sm:$0x1]
    %s41 = scalar_lea.vmem [#allocation0], 10
    %v42 = vld [vmem:[%s41] sm:$0x1]
    %vm43 = vcmask 982016
    %v44 = vsel %vm43, %v42, %v40
    %45 = vrot.lane.b32.xlu0 %v44, 8
    %v46 = vpop.permute.xlu0 %45
    %vm47 = vcmask 64512
    %s48 = scalar_lea.vmem %s1, 4
    %49 = vst.msk [vmem:[%s48] sm:$0x1] %vm47, %v46
    %vm50 = vcmask 621632
    %s51 = scalar_lea.vmem %s1, 4
    %52 = vst.msk [vmem:[%s51] sm:$0x1] %vm50, %v46
    %s53 = scalar_lea.vmem [#allocation0], 2
    %v54 = vld [vmem:[%s53] sm:$0x1]
    %55 = vrot.lane.b32.xlu0 %v54, 8
    %v56 = vpop.permute.xlu0 %55
    %vm57 = vcmask 1047616
    %s58 = scalar_lea.vmem %s1, 3
    %59 = vst.msk [vmem:[%s58] sm:$0x1] %vm57, %v56

// kernel: sub.37
$region0: #{sub.37}
  #allocation0 [shape = 's32[1]{0}', space=sflag, size = 0x4, scoped, tag = 'scoped memory for sub.37']
  %s0 = inlined_call_operand.vmem [shape: f32[128], index: 0, kind: input, shape index: {}]
  %s1 = inlined_call_operand.vmem [shape: f32[128], index: 1, kind: input, shape index: {}]
  %s2 = inlined_call_operand.vmem [shape: f32[128], index: 2, kind: output, shape index: {}]
  %v3 = vld [vmem:[%s0] sm:$0x1]
  %v4 = vld [vmem:[%s1] sm:$0x1]
  %5 = xla_tuple %v3, %v4
  %6 = xla_tuple %5
  %v7 = vsub.f32 %v3, %v4
  %8 = xla_tuple %v7
  %9 = vst [vmem:[%s2] sm:$0x1] %v7

// kernel: dino_extract_forward.1
$region0: #{dino_extract_forward.1}
  #allocation0 [shape = 'u32[]', space=smem, size = 0x4, offset = 0x4, fixed_abs, tag = 'smem constant byte address 0x4 - core index']
  #allocation1 [shape = 'u32[144,128]{1,0:T(1,128)}', space=vmem, size = 0x12000, scoped, tag = 'internal scratch']
  #allocation2 [shape = 'f32[17,128]{1,0:T(8,128)}', space=vmem, size = 0x3000, scoped, tag = 'scratch operand']
  %s0 = inlined_call_operand.vmem [shape: f32[2,17,640], index: 0, kind: input, shape index: {}]
  %s1 = inlined_call_operand.vmem [shape: bf16[640,128], index: 1, kind: input, shape index: {}]
  %s2 = inlined_call_operand.vmem [shape: f32[17,128], index: 2, kind: input, shape index: {}]
  %s3 = inlined_call_operand.vmem [shape: f32[3,4,128], index: 3, kind: input, shape index: {}]
  %s4 = inlined_call_operand.vmem [shape: bf16[3,128,384], index: 4, kind: input, shape index: {}]
  %s5 = inlined_call_operand.vmem [shape: f32[3,1,384], index: 5, kind: input, shape index: {}]
  %s6 = inlined_call_operand.vmem [shape: bf16[3,128,128], index: 6, kind: input, shape index: {}]
  %s7 = inlined_call_operand.vmem [shape: f32[3,1,128], index: 7, kind: input, shape index: {}]
  %s8 = inlined_call_operand.vmem [shape: bf16[3,128,512], index: 8, kind: input, shape index: {}]
  %s9 = inlined_call_operand.vmem [shape: f32[3,1,512], index: 9, kind: input, shape index: {}]
  %s10 = inlined_call_operand.vmem [shape: bf16[3,512,128], index: 10, kind: input, shape index: {}]
  %s11 = inlined_call_operand.vmem [shape: f32[3,1,128], index: 11, kind: input, shape index: {}]
  %s12 = inlined_call_operand.vmem [shape: f32[2,128], index: 12, kind: input, shape index: {}]
  %s13 = inlined_call_operand.hbm [shape: f32[2,1,128], index: 13, kind: output, shape index: {}]
  %s14 = sld [smem:[#allocation0]]
  $region93: #{dino_extract_forward.1} parent=0
    _
  %s16 = ssub.s32 1, %s14
  %s17 = scalar_select 0, %s16, %s14
  $region1: #{dino_extract_forward.1} parent=0
    #allocation3 [shape = 'u8[1024]{0}', space=vmem, size = 0x400, scoped, tag = 'output window, operand 0']
    #allocation4 [shape = 's32[2]{0}', space=sflag, size = 0x8, scoped, tag = 'scoped memory for dino_extract_forward.1']
    %18 = vsyncpa [#allocation4], 0
    %s19 = scalar_lea.sflag [#allocation4], 1
    %20 = vsyncpa %s19, 0
    loop: start=0, step=1, limit=8
    $region2: #{dino_extract_forward.1} parent=1 // loop_pre_header
      _
    $region3: #{dino_extract_forward.1} parent=1 // loop_header
      %s22 = sphi 0, %s26
      %p23 = scmp.ge.s32.totalorder %s22, 8
      %s29 = sphi 0, %s41
      %s30 = sphi 0, %s37
      %s31 = sphi 0, %s29
      %s32 = sphi 0, %s30
      %s33 = sphi 0, %s31
      %s34 = sphi 0, %s32
      %s44 = sphi 0, %s46
      %s47 = sphi 0, %s44
      %s48 = sphi 0, %s47
      %s64 = sphi 0, %s48
      %s68 = sphi 0, %s68
      %s70 = sphi 0, %s68
      %s71 = sphi 0, %s70
      %s85 = sphi 0, %s71
      %s89 = sphi 0, %s89
      %s91 = sphi 0, %s89
      %s92 = sphi 0, %s91
      %s106 = sphi 0, %s92
      %s112 = sphi 0, %s114
      %s115 = sphi 0, %s112
      %s116 = sphi 0, %s115
      %s132 = sphi 0, %s116
      %s138 = sphi 0, %s140
      %s141 = sphi 0, %s138
      %s142 = sphi 0, %s141
      %s158 = sphi 0, %s142
      %s164 = sphi 0, %s166
      %s167 = sphi 0, %s164
      %s168 = sphi 0, %s167
      %s184 = sphi 0, %s168
      %s190 = sphi 0, %s192
      %s193 = sphi 0, %s190
      %s194 = sphi 0, %s193
      %s210 = sphi 0, %s194
      %s216 = sphi 0, %s218
      %s219 = sphi 0, %s216
      %s220 = sphi 0, %s219
      %s236 = sphi 0, %s220
      %s242 = sphi 0, %s244
      %s245 = sphi 0, %s242
      %s246 = sphi 0, %s245
      %s262 = sphi 0, %s246
      %s268 = sphi 0, %s270
      %s271 = sphi 0, %s268
      %s272 = sphi 0, %s271
      %s288 = sphi 0, %s272
      %s294 = sphi 0, %s296
      %s297 = sphi 0, %s294
      %s298 = sphi 0, %s297
      %s314 = sphi 0, %s298
      %s320 = sphi 0, %s322
      %s323 = sphi 0, %s320
      %s324 = sphi 0, %s323
      %s340 = sphi 0, %s324
      %s344 = sphi 0, %s344
      %s346 = sphi 0, %s344
      %s347 = sphi 0, %s346
      %s361 = sphi 0, %s347
      %s367 = sphi 0, %s369
      %s370 = sphi 0, %s367
      %s371 = sphi 0, %s370
      %s387 = sphi 0, %s371
    $region4: #{dino_extract_forward.1} parent=1 // loop_header_branch
      %25 = sbr.rel (%p23) target = $region8
    $region5: #{dino_extract_forward.1} parent=1 // loop_body
      %s27 = ssub.s32 %s22, 1
      %s28 = ssub.s32 %s22, 2
      %s35 = sadd.s32 1, %s30
      %p36 = scmp.ge.s32.totalorder %s35, 3
      %s37 = scalar_select %p36, 0, %s35
      %s38 = sadd.s32 1, %s29
      %s39 = scalar_select %p36, %s38, %s29
      %p40 = scmp.ge.s32.totalorder %s39, 2
      %s41 = scalar_select %p40, 0, %s39
      %s42 = ssub.s32 %s29, %s41
      %p43 = scmp.eq.s32.totalorder %s42, 0
      %s45 = sadd.s32 %s44, 1
      %s46 = scalar_select %p43, %s44, %s45
      %p49 = pneg %p43
      %p50 = scmp.eq.s32.totalorder %s22, 5
      %p51 = por %p49, %p50
      %p52 = scmp.ne.s32.totalorder %s44, %s47
      %p53 = scmp.eq.s32.totalorder %s22, 0
      %p54 = por %p52, %p53
      %p55 = scmp.ne.s32.totalorder %s44, %s47
      %p56 = scmp.eq.s32.totalorder %s27, 5
      %p57 = por %p55, %p56
      %p58 = scmp.ne.s32.totalorder %s47, %s48
      %p59 = scmp.eq.s32.totalorder %s27, 0
      %p60 = por %p58, %p59
      %p61 = scmp.ne.s32.totalorder %s47, %s48
      %p62 = scmp.eq.s32.totalorder %s28, 5
      %p63 = por %p61, %p62
      %p65 = scmp.ne.s32.totalorder %s48, %s64
      %p66 = scmp.eq.s32.totalorder %s28, 0
      %p67 = por %p65, %p66
      %s69 = sadd.s32 %s68, 1
      %p72 = scmp.eq.s32.totalorder %s22, 5
      %p73 = scmp.ne.s32.totalorder %s68, %s70
      %p74 = scmp.eq.s32.totalorder %s22, 0
      %p75 = por %p73, %p74
      %p76 = scmp.ne.s32.totalorder %s68, %s70
      %p77 = scmp.eq.s32.totalorder %s27, 5
      %p78 = por %p76, %p77
      %p79 = scmp.ne.s32.totalorder %s70, %s71
      %p80 = scmp.eq.s32.totalorder %s27, 0
      %p81 = por %p79, %p80
      %p82 = scmp.ne.s32.totalorder %s70, %s71
      %p83 = scmp.eq.s32.totalorder %s28, 5
      %p84 = por %p82, %p83
      %p86 = scmp.ne.s32.totalorder %s71, %s85
      %p87 = scmp.eq.s32.totalorder %s28, 0
      %p88 = por %p86, %p87
      %s90 = sadd.s32 %s89, 1
      %p93 = scmp.eq.s32.totalorder %s22, 5
      %p94 = scmp.ne.s32.totalorder %s89, %s91
      %p95 = scmp.eq.s32.totalorder %s22, 0
      %p96 = por %p94, %p95
      %p97 = scmp.ne.s32.totalorder %s89, %s91
      %p98 = scmp.eq.s32.totalorder %s27, 5
      %p99 = por %p97, %p98
      %p100 = scmp.ne.s32.totalorder %s91, %s92
      %p101 = scmp.eq.s32.totalorder %s27, 0
      %p102 = por %p100, %p101
      %p103 = scmp.ne.s32.totalorder %s91, %s92
      %p104 = scmp.eq.s32.totalorder %s28, 5
      %p105 = por %p103, %p104
      %p107 = scmp.ne.s32.totalorder %s92, %s106
      %p108 = scmp.eq.s32.totalorder %s28, 0
      %p109 = por %p107, %p108
      %s110 = ssub.s32 %s30, %s37
      %p111 = scmp.eq.s32.totalorder %s110, 0
      %s113 = sadd.s32 %s112, 1
      %s114 = scalar_select %p111, %s112, %s113
      %p117 = pneg %p111
      %p118 = scmp.eq.s32.totalorder %s22, 5
      %p119 = por %p117, %p118
      %p120 = scmp.ne.s32.totalorder %s112, %s115
      %p121 = scmp.eq.s32.totalorder %s22, 0
      %p122 = por %p120, %p121
      %p123 = scmp.ne.s32.totalorder %s112, %s115
      %p124 = scmp.eq.s32.totalorder %s27, 5
      %p125 = por %p123, %p124
      %p126 = scmp.ne.s32.totalorder %s115, %s116
      %p127 = scmp.eq.s32.totalorder %s27, 0
      %p128 = por %p126, %p127
      %p129 = scmp.ne.s32.totalorder %s115, %s116
      %p130 = scmp.eq.s32.totalorder %s28, 5
      %p131 = por %p129, %p130
      %p133 = scmp.ne.s32.totalorder %s116, %s132
      %p134 = scmp.eq.s32.totalorder %s28, 0
      %p135 = por %p133, %p134
      %s136 = ssub.s32 %s30, %s37
      %p137 = scmp.eq.s32.totalorder %s136, 0
      %s139 = sadd.s32 %s138, 1
      %s140 = scalar_select %p137, %s138, %s139
      %p143 = pneg %p137
      %p144 = scmp.eq.s32.totalorder %s22, 5
      %p145 = por %p143, %p144
      %p146 = scmp.ne.s32.totalorder %s138, %s141
      %p147 = scmp.eq.s32.totalorder %s22, 0
      %p148 = por %p146, %p147
      %p149 = scmp.ne.s32.totalorder %s138, %s141
      %p150 = scmp.eq.s32.totalorder %s27, 5
      %p151 = por %p149, %p150
      %p152 = scmp.ne.s32.totalorder %s141, %s142
      %p153 = scmp.eq.s32.totalorder %s27, 0
      %p154 = por %p152, %p153
      %p155 = scmp.ne.s32.totalorder %s141, %s142
      %p156 = scmp.eq.s32.totalorder %s28, 5
      %p157 = por %p155, %p156
      %p159 = scmp.ne.s32.totalorder %s142, %s158
      %p160 = scmp.eq.s32.totalorder %s28, 0
      %p161 = por %p159, %p160
      %s162 = ssub.s32 %s30, %s37
      %p163 = scmp.eq.s32.totalorder %s162, 0
      %s165 = sadd.s32 %s164, 1
      %s166 = scalar_select %p163, %s164, %s165
      %p169 = pneg %p163
      %p170 = scmp.eq.s32.totalorder %s22, 5
      %p171 = por %p169, %p170
      %p172 = scmp.ne.s32.totalorder %s164, %s167
      %p173 = scmp.eq.s32.totalorder %s22, 0
      %p174 = por %p172, %p173
      %p175 = scmp.ne.s32.totalorder %s164, %s167
      %p176 = scmp.eq.s32.totalorder %s27, 5
      %p177 = por %p175, %p176
      %p178 = scmp.ne.s32.totalorder %s167, %s168
      %p179 = scmp.eq.s32.totalorder %s27, 0
      %p180 = por %p178, %p179
      %p181 = scmp.ne.s32.totalorder %s167, %s168
      %p182 = scmp.eq.s32.totalorder %s28, 5
      %p183 = por %p181, %p182
      %p185 = scmp.ne.s32.totalorder %s168, %s184
      %p186 = scmp.eq.s32.totalorder %s28, 0
      %p187 = por %p185, %p186
      %s188 = ssub.s32 %s30, %s37
      %p189 = scmp.eq.s32.totalorder %s188, 0
      %s191 = sadd.s32 %s190, 1
      %s192 = scalar_select %p189, %s190, %s191
      %p195 = pneg %p189
      %p196 = scmp.eq.s32.totalorder %s22, 5
      %p197 = por %p195, %p196
      %p198 = scmp.ne.s32.totalorder %s190, %s193
      %p199 = scmp.eq.s32.totalorder %s22, 0
      %p200 = por %p198, %p199
      %p201 = scmp.ne.s32.totalorder %s190, %s193
      %p202 = scmp.eq.s32.totalorder %s27, 5
      %p203 = por %p201, %p202
      %p204 = scmp.ne.s32.totalorder %s193, %s194
      %p205 = scmp.eq.s32.totalorder %s27, 0
      %p206 = por %p204, %p205
      %p207 = scmp.ne.s32.totalorder %s193, %s194
      %p208 = scmp.eq.s32.totalorder %s28, 5
      %p209 = por %p207, %p208
      %p211 = scmp.ne.s32.totalorder %s194, %s210
      %p212 = scmp.eq.s32.totalorder %s28, 0
      %p213 = por %p211, %p212
      %s214 = ssub.s32 %s30, %s37
      %p215 = scmp.eq.s32.totalorder %s214, 0
      %s217 = sadd.s32 %s216, 1
      %s218 = scalar_select %p215, %s216, %s217
      %p221 = pneg %p215
      %p222 = scmp.eq.s32.totalorder %s22, 5
      %p223 = por %p221, %p222
      %p224 = scmp.ne.s32.totalorder %s216, %s219
      %p225 = scmp.eq.s32.totalorder %s22, 0
      %p226 = por %p224, %p225
      %p227 = scmp.ne.s32.totalorder %s216, %s219
      %p228 = scmp.eq.s32.totalorder %s27, 5
      %p229 = por %p227, %p228
      %p230 = scmp.ne.s32.totalorder %s219, %s220
      %p231 = scmp.eq.s32.totalorder %s27, 0
      %p232 = por %p230, %p231
      %p233 = scmp.ne.s32.totalorder %s219, %s220
      %p234 = scmp.eq.s32.totalorder %s28, 5
      %p235 = por %p233, %p234
      %p237 = scmp.ne.s32.totalorder %s220, %s236
      %p238 = scmp.eq.s32.totalorder %s28, 0
      %p239 = por %p237, %p238
      %s240 = ssub.s32 %s30, %s37
      %p241 = scmp.eq.s32.totalorder %s240, 0
      %s243 = sadd.s32 %s242, 1
      %s244 = scalar_select %p241, %s242, %s243
      %p247 = pneg %p241
      %p248 = scmp.eq.s32.totalorder %s22, 5
      %p249 = por %p247, %p248
      %p250 = scmp.ne.s32.totalorder %s242, %s245
      %p251 = scmp.eq.s32.totalorder %s22, 0
      %p252 = por %p250, %p251
      %p253 = scmp.ne.s32.totalorder %s242, %s245
      %p254 = scmp.eq.s32.totalorder %s27, 5
      %p255 = por %p253, %p254
      %p256 = scmp.ne.s32.totalorder %s245, %s246
      %p257 = scmp.eq.s32.totalorder %s27, 0
      %p258 = por %p256, %p257
      %p259 = scmp.ne.s32.totalorder %s245, %s246
      %p260 = scmp.eq.s32.totalorder %s28, 5
      %p261 = por %p259, %p260
      %p263 = scmp.ne.s32.totalorder %s246, %s262
      %p264 = scmp.eq.s32.totalorder %s28, 0
      %p265 = por %p263, %p264
      %s266 = ssub.s32 %s30, %s37
      %p267 = scmp.eq.s32.totalorder %s266, 0
      %s269 = sadd.s32 %s268, 1
      %s270 = scalar_select %p267, %s268, %s269
      %p273 = pneg %p267
      %p274 = scmp.eq.s32.totalorder %s22, 5
      %p275 = por %p273, %p274
      %p276 = scmp.ne.s32.totalorder %s268, %s271
      %p277 = scmp.eq.s32.totalorder %s22, 0
      %p278 = por %p276, %p277
      %p279 = scmp.ne.s32.totalorder %s268, %s271
      %p280 = scmp.eq.s32.totalorder %s27, 5
      %p281 = por %p279, %p280
      %p282 = scmp.ne.s32.totalorder %s271, %s272
      %p283 = scmp.eq.s32.totalorder %s27, 0
      %p284 = por %p282, %p283
      %p285 = scmp.ne.s32.totalorder %s271, %s272
      %p286 = scmp.eq.s32.totalorder %s28, 5
      %p287 = por %p285, %p286
      %p289 = scmp.ne.s32.totalorder %s272, %s288
      %p290 = scmp.eq.s32.totalorder %s28, 0
      %p291 = por %p289, %p290
      %s292 = ssub.s32 %s30, %s37
      %p293 = scmp.eq.s32.totalorder %s292, 0
      %s295 = sadd.s32 %s294, 1
      %s296 = scalar_select %p293, %s294, %s295
      %p299 = pneg %p293
      %p300 = scmp.eq.s32.totalorder %s22, 5
      %p301 = por %p299, %p300
      %p302 = scmp.ne.s32.totalorder %s294, %s297
      %p303 = scmp.eq.s32.totalorder %s22, 0
      %p304 = por %p302, %p303
      %p305 = scmp.ne.s32.totalorder %s294, %s297
      %p306 = scmp.eq.s32.totalorder %s27, 5
      %p307 = por %p305, %p306
      %p308 = scmp.ne.s32.totalorder %s297, %s298
      %p309 = scmp.eq.s32.totalorder %s27, 0
      %p310 = por %p308, %p309
      %p311 = scmp.ne.s32.totalorder %s297, %s298
      %p312 = scmp.eq.s32.totalorder %s28, 5
      %p313 = por %p311, %p312
      %p315 = scmp.ne.s32.totalorder %s298, %s314
      %p316 = scmp.eq.s32.totalorder %s28, 0
      %p317 = por %p315, %p316
      %s318 = ssub.s32 %s30, %s37
      %p319 = scmp.eq.s32.totalorder %s318, 0
      %s321 = sadd.s32 %s320, 1
      %s322 = scalar_select %p319, %s320, %s321
      %p325 = pneg %p319
      %p326 = scmp.eq.s32.totalorder %s22, 5
      %p327 = por %p325, %p326
      %p328 = scmp.ne.s32.totalorder %s320, %s323
      %p329 = scmp.eq.s32.totalorder %s22, 0
      %p330 = por %p328, %p329
      %p331 = scmp.ne.s32.totalorder %s320, %s323
      %p332 = scmp.eq.s32.totalorder %s27, 5
      %p333 = por %p331, %p332
      %p334 = scmp.ne.s32.totalorder %s323, %s324
      %p335 = scmp.eq.s32.totalorder %s27, 0
      %p336 = por %p334, %p335
      %p337 = scmp.ne.s32.totalorder %s323, %s324
      %p338 = scmp.eq.s32.totalorder %s28, 5
      %p339 = por %p337, %p338
      %p341 = scmp.ne.s32.totalorder %s324, %s340
      %p342 = scmp.eq.s32.totalorder %s28, 0
      %p343 = por %p341, %p342
      %s345 = sadd.s32 %s344, 1
      %p348 = scmp.eq.s32.totalorder %s22, 5
      %p349 = scmp.ne.s32.totalorder %s344, %s346
      %p350 = scmp.eq.s32.totalorder %s22, 0
      %p351 = por %p349, %p350
      %p352 = scmp.ne.s32.totalorder %s344, %s346
      %p353 = scmp.eq.s32.totalorder %s27, 5
      %p354 = por %p352, %p353
      %p355 = scmp.ne.s32.totalorder %s346, %s347
      %p356 = scmp.eq.s32.totalorder %s27, 0
      %p357 = por %p355, %p356
      %p358 = scmp.ne.s32.totalorder %s346, %s347
      %p359 = scmp.eq.s32.totalorder %s28, 5
      %p360 = por %p358, %p359
      %p362 = scmp.ne.s32.totalorder %s347, %s361
      %p363 = scmp.eq.s32.totalorder %s28, 0
      %p364 = por %p362, %p363
      %s365 = ssub.s32 %s29, %s41
      %p366 = scmp.eq.s32.totalorder %s365, 0
      %s368 = sadd.s32 %s367, 1
      %s369 = scalar_select %p366, %s367, %s368
      %p372 = pneg %p366
      %p373 = scmp.eq.s32.totalorder %s22, 5
      %p374 = por %p372, %p373
      %p375 = scmp.ne.s32.totalorder %s367, %s370
      %p376 = scmp.eq.s32.totalorder %s22, 0
      %p377 = por %p375, %p376
      %p378 = scmp.ne.s32.totalorder %s367, %s370
      %p379 = scmp.eq.s32.totalorder %s27, 5
      %p380 = por %p378, %p379
      %p381 = scmp.ne.s32.totalorder %s370, %s371
      %p382 = scmp.eq.s32.totalorder %s27, 0
      %p383 = por %p381, %p382
      %p384 = scmp.ne.s32.totalorder %s370, %s371
      %p385 = scmp.eq.s32.totalorder %s28, 5
      %p386 = por %p384, %p385
      %p388 = scmp.ne.s32.totalorder %s371, %s387
      %p389 = scmp.eq.s32.totalorder %s28, 0
      %p390 = por %p388, %p389
      %p391 = scmp.le.s32.totalorder 1, %s22
      %p392 = scmp.lt.s32.totalorder %s22, 7
      %p393 = pnand %p391, %p392
      %p394 = pneg %p393
      // Predicated region
      $region9: #{dino_extract_forward.1} parent=5 // pred_check
        _
      $region10: #{dino_extract_forward.1} parent=5 // pred_check_branch
        %396 = sbr.rel (%p393) target = $region12
      $region11: #{dino_extract_forward.1} parent=5 // pred_region
        %s397 = ssub.s32 %s22, 1
        // Predicated region
        $region13: #{dino_extract_forward.1} parent=11 // pred_check
          %p398 = pneg %p81
        $region14: #{dino_extract_forward.1} parent=11 // pred_check_branch
          %400 = sbr.rel (%p398) target = $region16
        $region15: #{dino_extract_forward.1} parent=11 // pred_region
          _
        $region16: #{dino_extract_forward.1} parent=11 // pred_fallthru
          _
        // Predicated region
        $region17: #{dino_extract_forward.1} parent=11 // pred_check
          %p401 = pneg %p102
        $region18: #{dino_extract_forward.1} parent=11 // pred_check_branch
          %403 = sbr.rel (%p401) target = $region20
        $region19: #{dino_extract_forward.1} parent=11 // pred_region
          _
        $region20: #{dino_extract_forward.1} parent=11 // pred_fallthru
          _
        // Predicated region
        $region21: #{dino_extract_forward.1} parent=11 // pred_check
          %p404 = pneg %p357
        $region22: #{dino_extract_forward.1} parent=11 // pred_check_branch
          %406 = sbr.rel (%p404) target = $region24
        $region23: #{dino_extract_forward.1} parent=11 // pred_region
          _
        $region24: #{dino_extract_forward.1} parent=11 // pred_fallthru
          _
      $region12: #{dino_extract_forward.1} parent=5 // pred_fallthru
        _
      %p407 = scmp.lt.s32.totalorder %s22, 6
      // Predicated region
      $region25: #{dino_extract_forward.1} parent=5 // pred_check
        %p408 = pneg %p407
      $region26: #{dino_extract_forward.1} parent=5 // pred_check_branch
        %410 = sbr.rel (%p408) target = $region28
      $region27: #{dino_extract_forward.1} parent=5 // pred_region
        // Predicated region
        $region29: #{dino_extract_forward.1} parent=27 // pred_check
          %p411 = pneg %p54
        $region30: #{dino_extract_forward.1} parent=27 // pred_check_branch
          %413 = sbr.rel (%p411) target = $region32
        $region31: #{dino_extract_forward.1} parent=27 // pred_region
          %p414 = scmp.lt.s32.totalorder %s29, 1
          %s415 = scalar_select %p414, %s29, 1
          %s416 = smul.addr %s415, 15
          %s417 = smul.addr %s416, 8
          %s418 = scalar_lea.vmem %s0, %s417
        $region32: #{dino_extract_forward.1} parent=27 // pred_fallthru
          _
        // Predicated region
        $region33: #{dino_extract_forward.1} parent=27 // pred_check
          %p419 = pneg %p122
        $region34: #{dino_extract_forward.1} parent=27 // pred_check_branch
          %421 = sbr.rel (%p419) target = $region36
        $region35: #{dino_extract_forward.1} parent=27 // pred_region
          %p422 = scmp.lt.s32.totalorder %s30, 2
          %s423 = scalar_select %p422, %s30, 2
          %s424 = smul.addr %s423, 4
          %s425 = scalar_lea.vmem %s3, %s424
        $region36: #{dino_extract_forward.1} parent=27 // pred_fallthru
          _
        // Predicated region
        $region37: #{dino_extract_forward.1} parent=27 // pred_check
          %p426 = pneg %p148
        $region38: #{dino_extract_forward.1} parent=27 // pred_check_branch
          %428 = sbr.rel (%p426) target = $region40
        $region39: #{dino_extract_forward.1} parent=27 // pred_region
          %p429 = scmp.lt.s32.totalorder %s30, 2
          %s430 = scalar_select %p429, %s30, 2
          %s431 = smul.addr %s430, 48
          %s432 = smul.addr %s431, 4
          %s433 = scalar_lea.vmem %s4, %s432
        $region40: #{dino_extract_forward.1} parent=27 // pred_fallthru
          _
        // Predicated region
        $region41: #{dino_extract_forward.1} parent=27 // pred_check
          %p434 = pneg %p174
        $region42: #{dino_extract_forward.1} parent=27 // pred_check_branch
          %436 = sbr.rel (%p434) target = $region44
        $region43: #{dino_extract_forward.1} parent=27 // pred_region
          %p437 = scmp.lt.s32.totalorder %s30, 2
          %s438 = scalar_select %p437, %s30, 2
          %s439 = smul.addr %s438, 3
          %s440 = scalar_lea.vmem %s5, %s439
        $region44: #{dino_extract_forward.1} parent=27 // pred_fallthru
          _
        // Predicated region
        $region45: #{dino_extract_forward.1} parent=27 // pred_check
          %p441 = pneg %p200
        $region46: #{dino_extract_forward.1} parent=27 // pred_check_branch
          %443 = sbr.rel (%p441) target = $region48
        $region47: #{dino_extract_forward.1} parent=27 // pred_region
          %p444 = scmp.lt.s32.totalorder %s30, 2
          %s445 = scalar_select %p444, %s30, 2
          %s446 = smul.addr %s445, 16
          %s447 = smul.addr %s446, 4
          %s448 = scalar_lea.vmem %s6, %s447
        $region48: #{dino_extract_forward.1} parent=27 // pred_fallthru
          _
        // Predicated region
        $region49: #{dino_extract_forward.1} parent=27 // pred_check
          %p449 = pneg %p226
        $region50: #{dino_extract_forward.1} parent=27 // pred_check_branch
          %451 = sbr.rel (%p449) target = $region52
        $region51: #{dino_extract_forward.1} parent=27 // pred_region
          %p452 = scmp.lt.s32.totalorder %s30, 2
          %s453 = scalar_select %p452, %s30, 2
          %s454 = scalar_lea.vmem %s7, %s453
        $region52: #{dino_extract_forward.1} parent=27 // pred_fallthru
          _
        // Predicated region
        $region53: #{dino_extract_forward.1} parent=27 // pred_check
          %p455 = pneg %p252
        $region54: #{dino_extract_forward.1} parent=27 // pred_check_branch
          %457 = sbr.rel (%p455) target = $region56
        $region55: #{dino_extract_forward.1} parent=27 // pred_region
          %p458 = scmp.lt.s32.totalorder %s30, 2
          %s459 = scalar_select %p458, %s30, 2
          %s460 = smul.addr %s459, 64
          %s461 = smul.addr %s460, 4
          %s462 = scalar_lea.vmem %s8, %s461
        $region56: #{dino_extract_forward.1} parent=27 // pred_fallthru
          _
        // Predicated region
        $region57: #{dino_extract_forward.1} parent=27 // pred_check
          %p463 = pneg %p278
        $region58: #{dino_extract_forward.1} parent=27 // pred_check_branch
          %465 = sbr.rel (%p463) target = $region60
        $region59: #{dino_extract_forward.1} parent=27 // pred_region
          %p466 = scmp.lt.s32.totalorder %s30, 2
          %s467 = scalar_select %p466, %s30, 2
          %s468 = smul.addr %s467, 4
          %s469 = scalar_lea.vmem %s9, %s468
        $region60: #{dino_extract_forward.1} parent=27 // pred_fallthru
          _
        // Predicated region
        $region61: #{dino_extract_forward.1} parent=27 // pred_check
          %p470 = pneg %p304
        $region62: #{dino_extract_forward.1} parent=27 // pred_check_branch
          %472 = sbr.rel (%p470) target = $region64
        $region63: #{dino_extract_forward.1} parent=27 // pred_region
          %p473 = scmp.lt.s32.totalorder %s30, 2
          %s474 = scalar_select %p473, %s30, 2
          %s475 = smul.addr %s474, 64
          %s476 = smul.addr %s475, 4
          %s477 = scalar_lea.vmem %s10, %s476
        $region64: #{dino_extract_forward.1} parent=27 // pred_fallthru
          _
        // Predicated region
        $region65: #{dino_extract_forward.1} parent=27 // pred_check
          %p478 = pneg %p330
        $region66: #{dino_extract_forward.1} parent=27 // pred_check_branch
          %480 = sbr.rel (%p478) target = $region68
        $region67: #{dino_extract_forward.1} parent=27 // pred_region
          %p481 = scmp.lt.s32.totalorder %s30, 2
          %s482 = scalar_select %p481, %s30, 2
          %s483 = scalar_lea.vmem %s11, %s482
        $region68: #{dino_extract_forward.1} parent=27 // pred_fallthru
          _
      $region28: #{dino_extract_forward.1} parent=5 // pred_fallthru
        _
      %p484 = scmp.le.s32.totalorder 1, %s22
      %p485 = scmp.lt.s32.totalorder %s22, 7
      %p486 = pnand %p484, %p485
      %p487 = pneg %p486
      // Predicated region
      $region69: #{dino_extract_forward.1} parent=5 // pred_check
        _
      $region70: #{dino_extract_forward.1} parent=5 // pred_check_branch
        %489 = sbr.rel (%p486) target = $region72
      $region71: #{dino_extract_forward.1} parent=5 // pred_region
        %s490 = ssub.s32 %s22, 1
        %p491 = scmp.lt.s32.totalorder %s31, 1
        %s492 = scalar_select %p491, %s31, 1
        %s493 = smul.addr %s492, 15
        %s494 = smul.addr %s493, 8
        %s495 = scalar_lea.vmem %s0, %s494
        %p496 = pneg %p60
        %p497 = pneg %p57
        %p498 = pneg %p81
        %p499 = pneg %p78
        %p500 = pneg %p102
        %p501 = pneg %p99
        %p502 = scmp.lt.s32.totalorder %s32, 2
        %s503 = scalar_select %p502, %s32, 2
        %s504 = smul.addr %s503, 4
        %s505 = scalar_lea.vmem %s3, %s504
        %p506 = pneg %p128
        %p507 = pneg %p125
        %p508 = scmp.lt.s32.totalorder %s32, 2
        %s509 = scalar_select %p508, %s32, 2
        %s510 = smul.addr %s509, 48
        %s511 = smul.addr %s510, 4
        %s512 = scalar_lea.vmem %s4, %s511
        %p513 = pneg %p154
        %p514 = pneg %p151
        %p515 = scmp.lt.s32.totalorder %s32, 2
        %s516 = scalar_select %p515, %s32, 2
        %s517 = smul.addr %s516, 3
        %s518 = scalar_lea.vmem %s5, %s517
        %p519 = pneg %p180
        %p520 = pneg %p177
        %p521 = scmp.lt.s32.totalorder %s32, 2
        %s522 = scalar_select %p521, %s32, 2
        %s523 = smul.addr %s522, 16
        %s524 = smul.addr %s523, 4
        %s525 = scalar_lea.vmem %s6, %s524
        %p526 = pneg %p206
        %p527 = pneg %p203
        %p528 = scmp.lt.s32.totalorder %s32, 2
        %s529 = scalar_select %p528, %s32, 2
        %s530 = scalar_lea.vmem %s7, %s529
        %p531 = pneg %p232
        %p532 = pneg %p229
        %p533 = scmp.lt.s32.totalorder %s32, 2
        %s534 = scalar_select %p533, %s32, 2
        %s535 = smul.addr %s534, 64
        %s536 = smul.addr %s535, 4
        %s537 = scalar_lea.vmem %s8, %s536
        %p538 = pneg %p258
        %p539 = pneg %p255
        %p540 = scmp.lt.s32.totalorder %s32, 2
        %s541 = scalar_select %p540, %s32, 2
        %s542 = smul.addr %s541, 4
        %s543 = scalar_lea.vmem %s9, %s542
        %p544 = pneg %p284
        %p545 = pneg %p281
        %p546 = scmp.lt.s32.totalorder %s32, 2
        %s547 = scalar_select %p546, %s32, 2
        %s548 = smul.addr %s547, 64
        %s549 = smul.addr %s548, 4
        %s550 = scalar_lea.vmem %s10, %s549
        %p551 = pneg %p310
        %p552 = pneg %p307
        %p553 = scmp.lt.s32.totalorder %s32, 2
        %s554 = scalar_select %p553, %s32, 2
        %s555 = scalar_lea.vmem %s11, %s554
        %p556 = pneg %p336
        %p557 = pneg %p333
        %p558 = pneg %p357
        %p559 = pneg %p354
        %p560 = pneg %p383
        %p561 = pneg %p380
        %s562 = sand.u32 %s370, 1
        %s563 = scalar_lea.sflag [#allocation4], %s562
        %s564 = sand.u32 %s370, 1
        %s565 = scalar_lea.vmem [#allocation3], %s564
        %p566 = scmp.lt.s32.totalorder %s31, 1
        %s567 = scalar_select %p566, %s31, 1
        %s568 = smul.addr %s567, 15
        %s569 = smul.addr %s568, 8
        %s570 = scalar_lea.vmem %s0, %s569
        %p571 = scmp.lt.s32.totalorder %s32, 2
        %s572 = scalar_select %p571, %s32, 2
        %s573 = smul.addr %s572, 4
        %s574 = scalar_lea.vmem %s3, %s573
        %p575 = scmp.lt.s32.totalorder %s32, 2
        %s576 = scalar_select %p575, %s32, 2
        %s577 = smul.addr %s576, 48
        %s578 = smul.addr %s577, 4
        %s579 = scalar_lea.vmem %s4, %s578
        %p580 = scmp.lt.s32.totalorder %s32, 2
        %s581 = scalar_select %p580, %s32, 2
        %s582 = smul.addr %s581, 3
        %s583 = scalar_lea.vmem %s5, %s582
        %p584 = scmp.lt.s32.totalorder %s32, 2
        %s585 = scalar_select %p584, %s32, 2
        %s586 = smul.addr %s585, 16
        %s587 = smul.addr %s586, 4
        %s588 = scalar_lea.vmem %s6, %s587
        %p589 = scmp.lt.s32.totalorder %s32, 2
        %s590 = scalar_select %p589, %s32, 2
        %s591 = scalar_lea.vmem %s7, %s590
        %p592 = scmp.lt.s32.totalorder %s32, 2
        %s593 = scalar_select %p592, %s32, 2
        %s594 = smul.addr %s593, 64
        %s595 = smul.addr %s594, 4
        %s596 = scalar_lea.vmem %s8, %s595
        %p597 = scmp.lt.s32.totalorder %s32, 2
        %s598 = scalar_select %p597, %s32, 2
        %s599 = smul.addr %s598, 4
        %s600 = scalar_lea.vmem %s9, %s599
        %p601 = scmp.lt.s32.totalorder %s32, 2
        %s602 = scalar_select %p601, %s32, 2
        %s603 = smul.addr %s602, 64
        %s604 = smul.addr %s603, 4
        %s605 = scalar_lea.vmem %s10, %s604
        %p606 = scmp.lt.s32.totalorder %s32, 2
        %s607 = scalar_select %p606, %s32, 2
        %s608 = scalar_lea.vmem %s11, %s607
        %p610 = scmp.eq.s32.totalorder %s32, 0
        // Predicated region
        $region73: #{dino_extract_forward.1} parent=71 // pred_check
          %p611 = pneg %p610
        $region74: #{dino_extract_forward.1} parent=71 // pred_check_branch
          %613 = sbr.rel (%p611) target = $region76
        $region75: #{dino_extract_forward.1} parent=71 // pred_region
          %v614 = vld [vmem:[%s570] sm:$0xff]
          %v615 = vld [vmem:[%s570 + $0x8] sm:$0xff]
          %v616 = vld [vmem:[%s570 + $0x10] sm:$0xff]
          %v617 = vld [vmem:[%s570 + $0x18] sm:$0xff]
          %v618 = vld [vmem:[%s570 + $0x20] sm:$0xff]
          %v619 = vld [vmem:[%s570 + $0x28] sm:$0xff]
          %v620 = vld [vmem:[%s570 + $0x30] sm:$0xff]
          %v621 = vld [vmem:[%s570 + $0x38] sm:$0xff]
          %v622 = vld [vmem:[%s570 + $0x40] sm:$0xff]
          %v623 = vld [vmem:[%s570 + $0x48] sm:$0xff]
          %v624 = vld [vmem:[%s570 + $0x50] sm:$0x1]
          %v625 = vld [vmem:[%s570 + $0x58] sm:$0x1]
          %v626 = vld [vmem:[%s570 + $0x60] sm:$0x1]
          %v627 = vld [vmem:[%s570 + $0x68] sm:$0x1]
          %v628 = vld [vmem:[%s570 + $0x70] sm:$0x1]
          %v629 = vpack.c.bf16 %v619, %v614
          %v630 = vpack.c.bf16 %v620, %v615
          %v631 = vpack.c.bf16 %v621, %v616
          %v632 = vpack.c.bf16 %v622, %v617
          %v633 = vpack.c.bf16 %v623, %v618
          %v634 = vpack.c.bf16 %v624, %v624
          %v635 = vpack.c.bf16 %v625, %v625
          %v636 = vpack.c.bf16 %v626, %v626
          %v637 = vpack.c.bf16 %v627, %v627
          %v638 = vpack.c.bf16 %v628, %v628
          %v639 = vld [vmem:[%s1] sm:$0xf]
          %v640 = vld [vmem:[%s1 + $0x4] sm:$0xf]
          %v641 = vld [vmem:[%s1 + $0x8] sm:$0xf]
          %v642 = vld [vmem:[%s1 + $0xc] sm:$0xf]
          %v643 = vld [vmem:[%s1 + $0x10] sm:$0xf]
          %v644 = vld [vmem:[%s1 + $0x14] sm:$0xf]
          %v645 = vld [vmem:[%s1 + $0x18] sm:$0xf]
          %v646 = vld [vmem:[%s1 + $0x1c] sm:$0xf]
          %v647 = vld [vmem:[%s1 + $0x20] sm:$0xf]
          %v648 = vld [vmem:[%s1 + $0x24] sm:$0xf]
          %v649 = vld [vmem:[%s1 + $0x28] sm:$0xf]
          %v650 = vld [vmem:[%s1 + $0x2c] sm:$0xf]
          %v651 = vld [vmem:[%s1 + $0x30] sm:$0xf]
          %v652 = vld [vmem:[%s1 + $0x34] sm:$0xf]
          %v653 = vld [vmem:[%s1 + $0x38] sm:$0xf]
          %v654 = vld [vmem:[%s1 + $0x3c] sm:$0xf]
          %v655 = vld [vmem:[%s1 + $0x40] sm:$0xf]
          %v656 = vld [vmem:[%s1 + $0x44] sm:$0xf]
          %v657 = vld [vmem:[%s1 + $0x48] sm:$0xf]
          %v658 = vld [vmem:[%s1 + $0x4c] sm:$0xf]
          %v659 = vld [vmem:[%s1 + $0x50] sm:$0xf]
          %v660 = vld [vmem:[%s1 + $0x54] sm:$0xf]
          %v661 = vld [vmem:[%s1 + $0x58] sm:$0xf]
          %v662 = vld [vmem:[%s1 + $0x5c] sm:$0xf]
          %v663 = vld [vmem:[%s1 + $0x60] sm:$0xf]
          %v664 = vld [vmem:[%s1 + $0x64] sm:$0xf]
          %v665 = vld [vmem:[%s1 + $0x68] sm:$0xf]
          %v666 = vld [vmem:[%s1 + $0x6c] sm:$0xf]
          %v667 = vld [vmem:[%s1 + $0x70] sm:$0xf]
          %v668 = vld [vmem:[%s1 + $0x74] sm:$0xf]
          %v669 = vld [vmem:[%s1 + $0x78] sm:$0xf]
          %v670 = vld [vmem:[%s1 + $0x7c] sm:$0xf]
          %v671 = vld [vmem:[%s1 + $0x80] sm:$0xf]
          %v672 = vld [vmem:[%s1 + $0x84] sm:$0xf]
          %v673 = vld [vmem:[%s1 + $0x88] sm:$0xf]
          %v674 = vld [vmem:[%s1 + $0x8c] sm:$0xf]
          %v675 = vld [vmem:[%s1 + $0x90] sm:$0xf]
          %v676 = vld [vmem:[%s1 + $0x94] sm:$0xf]
          %v677 = vld [vmem:[%s1 + $0x98] sm:$0xf]
          %v678 = vld [vmem:[%s1 + $0x9c] sm:$0xf]
          %v679 = vld [vmem:[%s1 + $0xa0] sm:$0xf]
          %v680 = vld [vmem:[%s1 + $0xa4] sm:$0xf]
          %v681 = vld [vmem:[%s1 + $0xa8] sm:$0xf]
          %v682 = vld [vmem:[%s1 + $0xac] sm:$0xf]
          %v683 = vld [vmem:[%s1 + $0xb0] sm:$0xf]
          %v684 = vld [vmem:[%s1 + $0xb4] sm:$0xf]
          %v685 = vld [vmem:[%s1 + $0xb8] sm:$0xf]
          %v686 = vld [vmem:[%s1 + $0xbc] sm:$0xf]
          %v687 = vld [vmem:[%s1 + $0xc0] sm:$0xf]
          %v688 = vld [vmem:[%s1 + $0xc4] sm:$0xf]
          %v689 = vld [vmem:[%s1 + $0xc8] sm:$0xf]
          %v690 = vld [vmem:[%s1 + $0xcc] sm:$0xf]
          %v691 = vld [vmem:[%s1 + $0xd0] sm:$0xf]
          %v692 = vld [vmem:[%s1 + $0xd4] sm:$0xf]
          %v693 = vld [vmem:[%s1 + $0xd8] sm:$0xf]
          %v694 = vld [vmem:[%s1 + $0xdc] sm:$0xf]
          %v695 = vld [vmem:[%s1 + $0xe0] sm:$0xf]
          %v696 = vld [vmem:[%s1 + $0xe4] sm:$0xf]
          %v697 = vld [vmem:[%s1 + $0xe8] sm:$0xf]
          %v698 = vld [vmem:[%s1 + $0xec] sm:$0xf]
          %v699 = vld [vmem:[%s1 + $0xf0] sm:$0xf]
          %v700 = vld [vmem:[%s1 + $0xf4] sm:$0xf]
          %v701 = vld [vmem:[%s1 + $0xf8] sm:$0xf]
          %v702 = vld [vmem:[%s1 + $0xfc] sm:$0xf]
          %v703 = vld [vmem:[%s1 + $0x100] sm:$0xf]
          %v704 = vld [vmem:[%s1 + $0x104] sm:$0xf]
          %v705 = vld [vmem:[%s1 + $0x108] sm:$0xf]
          %v706 = vld [vmem:[%s1 + $0x10c] sm:$0xf]
          %v707 = vld [vmem:[%s1 + $0x110] sm:$0xf]
          %v708 = vld [vmem:[%s1 + $0x114] sm:$0xf]
          %v709 = vld [vmem:[%s1 + $0x118] sm:$0xf]
          %v710 = vld [vmem:[%s1 + $0x11c] sm:$0xf]
          %v711 = vld [vmem:[%s1 + $0x120] sm:$0xf]
          %v712 = vld [vmem:[%s1 + $0x124] sm:$0xf]
          %v713 = vld [vmem:[%s1 + $0x128] sm:$0xf]
          %v714 = vld [vmem:[%s1 + $0x12c] sm:$0xf]
          %v715 = vld [vmem:[%s1 + $0x130] sm:$0xf]
          %v716 = vld [vmem:[%s1 + $0x134] sm:$0xf]
          %v717 = vld [vmem:[%s1 + $0x138] sm:$0xf]
          %v718 = vld [vmem:[%s1 + $0x13c] sm:$0xf]
          %v719 = vld [vmem:[%s2] sm:$0xff]
          %v720 = vld [vmem:[%s2 + $0x8] sm:$0xff]
          %v721 = vld [vmem:[%s2 + $0x10] sm:$0x1]
          %v802 = vunpack.c.l.b16 %v639
          %v803 = vunpack.c.l.b16 %v640
          %v804 = vunpack.c.l.b16 %v641
          %v805 = vunpack.c.l.b16 %v642
          %v806 = vunpack.c.l.b16 %v643
          %v807 = vunpack.c.l.b16 %v644
          %v808 = vunpack.c.l.b16 %v645
          %v809 = vunpack.c.l.b16 %v646
          %v810 = vunpack.c.l.b16 %v647
          %v811 = vunpack.c.l.b16 %v648
          %v812 = vunpack.c.l.b16 %v649
          %v813 = vunpack.c.l.b16 %v650
          %v814 = vunpack.c.l.b16 %v651
          %v815 = vunpack.c.l.b16 %v652
          %v816 = vunpack.c.l.b16 %v653
          %v817 = vunpack.c.l.b16 %v654
          %v818 = vunpack.c.l.b16 %v655
          %v819 = vunpack.c.l.b16 %v656
          %v820 = vunpack.c.l.b16 %v657
          %v821 = vunpack.c.l.b16 %v658
          %v822 = vunpack.c.l.b16 %v659
          %v823 = vunpack.c.l.b16 %v660
          %v824 = vunpack.c.l.b16 %v661
          %v825 = vunpack.c.l.b16 %v662
          %v826 = vunpack.c.l.b16 %v663
          %v827 = vunpack.c.l.b16 %v664
          %v828 = vunpack.c.l.b16 %v665
          %v829 = vunpack.c.l.b16 %v666
          %v830 = vunpack.c.l.b16 %v667
          %v831 = vunpack.c.l.b16 %v668
          %v832 = vunpack.c.l.b16 %v669
          %v833 = vunpack.c.l.b16 %v670
          %v834 = vunpack.c.l.b16 %v671
          %v835 = vunpack.c.l.b16 %v672
          %v836 = vunpack.c.l.b16 %v673
          %v837 = vunpack.c.l.b16 %v674
          %v838 = vunpack.c.l.b16 %v675
          %v839 = vunpack.c.l.b16 %v676
          %v840 = vunpack.c.l.b16 %v677
          %v841 = vunpack.c.l.b16 %v678
          %v842 = vunpack.c.l.b16 %v679
          %v843 = vunpack.c.l.b16 %v680
          %v844 = vunpack.c.l.b16 %v681
          %v845 = vunpack.c.l.b16 %v682
          %v846 = vunpack.c.l.b16 %v683
          %v847 = vunpack.c.l.b16 %v684
          %v848 = vunpack.c.l.b16 %v685
          %v849 = vunpack.c.l.b16 %v686
          %v850 = vunpack.c.l.b16 %v687
          %v851 = vunpack.c.l.b16 %v688
          %v852 = vunpack.c.l.b16 %v689
          %v853 = vunpack.c.l.b16 %v690
          %v854 = vunpack.c.l.b16 %v691
          %v855 = vunpack.c.l.b16 %v692
          %v856 = vunpack.c.l.b16 %v693
          %v857 = vunpack.c.l.b16 %v694
          %v858 = vunpack.c.l.b16 %v695
          %v859 = vunpack.c.l.b16 %v696
          %v860 = vunpack.c.l.b16 %v697
          %v861 = vunpack.c.l.b16 %v698
          %v862 = vunpack.c.l.b16 %v699
          %v863 = vunpack.c.l.b16 %v700
          %v864 = vunpack.c.l.b16 %v701
          %v865 = vunpack.c.l.b16 %v702
          %v866 = vunpack.c.l.b16 %v703
          %v867 = vunpack.c.l.b16 %v704
          %v868 = vunpack.c.l.b16 %v705
          %v869 = vunpack.c.l.b16 %v706
          %v870 = vunpack.c.l.b16 %v707
          %v871 = vunpack.c.l.b16 %v708
          %v872 = vunpack.c.l.b16 %v709
          %v873 = vunpack.c.l.b16 %v710
          %v874 = vunpack.c.l.b16 %v711
          %v875 = vunpack.c.l.b16 %v712
          %v876 = vunpack.c.l.b16 %v713
          %v877 = vunpack.c.l.b16 %v714
          %v878 = vunpack.c.l.b16 %v715
          %v879 = vunpack.c.l.b16 %v716
          %v880 = vunpack.c.l.b16 %v717
          %v881 = vunpack.c.l.b16 %v718
          %v882 = vpack.c.b16 %v803, %v802
          %v883 = vpack.c.b16 %v805, %v804
          %v884 = vpack.c.b16 %v807, %v806
          %v885 = vpack.c.b16 %v809, %v808
          %v886 = vpack.c.b16 %v811, %v810
          %v887 = vpack.c.b16 %v813, %v812
          %v888 = vpack.c.b16 %v815, %v814
          %v889 = vpack.c.b16 %v817, %v816
          %v890 = vpack.c.b16 %v819, %v818
          %v891 = vpack.c.b16 %v821, %v820
          %v892 = vpack.c.b16 %v823, %v822
          %v893 = vpack.c.b16 %v825, %v824
          %v894 = vpack.c.b16 %v827, %v826
          %v895 = vpack.c.b16 %v829, %v828
          %v896 = vpack.c.b16 %v831, %v830
          %v897 = vpack.c.b16 %v833, %v832
          %v898 = vpack.c.b16 %v835, %v834
          %v899 = vpack.c.b16 %v837, %v836
          %v900 = vpack.c.b16 %v839, %v838
          %v901 = vpack.c.b16 %v841, %v840
          %v902 = vpack.c.b16 %v843, %v842
          %v903 = vpack.c.b16 %v845, %v844
          %v904 = vpack.c.b16 %v847, %v846
          %v905 = vpack.c.b16 %v849, %v848
          %v906 = vpack.c.b16 %v851, %v850
          %v907 = vpack.c.b16 %v853, %v852
          %v908 = vpack.c.b16 %v855, %v854
          %v909 = vpack.c.b16 %v857, %v856
          %v910 = vpack.c.b16 %v859, %v858
          %v911 = vpack.c.b16 %v861, %v860
          %v912 = vpack.c.b16 %v863, %v862
          %v913 = vpack.c.b16 %v865, %v864
          %v914 = vpack.c.b16 %v867, %v866
          %v915 = vpack.c.b16 %v869, %v868
          %v916 = vpack.c.b16 %v871, %v870
          %v917 = vpack.c.b16 %v873, %v872
          %v918 = vpack.c.b16 %v875, %v874
          %v919 = vpack.c.b16 %v877, %v876
          %v920 = vpack.c.b16 %v879, %v878
          %v921 = vpack.c.b16 %v881, %v880
          %962 = vmatprep.subr.bf16.mxu0 0
          %963 = vmatpush1.bf16.msra.mxu0 %v882
          %964 = vmatprep.subr.bf16.mxu0 0
          %965 = vmatpush1.bf16.msra.mxu0 %v883
          %966 = vmatprep.subr.bf16.mxu0 0
          %967 = vmatpush1.bf16.msra.mxu0 %v884
          %968 = vmatprep.subr.bf16.mxu0 0
          %969 = vmatpush1.bf16.msra.mxu0 %v885
          %970 = vmatprep.subr.bf16.mxu0 0
          %971 = vmatpush1.bf16.msra.mxu0 %v886
          %972 = vmatprep.subr.bf16.mxu0 0
          %973 = vmatpush1.bf16.msra.mxu0 %v887
          %974 = vmatprep.subr.bf16.mxu0 0
          %975 = vmatpush1.bf16.msra.mxu0 %v888
          %976 = vmatprep.subr.bf16.mxu0 0
          %977 = vmatpush1.bf16.msra.mxu0 %v889
          %978 = vmatprep.subr.bf16.mxu0 0
          %979 = vmatpush1.bf16.msra.mxu0 %v890
          %980 = vmatprep.subr.bf16.mxu0 0
          %981 = vmatpush1.bf16.msra.mxu0 %v891
          %982 = vmatprep.subr.bf16.mxu0 0
          %983 = vmatpush1.bf16.msra.mxu0 %v892
          %984 = vmatprep.subr.bf16.mxu0 0
          %985 = vmatpush1.bf16.msra.mxu0 %v893
          %986 = vmatprep.subr.bf16.mxu0 0
          %987 = vmatpush1.bf16.msra.mxu0 %v894
          %988 = vmatprep.subr.bf16.mxu0 0
          %989 = vmatpush1.bf16.msra.mxu0 %v895
          %990 = vmatprep.subr.bf16.mxu0 0
          %991 = vmatpush1.bf16.msra.mxu0 %v896
          %992 = vmatprep.subr.bf16.mxu0 0
          %993 = vmatpush1.bf16.msra.mxu0 %v897
          %994 = vmatprep.mubr.bf16.mxu0 %v630
          %995 = vmatmul.mubr.bf16.gmra.mrb[0].mxu0 %v629
          %v996 = vpop.f32.mrb[0].mxu0
          %v997 = vadd.f32 %v719, %v996
          %v998 = vpop.f32.mrb[0].mxu0
          %v999 = vpop.f32.mrb[0].mxu0
          %v1000 = vadd.f32 %v720, %v999
          %v1001 = vpop.f32.mrb[0].mxu0
          %1002 = vmatprep.mubr.bf16.mxu0 %v635
          %1003 = vmatmul.mubr.bf16.gmra.mrb[0].mxu0 %v634
          %v1004 = vpop.f32.mrb[0].mxu0
          %v1005 = vadd.f32 %v721, %v1004
          %v1006 = vpop.f32.mrb[0].mxu0
          %v1007 = vpop.f32.mrb[0].mxu0
          %v1008 = vpop.f32.mrb[0].mxu0
          %1009 = vdwg.mxu0
          %1010 = vmatprep.subr.bf16.mxu0 0
          %1011 = vmatpush1.bf16.msra.mxu0 %v898
          %1012 = vmatprep.subr.bf16.mxu0 0
          %1013 = vmatpush1.bf16.msra.mxu0 %v899
          %1014 = vmatprep.subr.bf16.mxu0 0
          %1015 = vmatpush1.bf16.msra.mxu0 %v900
          %1016 = vmatprep.subr.bf16.mxu0 0
          %1017 = vmatpush1.bf16.msra.mxu0 %v901
          %1018 = vmatprep.subr.bf16.mxu0 0
          %1019 = vmatpush1.bf16.msra.mxu0 %v902
          %1020 = vmatprep.subr.bf16.mxu0 0
          %1021 = vmatpush1.bf16.msra.mxu0 %v903
          %1022 = vmatprep.subr.bf16.mxu0 0
          %1023 = vmatpush1.bf16.msra.mxu0 %v904
          %1024 = vmatprep.subr.bf16.mxu0 0
          %1025 = vmatpush1.bf16.msra.mxu0 %v905
          %1026 = vmatprep.subr.bf16.mxu0 0
          %1027 = vmatpush1.bf16.msra.mxu0 %v906
          %1028 = vmatprep.subr.bf16.mxu0 0
          %1029 = vmatpush1.bf16.msra.mxu0 %v907
          %1030 = vmatprep.subr.bf16.mxu0 0
          %1031 = vmatpush1.bf16.msra.mxu0 %v908
          %1032 = vmatprep.subr.bf16.mxu0 0
          %1033 = vmatpush1.bf16.msra.mxu0 %v909
          %1034 = vmatprep.subr.bf16.mxu0 0
          %1035 = vmatpush1.bf16.msra.mxu0 %v910
          %1036 = vmatprep.subr.bf16.mxu0 0
          %1037 = vmatpush1.bf16.msra.mxu0 %v911
          %1038 = vmatprep.subr.bf16.mxu0 0
          %1039 = vmatpush1.bf16.msra.mxu0 %v912
          %1040 = vmatprep.subr.bf16.mxu0 0
          %1041 = vmatpush1.bf16.msra.mxu0 %v913
          %1042 = vmatprep.mubr.bf16.mxu0 %v632
          %1043 = vmatmul.mubr.bf16.gmra.mrb[0].mxu0 %v631
          %v1044 = vpop.f32.mrb[0].mxu0
          %v1045 = vadd.f32 %v997, %v1044
          %v1046 = vpop.f32.mrb[0].mxu0
          %v1047 = vpop.f32.mrb[0].mxu0
          %v1048 = vadd.f32 %v1000, %v1047
          %v1049 = vpop.f32.mrb[0].mxu0
          %1050 = vmatprep.mubr.bf16.mxu0 %v637
          %1051 = vmatmul.mubr.bf16.gmra.mrb[0].mxu0 %v636
          %v1052 = vpop.f32.mrb[0].mxu0
          %v1053 = vadd.f32 %v1005, %v1052
          %v1054 = vpop.f32.mrb[0].mxu0
          %v1055 = vpop.f32.mrb[0].mxu0
          %v1056 = vpop.f32.mrb[0].mxu0
          %1057 = vdwg.mxu0
          %1058 = vmatprep.subr.bf16.mxu0 0
          %1059 = vmatpush1.bf16.msra.mxu0 %v914
          %1060 = vmatprep.subr.bf16.mxu0 0
          %1061 = vmatpush1.bf16.msra.mxu0 %v915
          %1062 = vmatprep.subr.bf16.mxu0 0
          %1063 = vmatpush1.bf16.msra.mxu0 %v916
          %1064 = vmatprep.subr.bf16.mxu0 0
          %1065 = vmatpush1.bf16.msra.mxu0 %v917
          %1066 = vmatprep.subr.bf16.mxu0 0
          %1067 = vmatpush1.bf16.msra.mxu0 %v918
          %1068 = vmatprep.subr.bf16.mxu0 0
          %1069 = vmatpush1.bf16.msra.mxu0 %v919
          %1070 = vmatprep.subr.bf16.mxu0 0
          %1071 = vmatpush1.bf16.msra.mxu0 %v920
          %1072 = vmatprep.subr.bf16.mxu0 0
          %1073 = vmatpush1.bf16.msra.mxu0 %v921
          %1074 = vmatprep.subr.bf16.mxu0 0
          %1075 = vmatpush1.bf16.msra.mxu0 0
          %1076 = vmatprep.subr.bf16.mxu0 0
          %1077 = vmatpush1.bf16.msra.mxu0 0
          %1078 = vmatprep.subr.bf16.mxu0 0
          %1079 = vmatpush1.bf16.msra.mxu0 0
          %1080 = vmatprep.subr.bf16.mxu0 0
          %1081 = vmatpush1.bf16.msra.mxu0 0
          %1082 = vmatprep.subr.bf16.mxu0 0
          %1083 = vmatpush1.bf16.msra.mxu0 0
          %1084 = vmatprep.subr.bf16.mxu0 0
          %1085 = vmatpush1.bf16.msra.mxu0 0
          %1086 = vmatprep.subr.bf16.mxu0 0
          %1087 = vmatpush1.bf16.msra.mxu0 0
          %1088 = vmatprep.subr.bf16.mxu0 0
          %1089 = vmatpush1.bf16.msra.mxu0 0
          %1090 = vmatprep.mubr.bf16.mxu0 0
          %1091 = vmatmul.mubr.bf16.gmra.mrb[0].mxu0 %v633
          %v1092 = vpop.f32.mrb[0].mxu0
          %v1093 = vadd.f32 %v1045, %v1092
          %v1094 = vpop.f32.mrb[0].mxu0
          %v1095 = vpop.f32.mrb[0].mxu0
          %v1096 = vadd.f32 %v1048, %v1095
          %v1097 = vpop.f32.mrb[0].mxu0
          %1098 = vmatprep.mubr.bf16.mxu0 0
          %1099 = vmatmul.mubr.bf16.gmra.mrb[0].mxu0 %v638
          %v1100 = vpop.f32.mrb[0].mxu0
          %v1101 = vadd.f32 %v1053, %v1100
          %v1102 = vpop.f32.mrb[0].mxu0
          %v1103 = vpop.f32.mrb[0].mxu0
          %v1104 = vpop.f32.mrb[0].mxu0
          %1105 = vdwg.mxu0
          %1106 = vst [vmem:[#allocation2] sm:$0xff] %v1093
          %1107 = vst [vmem:[#allocation2 + $0x8] sm:$0xff] %v1096
          %1108 = vst [vmem:[#allocation2 + $0x10] sm:$0x1] %v1101
        $region76: #{dino_extract_forward.1} parent=71 // pred_fallthru
          _
        %v1109 = vld [vmem:[#allocation2] sm:$0xff]
        %v1110 = vld [vmem:[#allocation2 + $0x8] sm:$0xff]
        %v1111 = vld [vmem:[#allocation2 + $0x10] sm:$0x1]
        %v1112 = vld [vmem:[%s574] sm:$0xf]
        %1113 = vadd.xlane.f32.xlu0 %v1109
        %v1114 = vpop.xlane.xlu0 %1113
        %1115 = vadd.xlane.f32.xlu0 %v1110
        %v1116 = vpop.xlane.xlu0 %1115
        %vm1117 = vcmask 1040384
        %v1118 = vsel %vm1117, %v1111, 0.0
        %1119 = vadd.xlane.f32.xlu0 %v1118
        %v1120 = vpop.xlane.xlu0 %1119
        %v1121 = vrcp.pop 128.0
        %v1122 = vmul.f32 %v1114, %v1121
        %v1123 = vmul.f32 %v1116, %v1121
        %v1124 = vmul.f32 %v1120, %v1121
        %v1125 = vmul.f32 %v1109, %v1109
        %v1126 = vmul.f32 %v1110, %v1110
        %v1127 = vmul.f32 %v1111, %v1111
        %1128 = vadd.xlane.f32.xlu0 %v1125
        %v1129 = vpop.xlane.xlu0 %1128
        %1130 = vadd.xlane.f32.xlu0 %v1126
        %v1131 = vpop.xlane.xlu0 %1130
        %v1132 = vsel %vm1117, %v1127, 0.0
        %1133 = vadd.xlane.f32.xlu0 %v1132
        %v1134 = vpop.xlane.xlu0 %1133
        %v1135 = vmul.f32 %v1129, %v1121
        %v1136 = vmul.f32 %v1131, %v1121
        %v1137 = vmul.f32 %v1134, %v1121
        %v1138 = vmul.f32 %v1122, %v1122
        %v1139 = vmul.f32 %v1123, %v1123
        %v1140 = vmul.f32 %v1124, %v1124
        %v1141 = vsub.f32 %v1135, %v1138
        %v1142 = vsub.f32 %v1136, %v1139
        %v1143 = vsub.f32 %v1137, %v1140
        %v1144 = vsub.f32 %v1109, %v1122
        %v1145 = vsub.f32 %v1110, %v1123
        %v1146 = vsub.f32 %v1111, %v1124
        %v1147 = vadd.f32 %v1141, 1e-06
        %v1148 = vadd.f32 %v1142, 1e-06
        %v1149 = vadd.f32 %v1143, 1e-06
        %v1150 = vrsqrt.pop %v1147
        %v1151 = vrsqrt.pop %v1148
        %v1152 = vrsqrt.pop %v1149
        %v1153 = vmul.f32 %v1144, %v1150
        %v1154 = vmul.f32 %v1145, %v1151
        %v1155 = vmul.f32 %v1146, %v1152
        %v1156 = vlaneseq
        %v1157 = vshrl.u32 %v1156, 7
        %v1158 = vsub.s32 0, %v1157
        %v1159 = vrot.slane %v1112, %v1158
        %v1160 = vmul.f32 %v1153, %v1159
        %v1161 = vmul.f32 %v1154, %v1159
        %v1162 = vmul.f32 %v1155, %v1159
        %v1163 = vlaneseq
        %v1164 = vshrl.u32 %v1163, 7
        %v1165 = vsub.s32 1, %v1164
        %v1166 = vrot.slane %v1112, %v1165
        %v1167 = vadd.f32 %v1160, %v1166
        %v1168 = vadd.f32 %v1161, %v1166
        %v1169 = vadd.f32 %v1162, %v1166
        %v1170 = vpack.c.bf16 %v1168, %v1167
        %v1171 = vpack.c.bf16 %v1169, %v1169
        %v1172 = vld [vmem:[%s579] sm:$0xff]
        %v1173 = vld [vmem:[%s579 + $0x8] sm:$0xf]
        %v1174 = vld [vmem:[%s579 + $0xc] sm:$0xff]
        %v1175 = vld [vmem:[%s579 + $0x14] sm:$0xf]
        %v1176 = vld [vmem:[%s579 + $0x18] sm:$0xff]
        %v1177 = vld [vmem:[%s579 + $0x20] sm:$0xf]
        %v1178 = vld [vmem:[%s579 + $0x24] sm:$0xff]
        %v1179 = vld [vmem:[%s579 + $0x2c] sm:$0xf]
        %v1180 = vld [vmem:[%s579 + $0x30] sm:$0xff]
        %v1181 = vld [vmem:[%s579 + $0x38] sm:$0xf]
        %v1182 = vld [vmem:[%s579 + $0x3c] sm:$0xff]
        %v1183 = vld [vmem:[%s579 + $0x44] sm:$0xf]
        %v1184 = vld [vmem:[%s579 + $0x48] sm:$0xff]
        %v1185 = vld [vmem:[%s579 + $0x50] sm:$0xf]
        %v1186 = vld [vmem:[%s579 + $0x54] sm:$0xff]
        %v1187 = vld [vmem:[%s579 + $0x5c] sm:$0xf]
        %v1188 = vld [vmem:[%s579 + $0x60] sm:$0xff]
        %v1189 = vld [vmem:[%s579 + $0x68] sm:$0xf]
        %v1190 = vld [vmem:[%s579 + $0x6c] sm:$0xff]
        %v1191 = vld [vmem:[%s579 + $0x74] sm:$0xf]
        %v1192 = vld [vmem:[%s579 + $0x78] sm:$0xff]
        %v1193 = vld [vmem:[%s579 + $0x80] sm:$0xf]
        %v1194 = vld [vmem:[%s579 + $0x84] sm:$0xff]
        %v1195 = vld [vmem:[%s579 + $0x8c] sm:$0xf]
        %v1196 = vld [vmem:[%s579 + $0x90] sm:$0xff]
        %v1197 = vld [vmem:[%s579 + $0x98] sm:$0xf]
        %v1198 = vld [vmem:[%s579 + $0x9c] sm:$0xff]
        %v1199 = vld [vmem:[%s579 + $0xa4] sm:$0xf]
        %v1200 = vld [vmem:[%s579 + $0xa8] sm:$0xff]
        %v1201 = vld [vmem:[%s579 + $0xb0] sm:$0xf]
        %v1202 = vld [vmem:[%s579 + $0xb4] sm:$0xff]
        %v1203 = vld [vmem:[%s579 + $0xbc] sm:$0xf]
        %v1204 = vld [vmem:[%s583] sm:$0x7]
        %v1206 = vlaneseq
        %v1207 = vshrl.u32 %v1206, 7
        %v1208 = vsub.s32 0, %v1207
        %v1209 = vrot.slane %v1204, %v1208
        %v1210 = vlaneseq
        %v1211 = vshrl.u32 %v1210, 7
        %v1212 = vsub.s32 1, %v1211
        %v1213 = vrot.slane %v1204, %v1212
        %v1214 = vlaneseq
        %v1215 = vshrl.u32 %v1214, 7
        %v1216 = vsub.s32 2, %v1215
        %v1217 = vrot.slane %v1204, %v1216
        %v1253 = vunpack.c.l.b16 %v1172
        %v1254 = vunpack.c.h.b16 %v1172
        %v1255 = vunpack.c.l.b16 %v1173
        %v1256 = vunpack.c.l.b16 %v1174
        %v1257 = vunpack.c.h.b16 %v1174
        %v1258 = vunpack.c.l.b16 %v1175
        %v1259 = vunpack.c.l.b16 %v1176
        %v1260 = vunpack.c.h.b16 %v1176
        %v1261 = vunpack.c.l.b16 %v1177
        %v1262 = vunpack.c.l.b16 %v1178
        %v1263 = vunpack.c.h.b16 %v1178
        %v1264 = vunpack.c.l.b16 %v1179
        %v1265 = vunpack.c.l.b16 %v1180
        %v1266 = vunpack.c.h.b16 %v1180
        %v1267 = vunpack.c.l.b16 %v1181
        %v1268 = vunpack.c.l.b16 %v1182
        %v1269 = vunpack.c.h.b16 %v1182
        %v1270 = vunpack.c.l.b16 %v1183
        %v1271 = vunpack.c.l.b16 %v1184
        %v1272 = vunpack.c.h.b16 %v1184
        %v1273 = vunpack.c.l.b16 %v1185
        %v1274 = vunpack.c.l.b16 %v1186
        %v1275 = vunpack.c.h.b16 %v1186
        %v1276 = vunpack.c.l.b16 %v1187
        %v1277 = vunpack.c.l.b16 %v1188
        %v1278 = vunpack.c.h.b16 %v1188
        %v1279 = vunpack.c.l.b16 %v1189
        %v1280 = vunpack.c.l.b16 %v1190
        %v1281 = vunpack.c.h.b16 %v1190
        %v1282 = vunpack.c.l.b16 %v1191
        %v1283 = vunpack.c.l.b16 %v1192
        %v1284 = vunpack.c.h.b16 %v1192
        %v1285 = vunpack.c.l.b16 %v1193
        %v1286 = vunpack.c.l.b16 %v1194
        %v1287 = vunpack.c.h.b16 %v1194
        %v1288 = vunpack.c.l.b16 %v1195
        %v1289 = vunpack.c.l.b16 %v1196
        %v1290 = vunpack.c.h.b16 %v1196
        %v1291 = vunpack.c.l.b16 %v1197
        %v1292 = vunpack.c.l.b16 %v1198
        %v1293 = vunpack.c.h.b16 %v1198
        %v1294 = vunpack.c.l.b16 %v1199
        %v1295 = vunpack.c.l.b16 %v1200
        %v1296 = vunpack.c.h.b16 %v1200
        %v1297 = vunpack.c.l.b16 %v1201
        %v1298 = vunpack.c.l.b16 %v1202
        %v1299 = vunpack.c.h.b16 %v1202
        %v1300 = vunpack.c.l.b16 %v1203
        %v1301 = vpack.c.b16 %v1256, %v1253
        %v1302 = vpack.c.b16 %v1257, %v1254
        %v1303 = vpack.c.b16 %v1258, %v1255
        %v1304 = vpack.c.b16 %v1262, %v1259
        %v1305 = vpack.c.b16 %v1263, %v1260
        %v1306 = vpack.c.b16 %v1264, %v1261
        %v1307 = vpack.c.b16 %v1268, %v1265
        %v1308 = vpack.c.b16 %v1269, %v1266
        %v1309 = vpack.c.b16 %v1270, %v1267
        %v1310 = vpack.c.b16 %v1274, %v1271
        %v1311 = vpack.c.b16 %v1275, %v1272
        %v1312 = vpack.c.b16 %v1276, %v1273
        %v1313 = vpack.c.b16 %v1280, %v1277
        %v1314 = vpack.c.b16 %v1281, %v1278
        %v1315 = vpack.c.b16 %v1282, %v1279
        %v1316 = vpack.c.b16 %v1286, %v1283
        %v1317 = vpack.c.b16 %v1287, %v1284
        %v1318 = vpack.c.b16 %v1288, %v1285
        %v1319 = vpack.c.b16 %v1292, %v1289
        %v1320 = vpack.c.b16 %v1293, %v1290
        %v1321 = vpack.c.b16 %v1294, %v1291
        %v1322 = vpack.c.b16 %v1298, %v1295
        %v1323 = vpack.c.b16 %v1299, %v1296
        %v1324 = vpack.c.b16 %v1300, %v1297
        %1349 = vmatprep.subr.bf16.mxu0 %v1302
        %1350 = vmatpush1.bf16.msra.mxu0 %v1301
        %1351 = vmatprep.subr.bf16.mxu0 %v1305
        %1352 = vmatpush1.bf16.msra.mxu0 %v1304
        %1353 = vmatprep.subr.bf16.mxu0 %v1308
        %1354 = vmatpush1.bf16.msra.mxu0 %v1307
        %1355 = vmatprep.subr.bf16.mxu0 %v1311
        %1356 = vmatpush1.bf16.msra.mxu0 %v1310
        %1357 = vmatprep.subr.bf16.mxu0 %v1314
        %1358 = vmatpush1.bf16.msra.mxu0 %v1313
        %1359 = vmatprep.subr.bf16.mxu0 %v1317
        %1360 = vmatpush1.bf16.msra.mxu0 %v1316
        %1361 = vmatprep.subr.bf16.mxu0 %v1320
        %1362 = vmatpush1.bf16.msra.mxu0 %v1319
        %1363 = vmatprep.subr.bf16.mxu0 %v1323
        %1364 = vmatpush1.bf16.msra.mxu0 %v1322
        %1365 = vmatprep.subr.bf16.mxu0 0
        %1366 = vmatpush1.bf16.msra.mxu0 0
        %1367 = vmatprep.subr.bf16.mxu0 0
        %1368 = vmatpush1.bf16.msra.mxu0 0
        %1369 = vmatprep.subr.bf16.mxu0 0
        %1370 = vmatpush1.bf16.msra.mxu0 0
        %1371 = vmatprep.subr.bf16.mxu0 0
        %1372 = vmatpush1.bf16.msra.mxu0 0
        %1373 = vmatprep.subr.bf16.mxu0 0
        %1374 = vmatpush1.bf16.msra.mxu0 0
        %1375 = vmatprep.subr.bf16.mxu0 0
        %1376 = vmatpush1.bf16.msra.mxu0 0
        %1377 = vmatprep.subr.bf16.mxu0 0
        %1378 = vmatpush1.bf16.msra.mxu0 0
        %1379 = vmatprep.subr.bf16.mxu0 0
        %1380 = vmatpush1.bf16.msra.mxu0 0
        %1381 = vmatprep.mubr.bf16.mxu0 0
        %1382 = vmatmul.mubr.bf16.gmra.mrb[0].mxu0 %v1170
        %v1383 = vpop.f32.mrb[0].mxu0
        %v1384 = vadd.f32 %v1209, %v1383
        %v1385 = vpop.f32.mrb[0].mxu0
        %v1386 = vadd.f32 %v1213, %v1385
        %v1387 = vpop.f32.mrb[0].mxu0
        %v1388 = vadd.f32 %v1209, %v1387
        %v1389 = vpop.f32.mrb[0].mxu0
        %v1390 = vadd.f32 %v1213, %v1389
        %1391 = vmatprep.mubr.bf16.mxu0 0
        %1392 = vmatmul.mubr.bf16.gmra.mrb[0].mxu0 %v1171
        %v1393 = vpop.f32.mrb[0].mxu0
        %v1394 = vadd.f32 %v1209, %v1393
        %v1395 = vpop.f32.mrb[0].mxu0
        %v1396 = vadd.f32 %v1213, %v1395
        %v1397 = vpop.f32.mrb[0].mxu0
        %v1398 = vpop.f32.mrb[0].mxu0
        %1399 = vdwg.mxu0
        %1400 = vmatprep.subr.bf16.mxu0 0
        %1401 = vmatpush1.bf16.msra.mxu0 %v1303
        %1402 = vmatprep.subr.bf16.mxu0 0
        %1403 = vmatpush1.bf16.msra.mxu0 %v1306
        %1404 = vmatprep.subr.bf16.mxu0 0
        %1405 = vmatpush1.bf16.msra.mxu0 %v1309
        %1406 = vmatprep.subr.bf16.mxu0 0
        %1407 = vmatpush1.bf16.msra.mxu0 %v1312
        %1408 = vmatprep.subr.bf16.mxu0 0
        %1409 = vmatpush1.bf16.msra.mxu0 %v1315
        %1410 = vmatprep.subr.bf16.mxu0 0
        %1411 = vmatpush1.bf16.msra.mxu0 %v1318
        %1412 = vmatprep.subr.bf16.mxu0 0
        %1413 = vmatpush1.bf16.msra.mxu0 %v1321
        %1414 = vmatprep.subr.bf16.mxu0 0
        %1415 = vmatpush1.bf16.msra.mxu0 %v1324
        %1416 = vmatprep.subr.bf16.mxu0 0
        %1417 = vmatpush1.bf16.msra.mxu0 0
        %1418 = vmatprep.subr.bf16.mxu0 0
        %1419 = vmatpush1.bf16.msra.mxu0 0
        %1420 = vmatprep.subr.bf16.mxu0 0
        %1421 = vmatpush1.bf16.msra.mxu0 0
        %1422 = vmatprep.subr.bf16.mxu0 0
        %1423 = vmatpush1.bf16.msra.mxu0 0
        %1424 = vmatprep.subr.bf16.mxu0 0
        %1425 = vmatpush1.bf16.msra.mxu0 0
        %1426 = vmatprep.subr.bf16.mxu0 0
        %1427 = vmatpush1.bf16.msra.mxu0 0
        %1428 = vmatprep.subr.bf16.mxu0 0
        %1429 = vmatpush1.bf16.msra.mxu0 0
        %1430 = vmatprep.subr.bf16.mxu0 0
        %1431 = vmatpush1.bf16.msra.mxu0 0
        %1432 = vmatprep.mubr.bf16.mxu0 0
        %1433 = vmatmul.mubr.bf16.gmra.mrb[0].mxu0 %v1170
        %v1434 = vpop.f32.mrb[0].mxu0
        %v1435 = vadd.f32 %v1217, %v1434
        %v1436 = vpop.f32.mrb[0].mxu0
        %v1437 = vpop.f32.mrb[0].mxu0
        %v1438 = vadd.f32 %v1217, %v1437
        %v1439 = vpop.f32.mrb[0].mxu0
        %1440 = vmatprep.mubr.bf16.mxu0 0
        %1441 = vmatmul.mubr.bf16.gmra.mrb[0].mxu0 %v1171
        %v1442 = vpop.f32.mrb[0].mxu0
        %v1443 = vadd.f32 %v1217, %v1442
        %v1444 = vpop.f32.mrb[0].mxu0
        %v1445 = vpop.f32.mrb[0].mxu0
        %v1446 = vpop.f32.mrb[0].mxu0
        %1447 = vdwg.mxu0
        %v1448 = vpack.c.bf16 %v1388, %v1384
        %v1449 = vpack.c.bf16 %v1394, %v1394
        %v1450 = vpack.c.bf16 %v1390, %v1386
        %v1451 = vpack.c.bf16 %v1396, %v1396
        %v1452 = vpack.c.bf16 %v1438, %v1435
        %v1453 = vpack.c.bf16 %v1443, %v1443
        %vm1454 = vcmask 523264
        %v1456 = vsel %vm1454, %v1448, 0
        %v1459 = vsel %vm1454, %v1449, 0
        %v1462 = vsel %vm1454, %v1450, 0
        %v1465 = vsel %vm1454, %v1451, 0
        %1467 = vmatprep.subr.bf16.mxu0 0
        %1468 = vmatpush1.bf16.xpose.msra.mxu0 %v1462
        %1469 = vmatprep.subr.bf16.mxu0 0
        %1470 = vmatpush1.bf16.xpose.msra.mxu0 %v1465
        %1471 = vmatprep.subr.bf16.mxu0 0
        %1472 = vmatpush1.bf16.xpose.msra.mxu0 0
        %1473 = vmatprep.subr.bf16.mxu0 0
        %1474 = vmatpush1.bf16.xpose.msra.mxu0 0
        %1475 = vmatprep.subr.bf16.mxu0 0
        %1476 = vmatpush1.bf16.xpose.msra.mxu0 0
        %1477 = vmatprep.subr.bf16.mxu0 0
        %1478 = vmatpush1.bf16.xpose.msra.mxu0 0
        %1479 = vmatprep.subr.bf16.mxu0 0
        %1480 = vmatpush1.bf16.xpose.msra.mxu0 0
        %1481 = vmatprep.subr.bf16.mxu0 0
        %1482 = vmatpush1.bf16.xpose.msra.mxu0 0
        %1483 = vmatprep.subr.bf16.mxu0 0
        %1484 = vmatpush1.bf16.xpose.msra.mxu0 0
        %1485 = vmatprep.subr.bf16.mxu0 0
        %1486 = vmatpush1.bf16.xpose.msra.mxu0 0
        %1487 = vmatprep.subr.bf16.mxu0 0
        %1488 = vmatpush1.bf16.xpose.msra.mxu0 0
        %1489 = vmatprep.subr.bf16.mxu0 0
        %1490 = vmatpush1.bf16.xpose.msra.mxu0 0
        %1491 = vmatprep.subr.bf16.mxu0 0
        %1492 = vmatpush1.bf16.xpose.msra.mxu0 0
        %1493 = vmatprep.subr.bf16.mxu0 0
        %1494 = vmatpush1.bf16.xpose.msra.mxu0 0
        %1495 = vmatprep.subr.bf16.mxu0 0
        %1496 = vmatpush1.bf16.xpose.msra.mxu0 0
        %1497 = vmatprep.subr.bf16.mxu0 0
        %1498 = vmatpush1.bf16.xpose.msra.mxu0 0
        %1499 = vmatprep.mubr.bf16.mxu0 0
        %1500 = vmatmul.mubr.bf16.gmra.mrb[0].mxu0 %v1456
        %v1501 = vpop.f32.mrb[0].mxu0
        %v1502 = vadd.f32 0.0, %v1501
        %v1503 = vpop.f32.mrb[0].mxu0
        %v1504 = vpop.f32.mrb[0].mxu0
        %v1505 = vadd.f32 0.0, %v1504
        %v1506 = vpop.f32.mrb[0].mxu0
        %1507 = vmatprep.mubr.bf16.mxu0 0
        %1508 = vmatmul.mubr.bf16.gmra.mrb[0].mxu0 %v1459
        %v1509 = vpop.f32.mrb[0].mxu0
        %v1510 = vadd.f32 0.0, %v1509
        %v1511 = vpop.f32.mrb[0].mxu0
        %v1512 = vpop.f32.mrb[0].mxu0
        %v1513 = vpop.f32.mrb[0].mxu0
        %1514 = vdwg.mxu0
        %v1515 = vmul.f32 %v1502, 0.125
        %v1516 = vmul.f32 %v1505, 0.125
        %v1517 = vmul.f32 %v1510, 0.125
        %vm1518 = vcmask 138240
        %v1519 = vsel %vm1518, %v1515, -inf
        %1520 = vmax.xlane.f32.xlu0 %v1519
        %v1521 = vpop.xlane.xlu0 %1520
        %v1522 = vsel %vm1518, %v1516, -inf
        %1523 = vmax.xlane.f32.xlu0 %v1522
        %v1524 = vpop.xlane.xlu0 %1523
        %vm1525 = vcmask 131072
        %v1526 = vsel %vm1525, %v1517, -inf
        %1527 = vmax.xlane.f32.xlu0 %v1526
        %v1528 = vpop.xlane.xlu0 %1527
        %v1529 = vsub.f32 %v1515, %v1521
        %v1530 = vsub.f32 %v1516, %v1524
        %v1531 = vsub.f32 %v1517, %v1528
        %v1532 = vmul.f32 %v1529, 1.442695
        %v1533 = vpow.pop %v1532
        %v1534 = vmul.f32 %v1530, 1.442695
        %v1535 = vpow.pop %v1534
        %v1536 = vmul.f32 %v1531, 1.442695
        %v1537 = vpow.pop %v1536
        %v1538 = vsel %vm1518, %v1533, 0.0
        %1539 = vadd.xlane.f32.xlu0 %v1538
        %v1540 = vpop.xlane.xlu0 %1539
        %v1541 = vsel %vm1518, %v1535, 0.0
        %1542 = vadd.xlane.f32.xlu0 %v1541
        %v1543 = vpop.xlane.xlu0 %1542
        %v1544 = vsel %vm1525, %v1537, 0.0
        %1545 = vadd.xlane.f32.xlu0 %v1544
        %v1546 = vpop.xlane.xlu0 %1545
        %v1547 = vrcp.pop %v1540
        %v1548 = vrcp.pop %v1543
        %v1549 = vrcp.pop %v1546
        %v1550 = vmul.f32 %v1533, %v1547
        %v1551 = vmul.f32 %v1535, %v1548
        %v1552 = vmul.f32 %v1537, %v1549
        %v1553 = vpack.c.bf16 %v1551, %v1550
        %v1554 = vpack.c.bf16 %v1552, %v1552
        %v1556 = vsel %vm1518, %v1553, 0
        %v1559 = vsel %vm1518, %v1554, 0
        %v1561 = vsel 0, 4294967295, 65535
        %v1562 = vsel %vm1117, %v1561, 0
        %v1564 = vand.u32 %v1453, %v1562
        %1566 = vmatprep.subr.bf16.mxu0 0
        %1567 = vmatpush1.bf16.msra.mxu0 %v1452
        %1568 = vmatprep.subr.bf16.mxu0 0
        %1569 = vmatpush1.bf16.msra.mxu0 %v1564
        %1570 = vmatprep.subr.bf16.mxu0 0
        %1571 = vmatpush1.bf16.msra.mxu0 0
        %1572 = vmatprep.subr.bf16.mxu0 0
        %1573 = vmatpush1.bf16.msra.mxu0 0
        %1574 = vmatprep.subr.bf16.mxu0 0
        %1575 = vmatpush1.bf16.msra.mxu0 0
        %1576 = vmatprep.subr.bf16.mxu0 0
        %1577 = vmatpush1.bf16.msra.mxu0 0
        %1578 = vmatprep.subr.bf16.mxu0 0
        %1579 = vmatpush1.bf16.msra.mxu0 0
        %1580 = vmatprep.subr.bf16.mxu0 0
        %1581 = vmatpush1.bf16.msra.mxu0 0
        %1582 = vmatprep.subr.bf16.mxu0 0
        %1583 = vmatpush1.bf16.msra.mxu0 0
        %1584 = vmatprep.subr.bf16.mxu0 0
        %1585 = vmatpush1.bf16.msra.mxu0 0
        %1586 = vmatprep.subr.bf16.mxu0 0
        %1587 = vmatpush1.bf16.msra.mxu0 0
        %1588 = vmatprep.subr.bf16.mxu0 0
        %1589 = vmatpush1.bf16.msra.mxu0 0
        %1590 = vmatprep.subr.bf16.mxu0 0
        %1591 = vmatpush1.bf16.msra.mxu0 0
        %1592 = vmatprep.subr.bf16.mxu0 0
        %1593 = vmatpush1.bf16.msra.mxu0 0
        %1594 = vmatprep.subr.bf16.mxu0 0
        %1595 = vmatpush1.bf16.msra.mxu0 0
        %1596 = vmatprep.subr.bf16.mxu0 0
        %1597 = vmatpush1.bf16.msra.mxu0 0
        %1598 = vmatprep.mubr.bf16.mxu0 0
        %1599 = vmatmul.mubr.bf16.gmra.mrb[0].mxu0 %v1556
        %v1600 = vpop.f32.mrb[0].mxu0
        %v1601 = vadd.f32 0.0, %v1600
        %v1602 = vpop.f32.mrb[0].mxu0
        %v1603 = vpop.f32.mrb[0].mxu0
        %v1604 = vadd.f32 0.0, %v1603
        %v1605 = vpop.f32.mrb[0].mxu0
        %1606 = vmatprep.mubr.bf16.mxu0 0
        %1607 = vmatmul.mubr.bf16.gmra.mrb[0].mxu0 %v1559
        %v1608 = vpop.f32.mrb[0].mxu0
        %v1609 = vadd.f32 0.0, %v1608
        %v1610 = vpop.f32.mrb[0].mxu0
        %v1611 = vpop.f32.mrb[0].mxu0
        %v1612 = vpop.f32.mrb[0].mxu0
        %1613 = vdwg.mxu0
        %1616 = vrot.lane.b32.xlu0 %v1448, 64
        %v1617 = vpop.permute.xlu0 %1616
        %1618 = vrot.lane.b32.xlu0 %v1449, 64
        %v1619 = vpop.permute.xlu0 %1618
        %1622 = vrot.lane.b32.xlu0 %v1450, 64
        %v1623 = vpop.permute.xlu0 %1622
        %1624 = vrot.lane.b32.xlu0 %v1451, 64
        %v1625 = vpop.permute.xlu0 %1624
        %v1627 = vsel %vm1454, %v1617, 0
        %v1630 = vsel %vm1454, %v1619, 0
        %v1633 = vsel %vm1454, %v1623, 0
        %v1636 = vsel %vm1454, %v1625, 0
        %1638 = vmatprep.subr.bf16.mxu0 0
        %1639 = vmatpush1.bf16.xpose.msra.mxu0 %v1633
        %1640 = vmatprep.subr.bf16.mxu0 0
        %1641 = vmatpush1.bf16.xpose.msra.mxu0 %v1636
        %1642 = vmatprep.subr.bf16.mxu0 0
        %1643 = vmatpush1.bf16.xpose.msra.mxu0 0
        %1644 = vmatprep.subr.bf16.mxu0 0
        %1645 = vmatpush1.bf16.xpose.msra.mxu0 0
        %1646 = vmatprep.subr.bf16.mxu0 0
        %1647 = vmatpush1.bf16.xpose.msra.mxu0 0
        %1648 = vmatprep.subr.bf16.mxu0 0
        %1649 = vmatpush1.bf16.xpose.msra.mxu0 0
        %1650 = vmatprep.subr.bf16.mxu0 0
        %1651 = vmatpush1.bf16.xpose.msra.mxu0 0
        %1652 = vmatprep.subr.bf16.mxu0 0
        %1653 = vmatpush1.bf16.xpose.msra.mxu0 0
        %1654 = vmatprep.subr.bf16.mxu0 0
        %1655 = vmatpush1.bf16.xpose.msra.mxu0 0
        %1656 = vmatprep.subr.bf16.mxu0 0
        %1657 = vmatpush1.bf16.xpose.msra.mxu0 0
        %1658 = vmatprep.subr.bf16.mxu0 0
        %1659 = vmatpush1.bf16.xpose.msra.mxu0 0
        %1660 = vmatprep.subr.bf16.mxu0 0
        %1661 = vmatpush1.bf16.xpose.msra.mxu0 0
        %1662 = vmatprep.subr.bf16.mxu0 0
        %1663 = vmatpush1.bf16.xpose.msra.mxu0 0
        %1664 = vmatprep.subr.bf16.mxu0 0
        %1665 = vmatpush1.bf16.xpose.msra.mxu0 0
        %1666 = vmatprep.subr.bf16.mxu0 0
        %1667 = vmatpush1.bf16.xpose.msra.mxu0 0
        %1668 = vmatprep.subr.bf16.mxu0 0
        %1669 = vmatpush1.bf16.xpose.msra.mxu0 0
        %1670 = vmatprep.mubr.bf16.mxu0 0
        %1671 = vmatmul.mubr.bf16.gmra.mrb[0].mxu0 %v1627
        %v1672 = vpop.f32.mrb[0].mxu0
        %v1673 = vadd.f32 0.0, %v1672
        %v1674 = vpop.f32.mrb[0].mxu0
        %v1675 = vpop.f32.mrb[0].mxu0
        %v1676 = vadd.f32 0.0, %v1675
        %v1677 = vpop.f32.mrb[0].mxu0
        %1678 = vmatprep.mubr.bf16.mxu0 0
        %1679 = vmatmul.mubr.bf16.gmra.mrb[0].mxu0 %v1630
        %v1680 = vpop.f32.mrb[0].mxu0
        %v1681 = vadd.f32 0.0, %v1680
        %v1682 = vpop.f32.mrb[0].mxu0
        %v1683 = vpop.f32.mrb[0].mxu0
        %v1684 = vpop.f32.mrb[0].mxu0
        %1685 = vdwg.mxu0
        %v1686 = vmul.f32 %v1673, 0.125
        %v1687 = vmul.f32 %v1676, 0.125
        %v1688 = vmul.f32 %v1681, 0.125
        %v1689 = vsel %vm1518, %v1686, -inf
        %1690 = vmax.xlane.f32.xlu0 %v1689
        %v1691 = vpop.xlane.xlu0 %1690
        %v1692 = vsel %vm1518, %v1687, -inf
        %1693 = vmax.xlane.f32.xlu0 %v1692
        %v1694 = vpop.xlane.xlu0 %1693
        %v1695 = vsel %vm1525, %v1688, -inf
        %1696 = vmax.xlane.f32.xlu0 %v1695
        %v1697 = vpop.xlane.xlu0 %1696
        %v1698 = vsub.f32 %v1686, %v1691
        %v1699 = vsub.f32 %v1687, %v1694
        %v1700 = vsub.f32 %v1688, %v1697
        %v1701 = vmul.f32 %v1698, 1.442695
        %v1702 = vpow.pop %v1701
        %v1703 = vmul.f32 %v1699, 1.442695
        %v1704 = vpow.pop %v1703
        %v1705 = vmul.f32 %v1700, 1.442695
        %v1706 = vpow.pop %v1705
        %v1707 = vsel %vm1518, %v1702, 0.0
        %1708 = vadd.xlane.f32.xlu0 %v1707
        %v1709 = vpop.xlane.xlu0 %1708
        %v1710 = vsel %vm1518, %v1704, 0.0
        %1711 = vadd.xlane.f32.xlu0 %v1710
        %v1712 = vpop.xlane.xlu0 %1711
        %v1713 = vsel %vm1525, %v1706, 0.0
        %1714 = vadd.xlane.f32.xlu0 %v1713
        %v1715 = vpop.xlane.xlu0 %1714
        %v1716 = vrcp.pop %v1709
        %v1717 = vrcp.pop %v1712
        %v1718 = vrcp.pop %v1715
        %v1719 = vmul.f32 %v1702, %v1716
        %v1720 = vmul.f32 %v1704, %v1717
        %v1721 = vmul.f32 %v1706, %v1718
        %v1722 = vpack.c.bf16 %v1720, %v1719
        %v1723 = vpack.c.bf16 %v1721, %v1721
        %1726 = vrot.lane.b32.xlu0 %v1452, 64
        %v1727 = vpop.permute.xlu0 %1726
        %1728 = vrot.lane.b32.xlu0 %v1453, 64
        %v1729 = vpop.permute.xlu0 %1728
        %v1732 = vsel %vm1518, %v1722, 0
        %v1735 = vsel %vm1518, %v1723, 0
        %v1738 = vand.u32 %v1729, %v1562
        %1740 = vmatprep.subr.bf16.mxu0 0
        %1741 = vmatpush1.bf16.msra.mxu0 %v1727
        %1742 = vmatprep.subr.bf16.mxu0 0
        %1743 = vmatpush1.bf16.msra.mxu0 %v1738
        %1744 = vmatprep.subr.bf16.mxu0 0
        %1745 = vmatpush1.bf16.msra.mxu0 0
        %1746 = vmatprep.subr.bf16.mxu0 0
        %1747 = vmatpush1.bf16.msra.mxu0 0
        %1748 = vmatprep.subr.bf16.mxu0 0
        %1749 = vmatpush1.bf16.msra.mxu0 0
        %1750 = vmatprep.subr.bf16.mxu0 0
        %1751 = vmatpush1.bf16.msra.mxu0 0
        %1752 = vmatprep.subr.bf16.mxu0 0
        %1753 = vmatpush1.bf16.msra.mxu0 0
        %1754 = vmatprep.subr.bf16.mxu0 0
        %1755 = vmatpush1.bf16.msra.mxu0 0
        %1756 = vmatprep.subr.bf16.mxu0 0
        %1757 = vmatpush1.bf16.msra.mxu0 0
        %1758 = vmatprep.subr.bf16.mxu0 0
        %1759 = vmatpush1.bf16.msra.mxu0 0
        %1760 = vmatprep.subr.bf16.mxu0 0
        %1761 = vmatpush1.bf16.msra.mxu0 0
        %1762 = vmatprep.subr.bf16.mxu0 0
        %1763 = vmatpush1.bf16.msra.mxu0 0
        %1764 = vmatprep.subr.bf16.mxu0 0
        %1765 = vmatpush1.bf16.msra.mxu0 0
        %1766 = vmatprep.subr.bf16.mxu0 0
        %1767 = vmatpush1.bf16.msra.mxu0 0
        %1768 = vmatprep.subr.bf16.mxu0 0
        %1769 = vmatpush1.bf16.msra.mxu0 0
        %1770 = vmatprep.subr.bf16.mxu0 0
        %1771 = vmatpush1.bf16.msra.mxu0 0
        %1772 = vmatprep.mubr.bf16.mxu0 0
        %1773 = vmatmul.mubr.bf16.gmra.mrb[0].mxu0 %v1732
        %v1774 = vpop.f32.mrb[0].mxu0
        %v1775 = vadd.f32 0.0, %v1774
        %v1776 = vpop.f32.mrb[0].mxu0
        %v1777 = vpop.f32.mrb[0].mxu0
        %v1778 = vadd.f32 0.0, %v1777
        %v1779 = vpop.f32.mrb[0].mxu0
        %1780 = vmatprep.mubr.bf16.mxu0 0
        %1781 = vmatmul.mubr.bf16.gmra.mrb[0].mxu0 %v1735
        %v1782 = vpop.f32.mrb[0].mxu0
        %v1783 = vadd.f32 0.0, %v1782
        %v1784 = vpop.f32.mrb[0].mxu0
        %v1785 = vpop.f32.mrb[0].mxu0
        %v1786 = vpop.f32.mrb[0].mxu0
        %1787 = vdwg.mxu0
        %1791 = vrot.lane.b32.xlu0 %v1775, 64
        %v1792 = vpop.permute.xlu0 %1791
        %1793 = vrot.lane.b32.xlu0 %v1778, 64
        %v1794 = vpop.permute.xlu0 %1793
        %1795 = vrot.lane.b32.xlu0 %v1783, 64
        %v1796 = vpop.permute.xlu0 %1795
        %v1800 = vsel %vm1454, %v1601, %v1792
        %v1801 = vsel %vm1454, %v1604, %v1794
        %v1802 = vsel %vm1454, %v1609, %v1796
        %v1803 = vpack.c.bf16 %v1801, %v1800
        %v1804 = vpack.c.bf16 %v1802, %v1802
        %v1805 = vld [vmem:[%s588] sm:$0xf]
        %v1806 = vld [vmem:[%s588 + $0x4] sm:$0xf]
        %v1807 = vld [vmem:[%s588 + $0x8] sm:$0xf]
        %v1808 = vld [vmem:[%s588 + $0xc] sm:$0xf]
        %v1809 = vld [vmem:[%s588 + $0x10] sm:$0xf]
        %v1810 = vld [vmem:[%s588 + $0x14] sm:$0xf]
        %v1811 = vld [vmem:[%s588 + $0x18] sm:$0xf]
        %v1812 = vld [vmem:[%s588 + $0x1c] sm:$0xf]
        %v1813 = vld [vmem:[%s588 + $0x20] sm:$0xf]
        %v1814 = vld [vmem:[%s588 + $0x24] sm:$0xf]
        %v1815 = vld [vmem:[%s588 + $0x28] sm:$0xf]
        %v1816 = vld [vmem:[%s588 + $0x2c] sm:$0xf]
        %v1817 = vld [vmem:[%s588 + $0x30] sm:$0xf]
        %v1818 = vld [vmem:[%s588 + $0x34] sm:$0xf]
        %v1819 = vld [vmem:[%s588 + $0x38] sm:$0xf]
        %v1820 = vld [vmem:[%s588 + $0x3c] sm:$0xf]
        %v1821 = vld [vmem:[%s591] sm:$0x1]
        %v1823 = vlaneseq
        %v1824 = vshrl.u32 %v1823, 7
        %v1825 = vsub.s32 0, %v1824
        %v1826 = vrot.slane %v1821, %v1825
        %v1844 = vunpack.c.l.b16 %v1805
        %v1845 = vunpack.c.l.b16 %v1806
        %v1846 = vunpack.c.l.b16 %v1807
        %v1847 = vunpack.c.l.b16 %v1808
        %v1848 = vunpack.c.l.b16 %v1809
        %v1849 = vunpack.c.l.b16 %v1810
        %v1850 = vunpack.c.l.b16 %v1811
        %v1851 = vunpack.c.l.b16 %v1812
        %v1852 = vunpack.c.l.b16 %v1813
        %v1853 = vunpack.c.l.b16 %v1814
        %v1854 = vunpack.c.l.b16 %v1815
        %v1855 = vunpack.c.l.b16 %v1816
        %v1856 = vunpack.c.l.b16 %v1817
        %v1857 = vunpack.c.l.b16 %v1818
        %v1858 = vunpack.c.l.b16 %v1819
        %v1859 = vunpack.c.l.b16 %v1820
        %v1860 = vpack.c.b16 %v1845, %v1844
        %v1861 = vpack.c.b16 %v1847, %v1846
        %v1862 = vpack.c.b16 %v1849, %v1848
        %v1863 = vpack.c.b16 %v1851, %v1850
        %v1864 = vpack.c.b16 %v1853, %v1852
        %v1865 = vpack.c.b16 %v1855, %v1854
        %v1866 = vpack.c.b16 %v1857, %v1856
        %v1867 = vpack.c.b16 %v1859, %v1858
        %1876 = vmatprep.subr.bf16.mxu0 0
        %1877 = vmatpush1.bf16.msra.mxu0 %v1860
        %1878 = vmatprep.subr.bf16.mxu0 0
        %1879 = vmatpush1.bf16.msra.mxu0 %v1861
        %1880 = vmatprep.subr.bf16.mxu0 0
        %1881 = vmatpush1.bf16.msra.mxu0 %v1862
        %1882 = vmatprep.subr.bf16.mxu0 0
        %1883 = vmatpush1.bf16.msra.mxu0 %v1863
        %1884 = vmatprep.subr.bf16.mxu0 0
        %1885 = vmatpush1.bf16.msra.mxu0 %v1864
        %1886 = vmatprep.subr.bf16.mxu0 0
        %1887 = vmatpush1.bf16.msra.mxu0 %v1865
        %1888 = vmatprep.subr.bf16.mxu0 0
        %1889 = vmatpush1.bf16.msra.mxu0 %v1866
        %1890 = vmatprep.subr.bf16.mxu0 0
        %1891 = vmatpush1.bf16.msra.mxu0 %v1867
        %1892 = vmatprep.subr.bf16.mxu0 0
        %1893 = vmatpush1.bf16.msra.mxu0 0
        %1894 = vmatprep.subr.bf16.mxu0 0
        %1895 = vmatpush1.bf16.msra.mxu0 0
        %1896 = vmatprep.subr.bf16.mxu0 0
        %1897 = vmatpush1.bf16.msra.mxu0 0
        %1898 = vmatprep.subr.bf16.mxu0 0
        %1899 = vmatpush1.bf16.msra.mxu0 0
        %1900 = vmatprep.subr.bf16.mxu0 0
        %1901 = vmatpush1.bf16.msra.mxu0 0
        %1902 = vmatprep.subr.bf16.mxu0 0
        %1903 = vmatpush1.bf16.msra.mxu0 0
        %1904 = vmatprep.subr.bf16.mxu0 0
        %1905 = vmatpush1.bf16.msra.mxu0 0
        %1906 = vmatprep.subr.bf16.mxu0 0
        %1907 = vmatpush1.bf16.msra.mxu0 0
        %1908 = vmatprep.mubr.bf16.mxu0 0
        %1909 = vmatmul.mubr.bf16.gmra.mrb[0].mxu0 %v1803
        %v1910 = vpop.f32.mrb[0].mxu0
        %v1911 = vadd.f32 %v1826, %v1910
        %v1912 = vpop.f32.mrb[0].mxu0
        %v1913 = vpop.f32.mrb[0].mxu0
        %v1914 = vadd.f32 %v1826, %v1913
        %v1915 = vpop.f32.mrb[0].mxu0
        %1916 = vmatprep.mubr.bf16.mxu0 0
        %1917 = vmatmul.mubr.bf16.gmra.mrb[0].mxu0 %v1804
        %v1918 = vpop.f32.mrb[0].mxu0
        %v1919 = vadd.f32 %v1826, %v1918
        %v1920 = vpop.f32.mrb[0].mxu0
        %v1921 = vpop.f32.mrb[0].mxu0
        %v1922 = vpop.f32.mrb[0].mxu0
        %1923 = vdwg.mxu0
        %v1924 = vadd.f32 %v1109, %v1911
        %v1925 = vadd.f32 %v1110, %v1914
        %v1926 = vadd.f32 %v1111, %v1919
        %1927 = vadd.xlane.f32.xlu0 %v1924
        %v1928 = vpop.xlane.xlu0 %1927
        %1929 = vadd.xlane.f32.xlu0 %v1925
        %v1930 = vpop.xlane.xlu0 %1929
        %v1931 = vsel %vm1117, %v1926, 0.0
        %1932 = vadd.xlane.f32.xlu0 %v1931
        %v1933 = vpop.xlane.xlu0 %1932
        %v1934 = vmul.f32 %v1928, %v1121
        %v1935 = vmul.f32 %v1930, %v1121
        %v1936 = vmul.f32 %v1933, %v1121
        %v1937 = vmul.f32 %v1924, %v1924
        %v1938 = vmul.f32 %v1925, %v1925
        %v1939 = vmul.f32 %v1926, %v1926
        %1940 = vadd.xlane.f32.xlu0 %v1937
        %v1941 = vpop.xlane.xlu0 %1940
        %1942 = vadd.xlane.f32.xlu0 %v1938
        %v1943 = vpop.xlane.xlu0 %1942
        %v1944 = vsel %vm1117, %v1939, 0.0
        %1945 = vadd.xlane.f32.xlu0 %v1944
        %v1946 = vpop.xlane.xlu0 %1945
        %v1947 = vmul.f32 %v1941, %v1121
        %v1948 = vmul.f32 %v1943, %v1121
        %v1949 = vmul.f32 %v1946, %v1121
        %v1950 = vmul.f32 %v1934, %v1934
        %v1951 = vmul.f32 %v1935, %v1935
        %v1952 = vmul.f32 %v1936, %v1936
        %v1953 = vsub.f32 %v1947, %v1950
        %v1954 = vsub.f32 %v1948, %v1951
        %v1955 = vsub.f32 %v1949, %v1952
        %v1956 = vsub.f32 %v1924, %v1934
        %v1957 = vsub.f32 %v1925, %v1935
        %v1958 = vsub.f32 %v1926, %v1936
        %v1959 = vadd.f32 %v1953, 1e-06
        %v1960 = vadd.f32 %v1954, 1e-06
        %v1961 = vadd.f32 %v1955, 1e-06
        %v1962 = vrsqrt.pop %v1959
        %v1963 = vrsqrt.pop %v1960
        %v1964 = vrsqrt.pop %v1961
        %v1965 = vmul.f32 %v1956, %v1962
        %v1966 = vmul.f32 %v1957, %v1963
        %v1967 = vmul.f32 %v1958, %v1964
        %v1968 = vlaneseq
        %v1969 = vshrl.u32 %v1968, 7
        %v1970 = vsub.s32 2, %v1969
        %v1971 = vrot.slane %v1112, %v1970
        %v1972 = vmul.f32 %v1965, %v1971
        %v1973 = vmul.f32 %v1966, %v1971
        %v1974 = vmul.f32 %v1967, %v1971
        %v1975 = vlaneseq
        %v1976 = vshrl.u32 %v1975, 7
        %v1977 = vsub.s32 3, %v1976
        %v1978 = vrot.slane %v1112, %v1977
        %v1979 = vadd.f32 %v1972, %v1978
        %v1980 = vadd.f32 %v1973, %v1978
        %v1981 = vadd.f32 %v1974, %v1978
        %v1982 = vpack.c.bf16 %v1980, %v1979
        %v1983 = vpack.c.bf16 %v1981, %v1981
        %v1984 = vld [vmem:[%s596] sm:$0xff]
        %v1985 = vld [vmem:[%s596 + $0x8] sm:$0xff]
        %v1986 = vld [vmem:[%s596 + $0x10] sm:$0xff]
        %v1987 = vld [vmem:[%s596 + $0x18] sm:$0xff]
        %v1988 = vld [vmem:[%s596 + $0x20] sm:$0xff]
        %v1989 = vld [vmem:[%s596 + $0x28] sm:$0xff]
        %v1990 = vld [vmem:[%s596 + $0x30] sm:$0xff]
        %v1991 = vld [vmem:[%s596 + $0x38] sm:$0xff]
        %v1992 = vld [vmem:[%s596 + $0x40] sm:$0xff]
        %v1993 = vld [vmem:[%s596 + $0x48] sm:$0xff]
        %v1994 = vld [vmem:[%s596 + $0x50] sm:$0xff]
        %v1995 = vld [vmem:[%s596 + $0x58] sm:$0xff]
        %v1996 = vld [vmem:[%s596 + $0x60] sm:$0xff]
        %v1997 = vld [vmem:[%s596 + $0x68] sm:$0xff]
        %v1998 = vld [vmem:[%s596 + $0x70] sm:$0xff]
        %v1999 = vld [vmem:[%s596 + $0x78] sm:$0xff]
        %v2000 = vld [vmem:[%s596 + $0x80] sm:$0xff]
        %v2001 = vld [vmem:[%s596 + $0x88] sm:$0xff]
        %v2002 = vld [vmem:[%s596 + $0x90] sm:$0xff]
        %v2003 = vld [vmem:[%s596 + $0x98] sm:$0xff]
        %v2004 = vld [vmem:[%s596 + $0xa0] sm:$0xff]
        %v2005 = vld [vmem:[%s596 + $0xa8] sm:$0xff]
        %v2006 = vld [vmem:[%s596 + $0xb0] sm:$0xff]
        %v2007 = vld [vmem:[%s596 + $0xb8] sm:$0xff]
        %v2008 = vld [vmem:[%s596 + $0xc0] sm:$0xff]
        %v2009 = vld [vmem:[%s596 + $0xc8] sm:$0xff]
        %v2010 = vld [vmem:[%s596 + $0xd0] sm:$0xff]
        %v2011 = vld [vmem:[%s596 + $0xd8] sm:$0xff]
        %v2012 = vld [vmem:[%s596 + $0xe0] sm:$0xff]
        %v2013 = vld [vmem:[%s596 + $0xe8] sm:$0xff]
        %v2014 = vld [vmem:[%s596 + $0xf0] sm:$0xff]
        %v2015 = vld [vmem:[%s596 + $0xf8] sm:$0xff]
        %v2016 = vld [vmem:[%s600] sm:$0xf]
        %v2018 = vlaneseq
        %v2019 = vshrl.u32 %v2018, 7
        %v2020 = vsub.s32 0, %v2019
        %v2021 = vrot.slane %v2016, %v2020
        %v2022 = vlaneseq
        %v2023 = vshrl.u32 %v2022, 7
        %v2024 = vsub.s32 1, %v2023
        %v2025 = vrot.slane %v2016, %v2024
        %v2026 = vlaneseq
        %v2027 = vshrl.u32 %v2026, 7
        %v2028 = vsub.s32 2, %v2027
        %v2029 = vrot.slane %v2016, %v2028
        %v2030 = vlaneseq
        %v2031 = vshrl.u32 %v2030, 7
        %v2032 = vsub.s32 3, %v2031
        %v2033 = vrot.slane %v2016, %v2032
        %v2070 = vunpack.c.l.b16 %v1984
        %v2071 = vunpack.c.h.b16 %v1984
        %v2072 = vunpack.c.l.b16 %v1985
        %v2073 = vunpack.c.h.b16 %v1985
        %v2074 = vunpack.c.l.b16 %v1986
        %v2075 = vunpack.c.h.b16 %v1986
        %v2076 = vunpack.c.l.b16 %v1987
        %v2077 = vunpack.c.h.b16 %v1987
        %v2078 = vunpack.c.l.b16 %v1988
        %v2079 = vunpack.c.h.b16 %v1988
        %v2080 = vunpack.c.l.b16 %v1989
        %v2081 = vunpack.c.h.b16 %v1989
        %v2082 = vunpack.c.l.b16 %v1990
        %v2083 = vunpack.c.h.b16 %v1990
        %v2084 = vunpack.c.l.b16 %v1991
        %v2085 = vunpack.c.h.b16 %v1991
        %v2086 = vunpack.c.l.b16 %v1992
        %v2087 = vunpack.c.h.b16 %v1992
        %v2088 = vunpack.c.l.b16 %v1993
        %v2089 = vunpack.c.h.b16 %v1993
        %v2090 = vunpack.c.l.b16 %v1994
        %v2091 = vunpack.c.h.b16 %v1994
        %v2092 = vunpack.c.l.b16 %v1995
        %v2093 = vunpack.c.h.b16 %v1995
        %v2094 = vunpack.c.l.b16 %v1996
        %v2095 = vunpack.c.h.b16 %v1996
        %v2096 = vunpack.c.l.b16 %v1997
        %v2097 = vunpack.c.h.b16 %v1997
        %v2098 = vunpack.c.l.b16 %v1998
        %v2099 = vunpack.c.h.b16 %v1998
        %v2100 = vunpack.c.l.b16 %v1999
        %v2101 = vunpack.c.h.b16 %v1999
        %v2102 = vunpack.c.l.b16 %v2000
        %v2103 = vunpack.c.h.b16 %v2000
        %v2104 = vunpack.c.l.b16 %v2001
        %v2105 = vunpack.c.h.b16 %v2001
        %v2106 = vunpack.c.l.b16 %v2002
        %v2107 = vunpack.c.h.b16 %v2002
        %v2108 = vunpack.c.l.b16 %v2003
        %v2109 = vunpack.c.h.b16 %v2003
        %v2110 = vunpack.c.l.b16 %v2004
        %v2111 = vunpack.c.h.b16 %v2004
        %v2112 = vunpack.c.l.b16 %v2005
        %v2113 = vunpack.c.h.b16 %v2005
        %v2114 = vunpack.c.l.b16 %v2006
        %v2115 = vunpack.c.h.b16 %v2006
        %v2116 = vunpack.c.l.b16 %v2007
        %v2117 = vunpack.c.h.b16 %v2007
        %v2118 = vunpack.c.l.b16 %v2008
        %v2119 = vunpack.c.h.b16 %v2008
        %v2120 = vunpack.c.l.b16 %v2009
        %v2121 = vunpack.c.h.b16 %v2009
        %v2122 = vunpack.c.l.b16 %v2010
        %v2123 = vunpack.c.h.b16 %v2010
        %v2124 = vunpack.c.l.b16 %v2011
        %v2125 = vunpack.c.h.b16 %v2011
        %v2126 = vunpack.c.l.b16 %v2012
        %v2127 = vunpack.c.h.b16 %v2012
        %v2128 = vunpack.c.l.b16 %v2013
        %v2129 = vunpack.c.h.b16 %v2013
        %v2130 = vunpack.c.l.b16 %v2014
        %v2131 = vunpack.c.h.b16 %v2014
        %v2132 = vunpack.c.l.b16 %v2015
        %v2133 = vunpack.c.h.b16 %v2015
        %v2134 = vpack.c.b16 %v2074, %v2070
        %v2135 = vpack.c.b16 %v2075, %v2071
        %v2136 = vpack.c.b16 %v2076, %v2072
        %v2137 = vpack.c.b16 %v2077, %v2073
        %v2138 = vpack.c.b16 %v2082, %v2078
        %v2139 = vpack.c.b16 %v2083, %v2079
        %v2140 = vpack.c.b16 %v2084, %v2080
        %v2141 = vpack.c.b16 %v2085, %v2081
        %v2142 = vpack.c.b16 %v2090, %v2086
        %v2143 = vpack.c.b16 %v2091, %v2087
        %v2144 = vpack.c.b16 %v2092, %v2088
        %v2145 = vpack.c.b16 %v2093, %v2089
        %v2146 = vpack.c.b16 %v2098, %v2094
        %v2147 = vpack.c.b16 %v2099, %v2095
        %v2148 = vpack.c.b16 %v2100, %v2096
        %v2149 = vpack.c.b16 %v2101, %v2097
        %v2150 = vpack.c.b16 %v2106, %v2102
        %v2151 = vpack.c.b16 %v2107, %v2103
        %v2152 = vpack.c.b16 %v2108, %v2104
        %v2153 = vpack.c.b16 %v2109, %v2105
        %v2154 = vpack.c.b16 %v2114, %v2110
        %v2155 = vpack.c.b16 %v2115, %v2111
        %v2156 = vpack.c.b16 %v2116, %v2112
        %v2157 = vpack.c.b16 %v2117, %v2113
        %v2158 = vpack.c.b16 %v2122, %v2118
        %v2159 = vpack.c.b16 %v2123, %v2119
        %v2160 = vpack.c.b16 %v2124, %v2120
        %v2161 = vpack.c.b16 %v2125, %v2121
        %v2162 = vpack.c.b16 %v2130, %v2126
        %v2163 = vpack.c.b16 %v2131, %v2127
        %v2164 = vpack.c.b16 %v2132, %v2128
        %v2165 = vpack.c.b16 %v2133, %v2129
        %2198 = vmatprep.subr.bf16.mxu0 %v2135
        %2199 = vmatpush1.bf16.msra.mxu0 %v2134
        %2200 = vmatprep.subr.bf16.mxu0 %v2139
        %2201 = vmatpush1.bf16.msra.mxu0 %v2138
        %2202 = vmatprep.subr.bf16.mxu0 %v2143
        %2203 = vmatpush1.bf16.msra.mxu0 %v2142
        %2204 = vmatprep.subr.bf16.mxu0 %v2147
        %2205 = vmatpush1.bf16.msra.mxu0 %v2146
        %2206 = vmatprep.subr.bf16.mxu0 %v2151
        %2207 = vmatpush1.bf16.msra.mxu0 %v2150
        %2208 = vmatprep.subr.bf16.mxu0 %v2155
        %2209 = vmatpush1.bf16.msra.mxu0 %v2154
        %2210 = vmatprep.subr.bf16.mxu0 %v2159
        %2211 = vmatpush1.bf16.msra.mxu0 %v2158
        %2212 = vmatprep.subr.bf16.mxu0 %v2163
        %2213 = vmatpush1.bf16.msra.mxu0 %v2162
        %2214 = vmatprep.subr.bf16.mxu0 0
        %2215 = vmatpush1.bf16.msra.mxu0 0
        %2216 = vmatprep.subr.bf16.mxu0 0
        %2217 = vmatpush1.bf16.msra.mxu0 0
        %2218 = vmatprep.subr.bf16.mxu0 0
        %2219 = vmatpush1.bf16.msra.mxu0 0
        %2220 = vmatprep.subr.bf16.mxu0 0
        %2221 = vmatpush1.bf16.msra.mxu0 0
        %2222 = vmatprep.subr.bf16.mxu0 0
        %2223 = vmatpush1.bf16.msra.mxu0 0
        %2224 = vmatprep.subr.bf16.mxu0 0
        %2225 = vmatpush1.bf16.msra.mxu0 0
        %2226 = vmatprep.subr.bf16.mxu0 0
        %2227 = vmatpush1.bf16.msra.mxu0 0
        %2228 = vmatprep.subr.bf16.mxu0 0
        %2229 = vmatpush1.bf16.msra.mxu0 0
        %2230 = vmatprep.mubr.bf16.mxu0 0
        %2231 = vmatmul.mubr.bf16.gmra.mrb[0].mxu0 %v1982
        %v2232 = vpop.f32.mrb[0].mxu0
        %v2233 = vadd.f32 %v2021, %v2232
        %v2234 = vpop.f32.mrb[0].mxu0
        %v2235 = vadd.f32 %v2025, %v2234
        %v2236 = vpop.f32.mrb[0].mxu0
        %v2237 = vadd.f32 %v2021, %v2236
        %v2238 = vpop.f32.mrb[0].mxu0
        %v2239 = vadd.f32 %v2025, %v2238
        %2240 = vmatprep.mubr.bf16.mxu0 0
        %2241 = vmatmul.mubr.bf16.gmra.mrb[0].mxu0 %v1983
        %v2242 = vpop.f32.mrb[0].mxu0
        %v2243 = vadd.f32 %v2021, %v2242
        %v2244 = vpop.f32.mrb[0].mxu0
        %v2245 = vadd.f32 %v2025, %v2244
        %v2246 = vpop.f32.mrb[0].mxu0
        %v2247 = vpop.f32.mrb[0].mxu0
        %2248 = vdwg.mxu0
        %2249 = vmatprep.subr.bf16.mxu0 %v2137
        %2250 = vmatpush1.bf16.msra.mxu0 %v2136
        %2251 = vmatprep.subr.bf16.mxu0 %v2141
        %2252 = vmatpush1.bf16.msra.mxu0 %v2140
        %2253 = vmatprep.subr.bf16.mxu0 %v2145
        %2254 = vmatpush1.bf16.msra.mxu0 %v2144
        %2255 = vmatprep.subr.bf16.mxu0 %v2149
        %2256 = vmatpush1.bf16.msra.mxu0 %v2148
        %2257 = vmatprep.subr.bf16.mxu0 %v2153
        %2258 = vmatpush1.bf16.msra.mxu0 %v2152
        %2259 = vmatprep.subr.bf16.mxu0 %v2157
        %2260 = vmatpush1.bf16.msra.mxu0 %v2156
        %2261 = vmatprep.subr.bf16.mxu0 %v2161
        %2262 = vmatpush1.bf16.msra.mxu0 %v2160
        %2263 = vmatprep.subr.bf16.mxu0 %v2165
        %2264 = vmatpush1.bf16.msra.mxu0 %v2164
        %2265 = vmatprep.subr.bf16.mxu0 0
        %2266 = vmatpush1.bf16.msra.mxu0 0
        %2267 = vmatprep.subr.bf16.mxu0 0
        %2268 = vmatpush1.bf16.msra.mxu0 0
        %2269 = vmatprep.subr.bf16.mxu0 0
        %2270 = vmatpush1.bf16.msra.mxu0 0
        %2271 = vmatprep.subr.bf16.mxu0 0
        %2272 = vmatpush1.bf16.msra.mxu0 0
        %2273 = vmatprep.subr.bf16.mxu0 0
        %2274 = vmatpush1.bf16.msra.mxu0 0
        %2275 = vmatprep.subr.bf16.mxu0 0
        %2276 = vmatpush1.bf16.msra.mxu0 0
        %2277 = vmatprep.subr.bf16.mxu0 0
        %2278 = vmatpush1.bf16.msra.mxu0 0
        %2279 = vmatprep.subr.bf16.mxu0 0
        %2280 = vmatpush1.bf16.msra.mxu0 0
        %2281 = vmatprep.mubr.bf16.mxu0 0
        %2282 = vmatmul.mubr.bf16.gmra.mrb[0].mxu0 %v1982
        %v2283 = vpop.f32.mrb[0].mxu0
        %v2284 = vadd.f32 %v2029, %v2283
        %v2285 = vpop.f32.mrb[0].mxu0
        %v2286 = vadd.f32 %v2033, %v2285
        %v2287 = vpop.f32.mrb[0].mxu0
        %v2288 = vadd.f32 %v2029, %v2287
        %v2289 = vpop.f32.mrb[0].mxu0
        %v2290 = vadd.f32 %v2033, %v2289
        %2291 = vmatprep.mubr.bf16.mxu0 0
        %2292 = vmatmul.mubr.bf16.gmra.mrb[0].mxu0 %v1983
        %v2293 = vpop.f32.mrb[0].mxu0
        %v2294 = vadd.f32 %v2029, %v2293
        %v2295 = vpop.f32.mrb[0].mxu0
        %v2296 = vadd.f32 %v2033, %v2295
        %v2297 = vpop.f32.mrb[0].mxu0
        %v2298 = vpop.f32.mrb[0].mxu0
        %2299 = vdwg.mxu0
        %v2300 = vmul.f32 %v2233, %v2233
        %v2301 = vmul.f32 %v2235, %v2235
        %v2302 = vmul.f32 %v2284, %v2284
        %v2303 = vmul.f32 %v2286, %v2286
        %v2304 = vmul.f32 %v2237, %v2237
        %v2305 = vmul.f32 %v2239, %v2239
        %v2306 = vmul.f32 %v2288, %v2288
        %v2307 = vmul.f32 %v2290, %v2290
        %v2308 = vmul.f32 %v2243, %v2243
        %v2309 = vmul.f32 %v2245, %v2245
        %v2310 = vmul.f32 %v2294, %v2294
        %v2311 = vmul.f32 %v2296, %v2296
        %v2312 = vmul.f32 %v2233, %v2300
        %v2313 = vmul.f32 %v2235, %v2301
        %v2314 = vmul.f32 %v2284, %v2302
        %v2315 = vmul.f32 %v2286, %v2303
        %v2316 = vmul.f32 %v2237, %v2304
        %v2317 = vmul.f32 %v2239, %v2305
        %v2318 = vmul.f32 %v2288, %v2306
        %v2319 = vmul.f32 %v2290, %v2307
        %v2320 = vmul.f32 %v2243, %v2308
        %v2321 = vmul.f32 %v2245, %v2309
        %v2322 = vmul.f32 %v2294, %v2310
        %v2323 = vmul.f32 %v2296, %v2311
        %v2324 = vmul.f32 %v2312, 0.044715
        %v2325 = vmul.f32 %v2313, 0.044715
        %v2326 = vmul.f32 %v2314, 0.044715
        %v2327 = vmul.f32 %v2315, 0.044715
        %v2328 = vmul.f32 %v2316, 0.044715
        %v2329 = vmul.f32 %v2317, 0.044715
        %v2330 = vmul.f32 %v2318, 0.044715
        %v2331 = vmul.f32 %v2319, 0.044715
        %v2332 = vmul.f32 %v2320, 0.044715
        %v2333 = vmul.f32 %v2321, 0.044715
        %v2334 = vmul.f32 %v2322, 0.044715
        %v2335 = vmul.f32 %v2323, 0.044715
        %v2336 = vadd.f32 %v2233, %v2324
        %v2337 = vadd.f32 %v2235, %v2325
        %v2338 = vadd.f32 %v2284, %v2326
        %v2339 = vadd.f32 %v2286, %v2327
        %v2340 = vadd.f32 %v2237, %v2328
        %v2341 = vadd.f32 %v2239, %v2329
        %v2342 = vadd.f32 %v2288, %v2330
        %v2343 = vadd.f32 %v2290, %v2331
        %v2344 = vadd.f32 %v2243, %v2332
        %v2345 = vadd.f32 %v2245, %v2333
        %v2346 = vadd.f32 %v2294, %v2334
        %v2347 = vadd.f32 %v2296, %v2335
        %v2348 = vmul.f32 %v2336, 0.7978846
        %v2349 = vmul.f32 %v2337, 0.7978846
        %v2350 = vmul.f32 %v2338, 0.7978846
        %v2351 = vmul.f32 %v2339, 0.7978846
        %v2352 = vmul.f32 %v2340, 0.7978846
        %v2353 = vmul.f32 %v2341, 0.7978846
        %v2354 = vmul.f32 %v2342, 0.7978846
        %v2355 = vmul.f32 %v2343, 0.7978846
        %v2356 = vmul.f32 %v2344, 0.7978846
        %v2357 = vmul.f32 %v2345, 0.7978846
        %v2358 = vmul.f32 %v2346, 0.7978846
        %v2359 = vmul.f32 %v2347, 0.7978846
        %v2360 = vtanh.pop %v2348
        %v2361 = vtanh.pop %v2349
        %v2362 = vtanh.pop %v2350
        %v2363 = vtanh.pop %v2351
        %v2364 = vtanh.pop %v2352
        %v2365 = vtanh.pop %v2353
        %v2366 = vtanh.pop %v2354
        %v2367 = vtanh.pop %v2355
        %v2368 = vtanh.pop %v2356
        %v2369 = vtanh.pop %v2357
        %v2370 = vtanh.pop %v2358
        %v2371 = vtanh.pop %v2359
        %v2372 = vadd.f32 %v2360, 1.0
        %v2373 = vadd.f32 %v2361, 1.0
        %v2374 = vadd.f32 %v2362, 1.0
        %v2375 = vadd.f32 %v2363, 1.0
        %v2376 = vadd.f32 %v2364, 1.0
        %v2377 = vadd.f32 %v2365, 1.0
        %v2378 = vadd.f32 %v2366, 1.0
        %v2379 = vadd.f32 %v2367, 1.0
        %v2380 = vadd.f32 %v2368, 1.0
        %v2381 = vadd.f32 %v2369, 1.0
        %v2382 = vadd.f32 %v2370, 1.0
        %v2383 = vadd.f32 %v2371, 1.0
        %v2384 = vmul.f32 %v2372, 0.5
        %v2385 = vmul.f32 %v2373, 0.5
        %v2386 = vmul.f32 %v2374, 0.5
        %v2387 = vmul.f32 %v2375, 0.5
        %v2388 = vmul.f32 %v2376, 0.5
        %v2389 = vmul.f32 %v2377, 0.5
        %v2390 = vmul.f32 %v2378, 0.5
        %v2391 = vmul.f32 %v2379, 0.5
        %v2392 = vmul.f32 %v2380, 0.5
        %v2393 = vmul.f32 %v2381, 0.5
        %v2394 = vmul.f32 %v2382, 0.5
        %v2395 = vmul.f32 %v2383, 0.5
        %v2396 = vmul.f32 %v2233, %v2384
        %v2397 = vmul.f32 %v2235, %v2385
        %v2398 = vmul.f32 %v2284, %v2386
        %v2399 = vmul.f32 %v2286, %v2387
        %v2400 = vmul.f32 %v2237, %v2388
        %v2401 = vmul.f32 %v2239, %v2389
        %v2402 = vmul.f32 %v2288, %v2390
        %v2403 = vmul.f32 %v2290, %v2391
        %v2404 = vmul.f32 %v2243, %v2392
        %v2405 = vmul.f32 %v2245, %v2393
        %v2406 = vmul.f32 %v2294, %v2394
        %v2407 = vmul.f32 %v2296, %v2395
        %v2408 = vpack.c.bf16 %v2400, %v2396
        %v2409 = vpack.c.bf16 %v2401, %v2397
        %v2410 = vpack.c.bf16 %v2402, %v2398
        %v2411 = vpack.c.bf16 %v2403, %v2399
        %v2412 = vpack.c.bf16 %v2404, %v2404
        %v2413 = vpack.c.bf16 %v2405, %v2405
        %v2414 = vpack.c.bf16 %v2406, %v2406
        %v2415 = vpack.c.bf16 %v2407, %v2407
        %v2416 = vld [vmem:[%s605] sm:$0xf]
        %v2417 = vld [vmem:[%s605 + $0x4] sm:$0xf]
        %v2418 = vld [vmem:[%s605 + $0x8] sm:$0xf]
        %v2419 = vld [vmem:[%s605 + $0xc] sm:$0xf]
        %v2420 = vld [vmem:[%s605 + $0x10] sm:$0xf]
        %v2421 = vld [vmem:[%s605 + $0x14] sm:$0xf]
        %v2422 = vld [vmem:[%s605 + $0x18] sm:$0xf]
        %v2423 = vld [vmem:[%s605 + $0x1c] sm:$0xf]
        %v2424 = vld [vmem:[%s605 + $0x20] sm:$0xf]
        %v2425 = vld [vmem:[%s605 + $0x24] sm:$0xf]
        %v2426 = vld [vmem:[%s605 + $0x28] sm:$0xf]
        %v2427 = vld [vmem:[%s605 + $0x2c] sm:$0xf]
        %v2428 = vld [vmem:[%s605 + $0x30] sm:$0xf]
        %v2429 = vld [vmem:[%s605 + $0x34] sm:$0xf]
        %v2430 = vld [vmem:[%s605 + $0x38] sm:$0xf]
        %v2431 = vld [vmem:[%s605 + $0x3c] sm:$0xf]
        %v2432 = vld [vmem:[%s605 + $0x40] sm:$0xf]
        %v2433 = vld [vmem:[%s605 + $0x44] sm:$0xf]
        %v2434 = vld [vmem:[%s605 + $0x48] sm:$0xf]
        %v2435 = vld [vmem:[%s605 + $0x4c] sm:$0xf]
        %v2436 = vld [vmem:[%s605 + $0x50] sm:$0xf]
        %v2437 = vld [vmem:[%s605 + $0x54] sm:$0xf]
        %v2438 = vld [vmem:[%s605 + $0x58] sm:$0xf]
        %v2439 = vld [vmem:[%s605 + $0x5c] sm:$0xf]
        %v2440 = vld [vmem:[%s605 + $0x60] sm:$0xf]
        %v2441 = vld [vmem:[%s605 + $0x64] sm:$0xf]
        %v2442 = vld [vmem:[%s605 + $0x68] sm:$0xf]
        %v2443 = vld [vmem:[%s605 + $0x6c] sm:$0xf]
        %v2444 = vld [vmem:[%s605 + $0x70] sm:$0xf]
        %v2445 = vld [vmem:[%s605 + $0x74] sm:$0xf]
        %v2446 = vld [vmem:[%s605 + $0x78] sm:$0xf]
        %v2447 = vld [vmem:[%s605 + $0x7c] sm:$0xf]
        %v2448 = vld [vmem:[%s605 + $0x80] sm:$0xf]
        %v2449 = vld [vmem:[%s605 + $0x84] sm:$0xf]
        %v2450 = vld [vmem:[%s605 + $0x88] sm:$0xf]
        %v2451 = vld [vmem:[%s605 + $0x8c] sm:$0xf]
        %v2452 = vld [vmem:[%s605 + $0x90] sm:$0xf]
        %v2453 = vld [vmem:[%s605 + $0x94] sm:$0xf]
        %v2454 = vld [vmem:[%s605 + $0x98] sm:$0xf]
        %v2455 = vld [vmem:[%s605 + $0x9c] sm:$0xf]
        %v2456 = vld [vmem:[%s605 + $0xa0] sm:$0xf]
        %v2457 = vld [vmem:[%s605 + $0xa4] sm:$0xf]
        %v2458 = vld [vmem:[%s605 + $0xa8] sm:$0xf]
        %v2459 = vld [vmem:[%s605 + $0xac] sm:$0xf]
        %v2460 = vld [vmem:[%s605 + $0xb0] sm:$0xf]
        %v2461 = vld [vmem:[%s605 + $0xb4] sm:$0xf]
        %v2462 = vld [vmem:[%s605 + $0xb8] sm:$0xf]
        %v2463 = vld [vmem:[%s605 + $0xbc] sm:$0xf]
        %v2464 = vld [vmem:[%s605 + $0xc0] sm:$0xf]
        %v2465 = vld [vmem:[%s605 + $0xc4] sm:$0xf]
        %v2466 = vld [vmem:[%s605 + $0xc8] sm:$0xf]
        %v2467 = vld [vmem:[%s605 + $0xcc] sm:$0xf]
        %v2468 = vld [vmem:[%s605 + $0xd0] sm:$0xf]
        %v2469 = vld [vmem:[%s605 + $0xd4] sm:$0xf]
        %v2470 = vld [vmem:[%s605 + $0xd8] sm:$0xf]
        %v2471 = vld [vmem:[%s605 + $0xdc] sm:$0xf]
        %v2472 = vld [vmem:[%s605 + $0xe0] sm:$0xf]
        %v2473 = vld [vmem:[%s605 + $0xe4] sm:$0xf]
        %v2474 = vld [vmem:[%s605 + $0xe8] sm:$0xf]
        %v2475 = vld [vmem:[%s605 + $0xec] sm:$0xf]
        %v2476 = vld [vmem:[%s605 + $0xf0] sm:$0xf]
        %v2477 = vld [vmem:[%s605 + $0xf4] sm:$0xf]
        %v2478 = vld [vmem:[%s605 + $0xf8] sm:$0xf]
        %v2479 = vld [vmem:[%s605 + $0xfc] sm:$0xf]
        %v2480 = vld [vmem:[%s608] sm:$0x1]
        %v2482 = vlaneseq
        %v2483 = vshrl.u32 %v2482, 7
        %v2484 = vsub.s32 0, %v2483
        %v2485 = vrot.slane %v2480, %v2484
        %v2551 = vunpack.c.l.b16 %v2416
        %v2552 = vunpack.c.l.b16 %v2417
        %v2553 = vunpack.c.l.b16 %v2418
        %v2554 = vunpack.c.l.b16 %v2419
        %v2555 = vunpack.c.l.b16 %v2420
        %v2556 = vunpack.c.l.b16 %v2421
        %v2557 = vunpack.c.l.b16 %v2422
        %v2558 = vunpack.c.l.b16 %v2423
        %v2559 = vunpack.c.l.b16 %v2424
        %v2560 = vunpack.c.l.b16 %v2425
        %v2561 = vunpack.c.l.b16 %v2426
        %v2562 = vunpack.c.l.b16 %v2427
        %v2563 = vunpack.c.l.b16 %v2428
        %v2564 = vunpack.c.l.b16 %v2429
        %v2565 = vunpack.c.l.b16 %v2430
        %v2566 = vunpack.c.l.b16 %v2431
        %v2567 = vunpack.c.l.b16 %v2432
        %v2568 = vunpack.c.l.b16 %v2433
        %v2569 = vunpack.c.l.b16 %v2434
        %v2570 = vunpack.c.l.b16 %v2435
        %v2571 = vunpack.c.l.b16 %v2436
        %v2572 = vunpack.c.l.b16 %v2437
        %v2573 = vunpack.c.l.b16 %v2438
        %v2574 = vunpack.c.l.b16 %v2439
        %v2575 = vunpack.c.l.b16 %v2440
        %v2576 = vunpack.c.l.b16 %v2441
        %v2577 = vunpack.c.l.b16 %v2442
        %v2578 = vunpack.c.l.b16 %v2443
        %v2579 = vunpack.c.l.b16 %v2444
        %v2580 = vunpack.c.l.b16 %v2445
        %v2581 = vunpack.c.l.b16 %v2446
        %v2582 = vunpack.c.l.b16 %v2447
        %v2583 = vunpack.c.l.b16 %v2448
        %v2584 = vunpack.c.l.b16 %v2449
        %v2585 = vunpack.c.l.b16 %v2450
        %v2586 = vunpack.c.l.b16 %v2451
        %v2587 = vunpack.c.l.b16 %v2452
        %v2588 = vunpack.c.l.b16 %v2453
        %v2589 = vunpack.c.l.b16 %v2454
        %v2590 = vunpack.c.l.b16 %v2455
        %v2591 = vunpack.c.l.b16 %v2456
        %v2592 = vunpack.c.l.b16 %v2457
        %v2593 = vunpack.c.l.b16 %v2458
        %v2594 = vunpack.c.l.b16 %v2459
        %v2595 = vunpack.c.l.b16 %v2460
        %v2596 = vunpack.c.l.b16 %v2461
        %v2597 = vunpack.c.l.b16 %v2462
        %v2598 = vunpack.c.l.b16 %v2463
        %v2599 = vunpack.c.l.b16 %v2464
        %v2600 = vunpack.c.l.b16 %v2465
        %v2601 = vunpack.c.l.b16 %v2466
        %v2602 = vunpack.c.l.b16 %v2467
        %v2603 = vunpack.c.l.b16 %v2468
        %v2604 = vunpack.c.l.b16 %v2469
        %v2605 = vunpack.c.l.b16 %v2470
        %v2606 = vunpack.c.l.b16 %v2471
        %v2607 = vunpack.c.l.b16 %v2472
        %v2608 = vunpack.c.l.b16 %v2473
        %v2609 = vunpack.c.l.b16 %v2474
        %v2610 = vunpack.c.l.b16 %v2475
        %v2611 = vunpack.c.l.b16 %v2476
        %v2612 = vunpack.c.l.b16 %v2477
        %v2613 = vunpack.c.l.b16 %v2478
        %v2614 = vunpack.c.l.b16 %v2479
        %v2615 = vpack.c.b16 %v2552, %v2551
        %v2616 = vpack.c.b16 %v2554, %v2553
        %v2617 = vpack.c.b16 %v2556, %v2555
        %v2618 = vpack.c.b16 %v2558, %v2557
        %v2619 = vpack.c.b16 %v2560, %v2559
        %v2620 = vpack.c.b16 %v2562, %v2561
        %v2621 = vpack.c.b16 %v2564, %v2563
        %v2622 = vpack.c.b16 %v2566, %v2565
        %v2623 = vpack.c.b16 %v2568, %v2567
        %v2624 = vpack.c.b16 %v2570, %v2569
        %v2625 = vpack.c.b16 %v2572, %v2571
        %v2626 = vpack.c.b16 %v2574, %v2573
        %v2627 = vpack.c.b16 %v2576, %v2575
        %v2628 = vpack.c.b16 %v2578, %v2577
        %v2629 = vpack.c.b16 %v2580, %v2579
        %v2630 = vpack.c.b16 %v2582, %v2581
        %v2631 = vpack.c.b16 %v2584, %v2583
        %v2632 = vpack.c.b16 %v2586, %v2585
        %v2633 = vpack.c.b16 %v2588, %v2587
        %v2634 = vpack.c.b16 %v2590, %v2589
        %v2635 = vpack.c.b16 %v2592, %v2591
        %v2636 = vpack.c.b16 %v2594, %v2593
        %v2637 = vpack.c.b16 %v2596, %v2595
        %v2638 = vpack.c.b16 %v2598, %v2597
        %v2639 = vpack.c.b16 %v2600, %v2599
        %v2640 = vpack.c.b16 %v2602, %v2601
        %v2641 = vpack.c.b16 %v2604, %v2603
        %v2642 = vpack.c.b16 %v2606, %v2605
        %v2643 = vpack.c.b16 %v2608, %v2607
        %v2644 = vpack.c.b16 %v2610, %v2609
        %v2645 = vpack.c.b16 %v2612, %v2611
        %v2646 = vpack.c.b16 %v2614, %v2613
        %2679 = vmatprep.subr.bf16.mxu0 0
        %2680 = vmatpush1.bf16.msra.mxu0 %v2615
        %2681 = vmatprep.subr.bf16.mxu0 0
        %2682 = vmatpush1.bf16.msra.mxu0 %v2616
        %2683 = vmatprep.subr.bf16.mxu0 0
        %2684 = vmatpush1.bf16.msra.mxu0 %v2617
        %2685 = vmatprep.subr.bf16.mxu0 0
        %2686 = vmatpush1.bf16.msra.mxu0 %v2618
        %2687 = vmatprep.subr.bf16.mxu0 0
        %2688 = vmatpush1.bf16.msra.mxu0 %v2619
        %2689 = vmatprep.subr.bf16.mxu0 0
        %2690 = vmatpush1.bf16.msra.mxu0 %v2620
        %2691 = vmatprep.subr.bf16.mxu0 0
        %2692 = vmatpush1.bf16.msra.mxu0 %v2621
        %2693 = vmatprep.subr.bf16.mxu0 0
        %2694 = vmatpush1.bf16.msra.mxu0 %v2622
        %2695 = vmatprep.subr.bf16.mxu0 0
        %2696 = vmatpush1.bf16.msra.mxu0 %v2623
        %2697 = vmatprep.subr.bf16.mxu0 0
        %2698 = vmatpush1.bf16.msra.mxu0 %v2624
        %2699 = vmatprep.subr.bf16.mxu0 0
        %2700 = vmatpush1.bf16.msra.mxu0 %v2625
        %2701 = vmatprep.subr.bf16.mxu0 0
        %2702 = vmatpush1.bf16.msra.mxu0 %v2626
        %2703 = vmatprep.subr.bf16.mxu0 0
        %2704 = vmatpush1.bf16.msra.mxu0 %v2627
        %2705 = vmatprep.subr.bf16.mxu0 0
        %2706 = vmatpush1.bf16.msra.mxu0 %v2628
        %2707 = vmatprep.subr.bf16.mxu0 0
        %2708 = vmatpush1.bf16.msra.mxu0 %v2629
        %2709 = vmatprep.subr.bf16.mxu0 0
        %2710 = vmatpush1.bf16.msra.mxu0 %v2630
        %2711 = vmatprep.mubr.bf16.mxu0 %v2409
        %2712 = vmatmul.mubr.bf16.gmra.mrb[0].mxu0 %v2408
        %v2713 = vpop.f32.mrb[0].mxu0
        %v2714 = vadd.f32 %v2485, %v2713
        %v2715 = vpop.f32.mrb[0].mxu0
        %v2716 = vpop.f32.mrb[0].mxu0
        %v2717 = vadd.f32 %v2485, %v2716
        %v2718 = vpop.f32.mrb[0].mxu0
        %2719 = vmatprep.mubr.bf16.mxu0 %v2413
        %2720 = vmatmul.mubr.bf16.gmra.mrb[0].mxu0 %v2412
        %v2721 = vpop.f32.mrb[0].mxu0
        %v2722 = vadd.f32 %v2485, %v2721
        %v2723 = vpop.f32.mrb[0].mxu0
        %v2724 = vpop.f32.mrb[0].mxu0
        %v2725 = vpop.f32.mrb[0].mxu0
        %2726 = vdwg.mxu0
        %2727 = vmatprep.subr.bf16.mxu0 0
        %2728 = vmatpush1.bf16.msra.mxu0 %v2631
        %2729 = vmatprep.subr.bf16.mxu0 0
        %2730 = vmatpush1.bf16.msra.mxu0 %v2632
        %2731 = vmatprep.subr.bf16.mxu0 0
        %2732 = vmatpush1.bf16.msra.mxu0 %v2633
        %2733 = vmatprep.subr.bf16.mxu0 0
        %2734 = vmatpush1.bf16.msra.mxu0 %v2634
        %2735 = vmatprep.subr.bf16.mxu0 0
        %2736 = vmatpush1.bf16.msra.mxu0 %v2635
        %2737 = vmatprep.subr.bf16.mxu0 0
        %2738 = vmatpush1.bf16.msra.mxu0 %v2636
        %2739 = vmatprep.subr.bf16.mxu0 0
        %2740 = vmatpush1.bf16.msra.mxu0 %v2637
        %2741 = vmatprep.subr.bf16.mxu0 0
        %2742 = vmatpush1.bf16.msra.mxu0 %v2638
        %2743 = vmatprep.subr.bf16.mxu0 0
        %2744 = vmatpush1.bf16.msra.mxu0 %v2639
        %2745 = vmatprep.subr.bf16.mxu0 0
        %2746 = vmatpush1.bf16.msra.mxu0 %v2640
        %2747 = vmatprep.subr.bf16.mxu0 0
        %2748 = vmatpush1.bf16.msra.mxu0 %v2641
        %2749 = vmatprep.subr.bf16.mxu0 0
        %2750 = vmatpush1.bf16.msra.mxu0 %v2642
        %2751 = vmatprep.subr.bf16.mxu0 0
        %2752 = vmatpush1.bf16.msra.mxu0 %v2643
        %2753 = vmatprep.subr.bf16.mxu0 0
        %2754 = vmatpush1.bf16.msra.mxu0 %v2644
        %2755 = vmatprep.subr.bf16.mxu0 0
        %2756 = vmatpush1.bf16.msra.mxu0 %v2645
        %2757 = vmatprep.subr.bf16.mxu0 0
        %2758 = vmatpush1.bf16.msra.mxu0 %v2646
        %2759 = vmatprep.mubr.bf16.mxu0 %v2411
        %2760 = vmatmul.mubr.bf16.gmra.mrb[0].mxu0 %v2410
        %v2761 = vpop.f32.mrb[0].mxu0
        %v2762 = vadd.f32 %v2714, %v2761
        %v2763 = vpop.f32.mrb[0].mxu0
        %v2764 = vpop.f32.mrb[0].mxu0
        %v2765 = vadd.f32 %v2717, %v2764
        %v2766 = vpop.f32.mrb[0].mxu0
        %2767 = vmatprep.mubr.bf16.mxu0 %v2415
        %2768 = vmatmul.mubr.bf16.gmra.mrb[0].mxu0 %v2414
        %v2769 = vpop.f32.mrb[0].mxu0
        %v2770 = vadd.f32 %v2722, %v2769
        %v2771 = vpop.f32.mrb[0].mxu0
        %v2772 = vpop.f32.mrb[0].mxu0
        %v2773 = vpop.f32.mrb[0].mxu0
        %2774 = vdwg.mxu0
        %v2775 = vadd.f32 %v1924, %v2762
        %v2776 = vadd.f32 %v1925, %v2765
        %v2777 = vadd.f32 %v1926, %v2770
        %2778 = vst [vmem:[#allocation2] sm:$0xff] %v2775
        %2779 = vst [vmem:[#allocation2 + $0x8] sm:$0xff] %v2776
        %2780 = vst [vmem:[#allocation2 + $0x10] sm:$0x1] %v2777
        %p2781 = scmp.eq.s32.totalorder %s32, 2
        // Predicated region
        $region77: #{dino_extract_forward.1} parent=71 // pred_check
          %p2782 = pneg %p2781
        $region78: #{dino_extract_forward.1} parent=71 // pred_check_branch
          %2784 = sbr.rel (%p2782) target = $region80
        $region79: #{dino_extract_forward.1} parent=71 // pred_region
          %v2785 = vld [vmem:[%s12] sm:$0x3]
          %2786 = vadd.xlane.f32.xlu0 %v2775
          %v2787 = vpop.xlane.xlu0 %2786
          %2788 = vadd.xlane.f32.xlu0 %v2776
          %v2789 = vpop.xlane.xlu0 %2788
          %v2790 = vsel %vm1117, %v2777, 0.0
          %2791 = vadd.xlane.f32.xlu0 %v2790
          %v2792 = vpop.xlane.xlu0 %2791
          %v2793 = vmul.f32 %v2787, %v1121
          %v2794 = vmul.f32 %v2789, %v1121
          %v2795 = vmul.f32 %v2792, %v1121
          %v2796 = vmul.f32 %v2775, %v2775
          %v2797 = vmul.f32 %v2776, %v2776
          %v2798 = vmul.f32 %v2777, %v2777
          %2799 = vadd.xlane.f32.xlu0 %v2796
          %v2800 = vpop.xlane.xlu0 %2799
          %2801 = vadd.xlane.f32.xlu0 %v2797
          %v2802 = vpop.xlane.xlu0 %2801
          %v2803 = vsel %vm1117, %v2798, 0.0
          %2804 = vadd.xlane.f32.xlu0 %v2803
          %v2805 = vpop.xlane.xlu0 %2804
          %v2806 = vmul.f32 %v2800, %v1121
          %v2807 = vmul.f32 %v2802, %v1121
          %v2808 = vmul.f32 %v2805, %v1121
          %v2809 = vmul.f32 %v2793, %v2793
          %v2810 = vmul.f32 %v2794, %v2794
          %v2811 = vmul.f32 %v2795, %v2795
          %v2812 = vsub.f32 %v2806, %v2809
          %v2813 = vsub.f32 %v2807, %v2810
          %v2814 = vsub.f32 %v2808, %v2811
          %v2815 = vsub.f32 %v2775, %v2793
          %v2816 = vsub.f32 %v2776, %v2794
          %v2817 = vsub.f32 %v2777, %v2795
          %v2818 = vadd.f32 %v2812, 1e-06
          %v2819 = vadd.f32 %v2813, 1e-06
          %v2820 = vadd.f32 %v2814, 1e-06
          %v2821 = vrsqrt.pop %v2818
          %v2822 = vrsqrt.pop %v2819
          %v2823 = vrsqrt.pop %v2820
          %v2824 = vmul.f32 %v2815, %v2821
          %v2825 = vmul.f32 %v2816, %v2822
          %v2826 = vmul.f32 %v2817, %v2823
          %v2827 = vlaneseq
          %v2828 = vshrl.u32 %v2827, 7
          %v2829 = vsub.s32 0, %v2828
          %v2830 = vrot.slane %v2785, %v2829
          %v2831 = vmul.f32 %v2824, %v2830
          %v2832 = vmul.f32 %v2825, %v2830
          %v2833 = vmul.f32 %v2826, %v2830
          %v2834 = vlaneseq
          %v2835 = vshrl.u32 %v2834, 7
          %v2836 = vsub.s32 1, %v2835
          %v2837 = vrot.slane %v2785, %v2836
          %v2838 = vadd.f32 %v2831, %v2837
          %v2839 = vadd.f32 %v2832, %v2837
          %v2840 = vadd.f32 %v2833, %v2837
          %v2841 = vlaneseq
          %v2842 = vshrl.u32 %v2841, 7
          %v2843 = vadd.s32 %v2842, 8
          %v2844 = vadd.s32 %v2842, 16
          %vm2845 = vcmp.gt.s32.totalorder %v2842, 0
          %vm2846 = vcmp.gt.s32.totalorder %v2843, 0
          %vm2847 = vcmp.gt.s32.totalorder %v2844, 0
          %v2848 = vsel %vm2845, %v2838, 0.0
          %v2849 = vsel %vm2846, %v2839, 0.0
          %v2850 = vsel %vm2847, %v2840, 0.0
          %v2851 = vadd.f32 %v2848, %v2849
          %v2852 = vsel %vm1117, %v2850, 0.0
          %v2853 = vadd.f32 %v2851, %v2852
          %v2854 = vrot.slane %v2853, 4
          %v2855 = vadd.f32 %v2853, %v2854
          %v2856 = vrot.slane %v2855, 2
          %v2857 = vadd.f32 %v2855, %v2856
          %v2858 = vrot.slane %v2857, 1
          %v2859 = vadd.f32 %v2857, %v2858
          %v2860 = vmul.f32 %v2859, 0.0625
          %2861 = vst [vmem:[%s565] sm:$0x1] %v2860
        $region80: #{dino_extract_forward.1} parent=71 // pred_fallthru
          _
        %s2862 = sand.u32 %s370, 1
        %s2863 = scalar_lea.sflag [#allocation4], %s2862
        %s2864 = sand.u32 %s370, 1
        %s2865 = scalar_lea.vmem [#allocation3], %s2864
        // Predicated region
        $region81: #{dino_extract_forward.1} parent=71 // pred_check
          %p2866 = pneg %p380
        $region82: #{dino_extract_forward.1} parent=71 // pred_check_branch
          %2868 = sbr.rel (%p2866) target = $region84
        $region83: #{dino_extract_forward.1} parent=71 // pred_region
          %s2870 = ssub.s32 16, 16
          %2871 = vsyncadd %s2863, %s2870
          %s2872 = smul.addr %s31, 16
          %s2873 = scalar_lea.hbm %s13, %s2872
          %s2875 = sshll.u32 %s2865, 4
          %s2876 = int_to_ptr.vmem [resolvable:$true] %s2875
          %2878 = dma.vmem_to_hbm [thread:$0]  %s2876, 16, %s2873, %s2863
        $region84: #{dino_extract_forward.1} parent=71 // pred_fallthru
          _
      $region72: #{dino_extract_forward.1} parent=5 // pred_fallthru
        _
      %p2879 = scmp.le.s32.totalorder 2, %s22
      // Predicated region
      $region85: #{dino_extract_forward.1} parent=5 // pred_check
        %p2880 = pneg %p2879
      $region86: #{dino_extract_forward.1} parent=5 // pred_check_branch
        %2882 = sbr.rel (%p2880) target = $region88
      $region87: #{dino_extract_forward.1} parent=5 // pred_region
        %s2883 = ssub.s32 %s22, 2
        // Predicated region
        $region89: #{dino_extract_forward.1} parent=87 // pred_check
          %p2884 = pneg %p386
        $region90: #{dino_extract_forward.1} parent=87 // pred_check_branch
          %2886 = sbr.rel (%p2884) target = $region92
        $region91: #{dino_extract_forward.1} parent=87 // pred_region
          %s2887 = sand.u32 %s371, 1
          %s2888 = scalar_lea.sflag [#allocation4], %s2887
          %s2889 = sand.u32 %s371, 1
          %s2890 = scalar_lea.vmem [#allocation3], %s2889
          %2891 = dma.done %s2888, 16
        $region92: #{dino_extract_forward.1} parent=87 // pred_fallthru
          _
      $region88: #{dino_extract_forward.1} parent=5 // pred_fallthru
        _
    $region6: #{dino_extract_forward.1} parent=1 // loop_footer
      %s26 = sadd.s32 1, %s22
    $region7: #{dino_extract_forward.1} parent=1 // loop_footer_branch
      %21 = sbr.rel target = $region3
    $region8: #{dino_extract_forward.1} parent=1 // loop_exit
      _
    %2892 = vsyncpa [#allocation4], 1
    %s2893 = scalar_lea.sflag [#allocation4], 1
    %2894 = vsyncpa %s2893, 1

</llo_original>
